<compile_context>
chip_gen: v7x
topology: tpu7x:2x2x1
jax: 0.10.0
libtpu: 0.0.40
codegen_flags: <defaults>
</compile_context>

<pallas_src>
import math
import functools

import jax
import jax.numpy as jnp
from jax import lax
from jax.experimental import pallas as pl
from jax.experimental.pallas import tpu as pltpu


def _layernorm(x, gamma, beta, eps=1e-6):
    # x: (TQ, D) f32; gamma/beta: (1, D). Biased variance (torch.nn.LayerNorm).
    mean = jnp.mean(x, axis=-1, keepdims=True)
    xc = x - mean
    var = jnp.mean(xc * xc, axis=-1, keepdims=True)
    inv = lax.rsqrt(var + eps)
    return xc * inv * gamma + beta


def _identical_layer_kernel(
    # inputs
    xq_ref,    # (1, TQ, D) query-row tile of x
    xkv_ref,   # (1, S,  D) full sequence of x (read only at t == 0)
    wq_ref, bq_ref, wkv_ref, bkv_ref, wo_ref, bo_ref,
    g1_ref, be1_ref,
    w1_ref, bb1_ref, w2_ref, bb2_ref,
    g2_ref, be2_ref,
    # output
    o_ref,     # (1, TQ, D)
    # scratch (persist across grid steps)
    k_ref,     # (S, H*Kd) cached K projection, input dtype
    v_ref,     # (S, H*Vd) cached V projection, input dtype
    *, num_head, key_size, value_size,
):
    t = pl.program_id(1)
    HK = num_head * key_size

    # --- K/V projections: once per batch row, cached in VMEM scratch --------
    @pl.when(t == 0)
    def _():
        x_all = xkv_ref[0]                                    # (S, D), native dtype
        kv = jnp.dot(x_all, wkv_ref[...],
                     preferred_element_type=jnp.float32) + bkv_ref[...]
        k_ref[...] = kv[:, :HK].astype(k_ref.dtype)
        v_ref[...] = kv[:, HK:].astype(v_ref.dtype)

    x_q = xq_ref[0]                                           # (TQ, D), native dtype

    # --- Q projection; scale folded in once ---------------------------------
    scale = 1.0 / math.sqrt(key_size)
    q = (jnp.dot(x_q, wq_ref[...],
                 preferred_element_type=jnp.float32) + bq_ref[...]) * scale
    q = q.astype(x_q.dtype)                                   # matmul operands in input dtype

    # --- per-head attention; single fused output projection -----------------
    ctx_heads = []
    for h in range(num_head):                                 # num_head is static -> unrolled
        qh = q[:, h * key_size:(h + 1) * key_size]            # (TQ, Kd)
        kh = k_ref[:, h * key_size:(h + 1) * key_size]        # (S,  Kd)
        vh = v_ref[:, h * value_size:(h + 1) * value_size]    # (S,  Vd)

        # NT matmul (contract last dims of both; no transpose).
        s = lax.dot_general(qh, kh,
                            dimension_numbers=(((1,), (1,)), ((), ())),
                            preferred_element_type=jnp.float32)    # (TQ, S)
        s = s - jnp.max(s, axis=-1, keepdims=True)
        p = jnp.exp(s)                                        # unnormalized probs
        denom = jnp.sum(p, axis=-1, keepdims=True)            # (TQ, 1)
        ctx_h = jnp.dot(p.astype(vh.dtype), vh,
                        preferred_element_type=jnp.float32)   # (TQ, Vd)
        # normalize AFTER the PV matmul: (TQ, Vd) elementwise, not (TQ, S)
        ctx_heads.append(ctx_h * pl.reciprocal(denom, approx=True))

    ctx = jnp.concatenate(ctx_heads, axis=-1)                 # (TQ, H*Vd) f32
    attn = jnp.dot(ctx.astype(x_q.dtype), wo_ref[...],
                   preferred_element_type=jnp.float32) + bo_ref[...]   # (TQ, D)

    # --- residual + norm1 ----------------------------------------------------
    y1 = _layernorm(x_q.astype(jnp.float32) + attn, g1_ref[...], be1_ref[...])

    # --- FFN: Linear -> ReLU -> (dropout=id) -> Linear -----------------------
    h1 = jnp.dot(y1.astype(w1_ref.dtype), w1_ref[...],
                 preferred_element_type=jnp.float32) + bb1_ref[...]
    h1 = jnp.maximum(h1, 0.0)
    ffn = jnp.dot(h1.astype(w2_ref.dtype), w2_ref[...],
                  preferred_element_type=jnp.float32) + bb2_ref[...]

    # --- residual + norm2 -----------------------------------------------------
    y2 = _layernorm(ffn + y1, g2_ref[...], be2_ref[...])

    o_ref[0] = y2.astype(o_ref.dtype)


def _pick_q_tile(S, cap=256):
    """Largest multiple-of-8 divisor of S that is <= cap; fall back to S."""
    for c in range(min(S, cap), 7, -1):
        if c % 8 == 0 and S % c == 0:
            return c
    return S


def identical_layer(x, params, *, num_head, key_size, value_size, q_tile=None):
    B, S, D = x.shape
    if q_tile is None or S % q_tile != 0 or (q_tile % 8 != 0 and q_tile != S):
        q_tile = _pick_q_tile(S)
    n_qt = S // q_tile

    HK = num_head * key_size
    HV = num_head * value_size

    # Fused K|V projection weights (single wider matmul).
    wkv = jnp.concatenate([params["wk"], params["wv"]], axis=1)
    bkv = jnp.concatenate([params["bk"], params["bv"]], axis=1)

    ordered = [
        params["wq"], params["bq"], wkv, bkv, params["wo"], params["bo"],
        params["g1"], params["be1"],
        params["w1"], params["bb1"], params["w2"], params["bb2"],
        params["g2"], params["be2"],
    ]

    kernel = functools.partial(
        _identical_layer_kernel,
        num_head=num_head, key_size=key_size, value_size=value_size,
    )

    # Raise VMEM limit above the default scoped limit, but stay within the
    # chip's physical capacity (v7x has only 64 MiB per core).
    try:
        cap = pltpu.get_tpu_info().vmem_capacity_bytes
        vmem_limit = int(min(96 * 1024 * 1024, cap * 3 // 4))
    except Exception:  # pragma: no cover - info query unavailable
        vmem_limit = 64 * 1024 * 1024

    def build(single_buffer_weights):
        if single_buffer_weights:
            # Grid-invariant weights: single buffer (no pointless double-buffer).
            w_spec = lambda a: pl.BlockSpec(a.shape, lambda b, t: (0,) * a.ndim,
                                            pipeline_mode=pl.Buffered(1))
        else:
            w_spec = lambda a: pl.BlockSpec(a.shape, lambda b, t: (0,) * a.ndim)
        return pl.pallas_call(
            kernel,
            out_shape=jax.ShapeDtypeStruct((B, S, D), x.dtype),
            grid_spec=pltpu.PrefetchScalarGridSpec(
                num_scalar_prefetch=0,
                grid=(B, n_qt),                          # t innermost ("arbitrary")
                in_specs=[
                    # query-row tile of x
                    pl.BlockSpec((1, q_tile, D), lambda b, t: (b, t, 0)),
                    # full sequence of x (for K/V projections, used at t == 0)
                    pl.BlockSpec((1, S, D), lambda b, t: (b, 0, 0)),
                ] + [w_spec(a) for a in ordered],
                out_specs=pl.BlockSpec((1, q_tile, D), lambda b, t: (b, t, 0)),
                scratch_shapes=[
                    pltpu.VMEM((S, HK), x.dtype),        # cached K
                    pltpu.VMEM((S, HV), x.dtype),        # cached V
                ]),
            compiler_params=pltpu.CompilerParams(
                dimension_semantics=("parallel", "arbitrary"),
                vmem_limit_bytes=vmem_limit),
        )

    try:
        return build(True)(x, x, *ordered)
    except Exception:
        # Fallback if single-buffered pipeline_mode is unsupported in this build.
        return build(False)(x, x, *ordered)


# ---------------------------- pure-JAX reference ----------------------------
def reference(x, p, *, num_head, key_size, value_size):
    hi = lax.Precision.HIGHEST

    def ln(z, g, b, eps=1e-6):
        m = jnp.mean(z, -1, keepdims=True)
        v = jnp.mean((z - m) ** 2, -1, keepdims=True)
        return (z - m) * lax.rsqrt(v + eps) * g + b

    q = jnp.einsum("bsd,de->bse", x, p["wq"], precision=hi) + p["bq"]
    k = jnp.einsum("bsd,de->bse", x, p["wk"], precision=hi) + p["bk"]
    v = jnp.einsum("bsd,de->bse", x, p["wv"], precision=hi) + p["bv"]
    B, S, _ = x.shape
    q = q.reshape(B, S, num_head, key_size).transpose(0, 2, 1, 3)
    k = k.reshape(B, S, num_head, key_size).transpose(0, 2, 1, 3)
    v = v.reshape(B, S, num_head, value_size).transpose(0, 2, 1, 3)
    s = jnp.einsum("bhqk,bhtk->bhqt", q, k, precision=hi) / math.sqrt(key_size)
    pr = jax.nn.softmax(s, axis=-1)
    ctx = jnp.einsum("bhqt,bhtv->bhqv", pr, v, precision=hi)
    ctx = ctx.transpose(0, 2, 1, 3).reshape(B, S, num_head * value_size)
    attn = jnp.einsum("bse,ed->bsd", ctx, p["wo"], precision=hi) + p["bo"]
    y1 = ln(x + attn, p["g1"], p["be1"])
    h1 = jnp.maximum(jnp.einsum("bsd,di->bsi", y1, p["w1"], precision=hi) + p["bb1"], 0.0)
    ffn = jnp.einsum("bsi,id->bsd", h1, p["w2"], precision=hi) + p["bb2"]
    return ln(ffn + y1, p["g2"], p["be2"])


if __name__ == "__main__":
    B, S = 2, 8
    model_size, inner_size = 32, 64
    num_head, key_size, value_size = 4, 8, 8

    key = jax.random.PRNGKey(0)
    ks = jax.random.split(key, 12)

    def init(k, shape, scale=0.1):
        return (scale * jax.random.normal(k, shape)).astype(jnp.float32)

    params = {
        "wq": init(ks[0], (model_size, num_head * key_size)),
        "bq": init(ks[1], (1, num_head * key_size)),
        "wk": init(ks[2], (model_size, num_head * key_size)),
        "bk": init(ks[3], (1, num_head * key_size)),
        "wv": init(ks[4], (model_size, num_head * value_size)),
        "bv": init(ks[5], (1, num_head * value_size)),
        "wo": init(ks[6], (num_head * value_size, model_size)),
        "bo": init(ks[7], (1, model_size)),
        "g1": jnp.ones((1, model_size), jnp.float32),
        "be1": jnp.zeros((1, model_size), jnp.float32),
        "w1": init(ks[8], (model_size, inner_size)),
        "bb1": init(ks[9], (1, inner_size)),
        "w2": init(ks[10], (inner_size, model_size)),
        "bb2": init(ks[11], (1, model_size)),
        "g2": jnp.ones((1, model_size), jnp.float32),
        "be2": jnp.zeros((1, model_size), jnp.float32),
    }

    x = jax.random.normal(jax.random.PRNGKey(42), (B, S, model_size), jnp.float32)

    out = identical_layer(x, params, num_head=num_head,
                          key_size=key_size, value_size=value_size)
    out = jax.block_until_ready(out)

    ref = reference(x, params, num_head=num_head,
                    key_size=key_size, value_size=value_size)
    assert out.shape == (B, S, model_size)
    assert jnp.allclose(out, ref, atol=1e-2, rtol=1e-2), \
        f"max abs err {jnp.max(jnp.abs(out - ref))}"

    # TODO(synk): attn_mask / seq_mask support (module default None path only).
    print("KERNEL_OK")
</pallas_src>

<mosaic_0001>
module attributes {stable_mosaic.version = 11 : i64} {
  func.func @_identical_layer_kernel(%arg0: i32, %arg1: i32, %arg2: memref<1x8x32xf32, #tpu.memory_space<vmem>>, %arg3: memref<1x8x32xf32, #tpu.memory_space<vmem>>, %arg4: memref<32x32xf32, #tpu.memory_space<vmem>>, %arg5: memref<1x32xf32, #tpu.memory_space<vmem>>, %arg6: memref<32x64xf32, #tpu.memory_space<vmem>>, %arg7: memref<1x64xf32, #tpu.memory_space<vmem>>, %arg8: memref<32x32xf32, #tpu.memory_space<vmem>>, %arg9: memref<1x32xf32, #tpu.memory_space<vmem>>, %arg10: memref<1x32xf32, #tpu.memory_space<vmem>>, %arg11: memref<1x32xf32, #tpu.memory_space<vmem>>, %arg12: memref<32x64xf32, #tpu.memory_space<vmem>>, %arg13: memref<1x64xf32, #tpu.memory_space<vmem>>, %arg14: memref<64x32xf32, #tpu.memory_space<vmem>>, %arg15: memref<1x32xf32, #tpu.memory_space<vmem>>, %arg16: memref<1x32xf32, #tpu.memory_space<vmem>>, %arg17: memref<1x32xf32, #tpu.memory_space<vmem>>, %arg18: memref<1x8x32xf32, #tpu.memory_space<vmem>>, %arg19: memref<8x32xf32, #tpu.memory_space<vmem>>, %arg20: memref<8x32xf32, #tpu.memory_space<vmem>>) attributes {dimension_semantics = [#tpu.dimension_semantics<parallel>, #tpu.dimension_semantics<arbitrary>], iteration_bounds = array<i64: 2, 1>, scalar_prefetch = 0 : i64, scratch_operands = 2 : i64, tpu.core_type = #tpu.core_type<tc>, window_params = [{transform_indices = @transform_0, window_bounds = array<i64: 1, 8, 32>}, {transform_indices = @transform_1, window_bounds = array<i64: 1, 8, 32>}, {pipeline_mode = #tpu.pipeline_mode<synchronous>, transform_indices = @transform_2, window_bounds = array<i64: 32, 32>}, {pipeline_mode = #tpu.pipeline_mode<synchronous>, transform_indices = @transform_3, window_bounds = array<i64: 1, 32>}, {pipeline_mode = #tpu.pipeline_mode<synchronous>, transform_indices = @transform_4, window_bounds = array<i64: 32, 64>}, {pipeline_mode = #tpu.pipeline_mode<synchronous>, transform_indices = @transform_5, window_bounds = array<i64: 1, 64>}, {pipeline_mode = #tpu.pipeline_mode<synchronous>, transform_indices = @transform_6, window_bounds = array<i64: 32, 32>}, {pipeline_mode = #tpu.pipeline_mode<synchronous>, transform_indices = @transform_7, window_bounds = array<i64: 1, 32>}, {pipeline_mode = #tpu.pipeline_mode<synchronous>, transform_indices = @transform_8, window_bounds = array<i64: 1, 32>}, {pipeline_mode = #tpu.pipeline_mode<synchronous>, transform_indices = @transform_9, window_bounds = array<i64: 1, 32>}, {pipeline_mode = #tpu.pipeline_mode<synchronous>, transform_indices = @transform_10, window_bounds = array<i64: 32, 64>}, {pipeline_mode = #tpu.pipeline_mode<synchronous>, transform_indices = @transform_11, window_bounds = array<i64: 1, 64>}, {pipeline_mode = #tpu.pipeline_mode<synchronous>, transform_indices = @transform_12, window_bounds = array<i64: 64, 32>}, {pipeline_mode = #tpu.pipeline_mode<synchronous>, transform_indices = @transform_13, window_bounds = array<i64: 1, 32>}, {pipeline_mode = #tpu.pipeline_mode<synchronous>, transform_indices = @transform_14, window_bounds = array<i64: 1, 32>}, {pipeline_mode = #tpu.pipeline_mode<synchronous>, transform_indices = @transform_15, window_bounds = array<i64: 1, 32>}, {transform_indices = @transform_16, window_bounds = array<i64: 1, 8, 32>}]} {
    %c0_i32 = arith.constant 0 : i32
    %0 = arith.cmpi eq, %arg1, %c0_i32 : i32
    %1 = arith.extui %0 : i1 to i32
    %c0_i32_0 = arith.constant 0 : i32
    %2 = arith.cmpi ne, %1, %c0_i32_0 : i32
    scf.if %2 {
      %c0_74 = arith.constant 0 : index
      %c0_75 = arith.constant 0 : index
      %c0_76 = arith.constant 0 : index
      %139 = vector.load %arg3[%c0_74, %c0_75, %c0_76] : memref<1x8x32xf32, #tpu.memory_space<vmem>>, vector<1x8x32xf32>
      %140 = vector.shape_cast %139 : vector<1x8x32xf32> to vector<8x32xf32>
      %c0_77 = arith.constant 0 : index
      %c0_78 = arith.constant 0 : index
      %141 = vector.load %arg6[%c0_77, %c0_78] : memref<32x64xf32, #tpu.memory_space<vmem>>, vector<32x64xf32>
      %cst_79 = arith.constant dense<0.000000e+00> : vector<8x64xf32>
      %142 = tpu.matmul %140, %141, %cst_79 {dimension_numbers = #tpu.dot_dimension_numbers<[1], [0], [0], [1], [0, 0, 1, 1], [], []>} : vector<8x32xf32>, vector<32x64xf32>, vector<8x64xf32> -> vector<8x64xf32>
      %c0_80 = arith.constant 0 : index
      %c0_81 = arith.constant 0 : index
      %143 = vector.load %arg7[%c0_80, %c0_81] : memref<1x64xf32, #tpu.memory_space<vmem>>, vector<1x64xf32>
      %144 = vector.broadcast %143 : vector<1x64xf32> to vector<8x64xf32>
      %145 = arith.addf %142, %144 : vector<8x64xf32>
      %146 = vector.extract_strided_slice %145 {offsets = [0, 0], sizes = [8, 32], strides = [1, 1]} : vector<8x64xf32> to vector<8x32xf32>
      %c0_82 = arith.constant 0 : index
      %c0_83 = arith.constant 0 : index
      %147 = vector.load %arg19[%c0_82, %c0_83] : memref<8x32xf32, #tpu.memory_space<vmem>>, vector<8x32xf32>
      tpu.vector_store %arg19[%c0_82, %c0_83], %146 {strides = array<i32>} : memref<8x32xf32, #tpu.memory_space<vmem>>, vector<8x32xf32>,
      %148 = vector.extract_strided_slice %145 {offsets = [0, 32], sizes = [8, 32], strides = [1, 1]} : vector<8x64xf32> to vector<8x32xf32>
      %c0_84 = arith.constant 0 : index
      %c0_85 = arith.constant 0 : index
      %149 = vector.load %arg20[%c0_84, %c0_85] : memref<8x32xf32, #tpu.memory_space<vmem>>, vector<8x32xf32>
      tpu.vector_store %arg20[%c0_84, %c0_85], %148 {strides = array<i32>} : memref<8x32xf32, #tpu.memory_space<vmem>>, vector<8x32xf32>,
    } else {
    }
    %c0 = arith.constant 0 : index
    %c0_1 = arith.constant 0 : index
    %c0_2 = arith.constant 0 : index
    %3 = vector.load %arg2[%c0, %c0_1, %c0_2] : memref<1x8x32xf32, #tpu.memory_space<vmem>>, vector<1x8x32xf32>
    %4 = vector.shape_cast %3 : vector<1x8x32xf32> to vector<8x32xf32>
    %c0_3 = arith.constant 0 : index
    %c0_4 = arith.constant 0 : index
    %5 = vector.load %arg4[%c0_3, %c0_4] : memref<32x32xf32, #tpu.memory_space<vmem>>, vector<32x32xf32>
    %cst = arith.constant dense<0.000000e+00> : vector<8x32xf32>
    %6 = tpu.matmul %4, %5, %cst {dimension_numbers = #tpu.dot_dimension_numbers<[1], [0], [0], [1], [0, 0, 1, 1], [], []>} : vector<8x32xf32>, vector<32x32xf32>, vector<8x32xf32> -> vector<8x32xf32>
    %c0_5 = arith.constant 0 : index
    %c0_6 = arith.constant 0 : index
    %7 = vector.load %arg5[%c0_5, %c0_6] : memref<1x32xf32, #tpu.memory_space<vmem>>, vector<1x32xf32>
    %8 = vector.broadcast %7 : vector<1x32xf32> to vector<8x32xf32>
    %9 = arith.addf %6, %8 : vector<8x32xf32>
    %cst_7 = arith.constant 0.353553385 : f32
    %10 = vector.broadcast %cst_7 : f32 to vector<8x32xf32>
    %11 = arith.mulf %9, %10 : vector<8x32xf32>
    %12 = vector.extract_strided_slice %11 {offsets = [0, 0], sizes = [8, 8], strides = [1, 1]} : vector<8x32xf32> to vector<8x8xf32>
    %c0_8 = arith.constant 0 : index
    %c0_9 = arith.constant 0 : index
    %13 = vector.load %arg19[%c0_8, %c0_9] : memref<8x32xf32, #tpu.memory_space<vmem>>, vector<8x8xf32>
    %c0_10 = arith.constant 0 : index
    %c0_11 = arith.constant 0 : index
    %14 = vector.load %arg20[%c0_10, %c0_11] : memref<8x32xf32, #tpu.memory_space<vmem>>, vector<8x8xf32>
    %cst_12 = arith.constant dense<0.000000e+00> : vector<8x8xf32>
    %15 = tpu.matmul %12, %13, %cst_12 {dimension_numbers = #tpu.dot_dimension_numbers<[1], [1], [0], [0], [0, 0, 1, 0], [], []>} : vector<8x8xf32>, vector<8x8xf32>, vector<8x8xf32> -> vector<8x8xf32>
    %cst_13 = arith.constant dense<0xFF800000> : vector<8xf32>
    %16 = vector.multi_reduction <maximumf>, %15, %cst_13 [1] : vector<8x8xf32> to vector<8xf32>
    %17 = vector.shape_cast %16 : vector<8xf32> to vector<8x1xf32>
    %18 = vector.broadcast %17 : vector<8x1xf32> to vector<8x8xf32>
    %19 = arith.subf %15, %18 : vector<8x8xf32>
    %20 = math.exp %19 : vector<8x8xf32>
    %cst_14 = arith.constant dense<0.000000e+00> : vector<8xf32>
    %21 = vector.multi_reduction <add>, %20, %cst_14 [1] : vector<8x8xf32> to vector<8xf32>
    %22 = vector.shape_cast %21 : vector<8xf32> to vector<8x1xf32>
    %cst_15 = arith.constant dense<0.000000e+00> : vector<8x8xf32>
    %23 = tpu.matmul %20, %14, %cst_15 {dimension_numbers = #tpu.dot_dimension_numbers<[1], [0], [0], [1], [0, 0, 1, 1], [], []>} : vector<8x8xf32>, vector<8x8xf32>, vector<8x8xf32> -> vector<8x8xf32>
    %24 = tpu.reciprocal %22 {approx = true} : vector<8x1xf32> -> vector<8x1xf32>
    %25 = vector.broadcast %24 : vector<8x1xf32> to vector<8x8xf32>
    %26 = arith.mulf %23, %25 : vector<8x8xf32>
    %27 = vector.extract_strided_slice %11 {offsets = [0, 8], sizes = [8, 8], strides = [1, 1]} : vector<8x32xf32> to vector<8x8xf32>
    %c0_16 = arith.constant 0 : index
    %c8 = arith.constant 8 : index
    %28 = vector.load %arg19[%c0_16, %c8] : memref<8x32xf32, #tpu.memory_space<vmem>>, vector<8x8xf32>
    %c0_17 = arith.constant 0 : index
    %c8_18 = arith.constant 8 : index
    %29 = vector.load %arg20[%c0_17, %c8_18] : memref<8x32xf32, #tpu.memory_space<vmem>>, vector<8x8xf32>
    %cst_19 = arith.constant dense<0.000000e+00> : vector<8x8xf32>
    %30 = tpu.matmul %27, %28, %cst_19 {dimension_numbers = #tpu.dot_dimension_numbers<[1], [1], [0], [0], [0, 0, 1, 0], [], []>} : vector<8x8xf32>, vector<8x8xf32>, vector<8x8xf32> -> vector<8x8xf32>
    %cst_20 = arith.constant dense<0xFF800000> : vector<8xf32>
    %31 = vector.multi_reduction <maximumf>, %30, %cst_20 [1] : vector<8x8xf32> to vector<8xf32>
    %32 = vector.shape_cast %31 : vector<8xf32> to vector<8x1xf32>
    %33 = vector.broadcast %32 : vector<8x1xf32> to vector<8x8xf32>
    %34 = arith.subf %30, %33 : vector<8x8xf32>
    %35 = math.exp %34 : vector<8x8xf32>
    %cst_21 = arith.constant dense<0.000000e+00> : vector<8xf32>
    %36 = vector.multi_reduction <add>, %35, %cst_21 [1] : vector<8x8xf32> to vector<8xf32>
    %37 = vector.shape_cast %36 : vector<8xf32> to vector<8x1xf32>
    %cst_22 = arith.constant dense<0.000000e+00> : vector<8x8xf32>
    %38 = tpu.matmul %35, %29, %cst_22 {dimension_numbers = #tpu.dot_dimension_numbers<[1], [0], [0], [1], [0, 0, 1, 1], [], []>} : vector<8x8xf32>, vector<8x8xf32>, vector<8x8xf32> -> vector<8x8xf32>
    %39 = tpu.reciprocal %37 {approx = true} : vector<8x1xf32> -> vector<8x1xf32>
    %40 = vector.broadcast %39 : vector<8x1xf32> to vector<8x8xf32>
    %41 = arith.mulf %38, %40 : vector<8x8xf32>
    %42 = vector.extract_strided_slice %11 {offsets = [0, 16], sizes = [8, 8], strides = [1, 1]} : vector<8x32xf32> to vector<8x8xf32>
    %c0_23 = arith.constant 0 : index
    %c16 = arith.constant 16 : index
    %43 = vector.load %arg19[%c0_23, %c16] : memref<8x32xf32, #tpu.memory_space<vmem>>, vector<8x8xf32>
    %c0_24 = arith.constant 0 : index
    %c16_25 = arith.constant 16 : index
    %44 = vector.load %arg20[%c0_24, %c16_25] : memref<8x32xf32, #tpu.memory_space<vmem>>, vector<8x8xf32>
    %cst_26 = arith.constant dense<0.000000e+00> : vector<8x8xf32>
    %45 = tpu.matmul %42, %43, %cst_26 {dimension_numbers = #tpu.dot_dimension_numbers<[1], [1], [0], [0], [0, 0, 1, 0], [], []>} : vector<8x8xf32>, vector<8x8xf32>, vector<8x8xf32> -> vector<8x8xf32>
    %cst_27 = arith.constant dense<0xFF800000> : vector<8xf32>
    %46 = vector.multi_reduction <maximumf>, %45, %cst_27 [1] : vector<8x8xf32> to vector<8xf32>
    %47 = vector.shape_cast %46 : vector<8xf32> to vector<8x1xf32>
    %48 = vector.broadcast %47 : vector<8x1xf32> to vector<8x8xf32>
    %49 = arith.subf %45, %48 : vector<8x8xf32>
    %50 = math.exp %49 : vector<8x8xf32>
    %cst_28 = arith.constant dense<0.000000e+00> : vector<8xf32>
    %51 = vector.multi_reduction <add>, %50, %cst_28 [1] : vector<8x8xf32> to vector<8xf32>
    %52 = vector.shape_cast %51 : vector<8xf32> to vector<8x1xf32>
    %cst_29 = arith.constant dense<0.000000e+00> : vector<8x8xf32>
    %53 = tpu.matmul %50, %44, %cst_29 {dimension_numbers = #tpu.dot_dimension_numbers<[1], [0], [0], [1], [0, 0, 1, 1], [], []>} : vector<8x8xf32>, vector<8x8xf32>, vector<8x8xf32> -> vector<8x8xf32>
    %54 = tpu.reciprocal %52 {approx = true} : vector<8x1xf32> -> vector<8x1xf32>
    %55 = vector.broadcast %54 : vector<8x1xf32> to vector<8x8xf32>
    %56 = arith.mulf %53, %55 : vector<8x8xf32>
    %57 = vector.extract_strided_slice %11 {offsets = [0, 24], sizes = [8, 8], strides = [1, 1]} : vector<8x32xf32> to vector<8x8xf32>
    %c0_30 = arith.constant 0 : index
    %c24 = arith.constant 24 : index
    %58 = vector.load %arg19[%c0_30, %c24] : memref<8x32xf32, #tpu.memory_space<vmem>>, vector<8x8xf32>
    %c0_31 = arith.constant 0 : index
    %c24_32 = arith.constant 24 : index
    %59 = vector.load %arg20[%c0_31, %c24_32] : memref<8x32xf32, #tpu.memory_space<vmem>>, vector<8x8xf32>
    %cst_33 = arith.constant dense<0.000000e+00> : vector<8x8xf32>
    %60 = tpu.matmul %57, %58, %cst_33 {dimension_numbers = #tpu.dot_dimension_numbers<[1], [1], [0], [0], [0, 0, 1, 0], [], []>} : vector<8x8xf32>, vector<8x8xf32>, vector<8x8xf32> -> vector<8x8xf32>
    %cst_34 = arith.constant dense<0xFF800000> : vector<8xf32>
    %61 = vector.multi_reduction <maximumf>, %60, %cst_34 [1] : vector<8x8xf32> to vector<8xf32>
    %62 = vector.shape_cast %61 : vector<8xf32> to vector<8x1xf32>
    %63 = vector.broadcast %62 : vector<8x1xf32> to vector<8x8xf32>
    %64 = arith.subf %60, %63 : vector<8x8xf32>
    %65 = math.exp %64 : vector<8x8xf32>
    %cst_35 = arith.constant dense<0.000000e+00> : vector<8xf32>
    %66 = vector.multi_reduction <add>, %65, %cst_35 [1] : vector<8x8xf32> to vector<8xf32>
    %67 = vector.shape_cast %66 : vector<8xf32> to vector<8x1xf32>
    %cst_36 = arith.constant dense<0.000000e+00> : vector<8x8xf32>
    %68 = tpu.matmul %65, %59, %cst_36 {dimension_numbers = #tpu.dot_dimension_numbers<[1], [0], [0], [1], [0, 0, 1, 1], [], []>} : vector<8x8xf32>, vector<8x8xf32>, vector<8x8xf32> -> vector<8x8xf32>
    %69 = tpu.reciprocal %67 {approx = true} : vector<8x1xf32> -> vector<8x1xf32>
    %70 = vector.broadcast %69 : vector<8x1xf32> to vector<8x8xf32>
    %71 = arith.mulf %68, %70 : vector<8x8xf32>
    %72 = tpu.concatenate %26, %41, %56, %71 in 1 : vector<8x8xf32>, vector<8x8xf32>, vector<8x8xf32>, vector<8x8xf32> -> vector<8x32xf32>
    %c0_37 = arith.constant 0 : index
    %c0_38 = arith.constant 0 : index
    %73 = vector.load %arg8[%c0_37, %c0_38] : memref<32x32xf32, #tpu.memory_space<vmem>>, vector<32x32xf32>
    %cst_39 = arith.constant dense<0.000000e+00> : vector<8x32xf32>
    %74 = tpu.matmul %72, %73, %cst_39 {dimension_numbers = #tpu.dot_dimension_numbers<[1], [0], [0], [1], [0, 0, 1, 1], [], []>} : vector<8x32xf32>, vector<32x32xf32>, vector<8x32xf32> -> vector<8x32xf32>
    %c0_40 = arith.constant 0 : index
    %c0_41 = arith.constant 0 : index
    %75 = vector.load %arg9[%c0_40, %c0_41] : memref<1x32xf32, #tpu.memory_space<vmem>>, vector<1x32xf32>
    %76 = vector.broadcast %75 : vector<1x32xf32> to vector<8x32xf32>
    %77 = arith.addf %74, %76 : vector<8x32xf32>
    %78 = arith.addf %4, %77 : vector<8x32xf32>
    %c0_42 = arith.constant 0 : index
    %c0_43 = arith.constant 0 : index
    %79 = vector.load %arg10[%c0_42, %c0_43] : memref<1x32xf32, #tpu.memory_space<vmem>>, vector<1x32xf32>
    %c0_44 = arith.constant 0 : index
    %c0_45 = arith.constant 0 : index
    %80 = vector.load %arg11[%c0_44, %c0_45] : memref<1x32xf32, #tpu.memory_space<vmem>>, vector<1x32xf32>
    %cst_46 = arith.constant dense<0.000000e+00> : vector<8xf32>
    %81 = vector.multi_reduction <add>, %78, %cst_46 [1] : vector<8x32xf32> to vector<8xf32>
    %82 = vector.shape_cast %81 : vector<8xf32> to vector<8x1xf32>
    %cst_47 = arith.constant 3.200000e+01 : f32
    %83 = vector.broadcast %cst_47 : f32 to vector<8x1xf32>
    %84 = arith.divf %82, %83 : vector<8x1xf32>
    %85 = vector.broadcast %84 : vector<8x1xf32> to vector<8x32xf32>
    %86 = arith.subf %78, %85 : vector<8x32xf32>
    %87 = arith.mulf %86, %86 : vector<8x32xf32>
    %cst_48 = arith.constant dense<0.000000e+00> : vector<8xf32>
    %88 = vector.multi_reduction <add>, %87, %cst_48 [1] : vector<8x32xf32> to vector<8xf32>
    %89 = vector.shape_cast %88 : vector<8xf32> to vector<8x1xf32>
    %cst_49 = arith.constant 3.200000e+01 : f32
    %90 = vector.broadcast %cst_49 : f32 to vector<8x1xf32>
    %91 = arith.divf %89, %90 : vector<8x1xf32>
    %cst_50 = arith.constant 9.99999997E-7 : f32
    %92 = vector.broadcast %cst_50 : f32 to vector<8x1xf32>
    %93 = arith.addf %91, %92 : vector<8x1xf32>
    %94 = math.rsqrt %93 : vector<8x1xf32>
    %95 = vector.broadcast %94 : vector<8x1xf32> to vector<8x32xf32>
    %96 = arith.mulf %86, %95 : vector<8x32xf32>
    %97 = vector.broadcast %79 : vector<1x32xf32> to vector<8x32xf32>
    %98 = arith.mulf %96, %97 : vector<8x32xf32>
    %99 = vector.broadcast %80 : vector<1x32xf32> to vector<8x32xf32>
    %100 = arith.addf %98, %99 : vector<8x32xf32>
    %c0_51 = arith.constant 0 : index
    %c0_52 = arith.constant 0 : index
    %101 = vector.load %arg12[%c0_51, %c0_52] : memref<32x64xf32, #tpu.memory_space<vmem>>, vector<32x64xf32>
    %cst_53 = arith.constant dense<0.000000e+00> : vector<8x64xf32>
    %102 = tpu.matmul %100, %101, %cst_53 {dimension_numbers = #tpu.dot_dimension_numbers<[1], [0], [0], [1], [0, 0, 1, 1], [], []>} : vector<8x32xf32>, vector<32x64xf32>, vector<8x64xf32> -> vector<8x64xf32>
    %c0_54 = arith.constant 0 : index
    %c0_55 = arith.constant 0 : index
    %103 = vector.load %arg13[%c0_54, %c0_55] : memref<1x64xf32, #tpu.memory_space<vmem>>, vector<1x64xf32>
    %104 = vector.broadcast %103 : vector<1x64xf32> to vector<8x64xf32>
    %105 = arith.addf %102, %104 : vector<8x64xf32>
    %cst_56 = arith.constant 0.000000e+00 : f32
    %106 = vector.broadcast %cst_56 : f32 to vector<8x64xf32>
    %107 = arith.maximumf %105, %106 : vector<8x64xf32>
    %c0_57 = arith.constant 0 : index
    %c0_58 = arith.constant 0 : index
    %108 = vector.load %arg14[%c0_57, %c0_58] : memref<64x32xf32, #tpu.memory_space<vmem>>, vector<64x32xf32>
    %cst_59 = arith.constant dense<0.000000e+00> : vector<8x32xf32>
    %109 = tpu.matmul %107, %108, %cst_59 {dimension_numbers = #tpu.dot_dimension_numbers<[1], [0], [0], [1], [0, 0, 1, 1], [], []>} : vector<8x64xf32>, vector<64x32xf32>, vector<8x32xf32> -> vector<8x32xf32>
    %c0_60 = arith.constant 0 : index
    %c0_61 = arith.constant 0 : index
    %110 = vector.load %arg15[%c0_60, %c0_61] : memref<1x32xf32, #tpu.memory_space<vmem>>, vector<1x32xf32>
    %111 = vector.broadcast %110 : vector<1x32xf32> to vector<8x32xf32>
    %112 = arith.addf %109, %111 : vector<8x32xf32>
    %113 = arith.addf %112, %100 : vector<8x32xf32>
    %c0_62 = arith.constant 0 : index
    %c0_63 = arith.constant 0 : index
    %114 = vector.load %arg16[%c0_62, %c0_63] : memref<1x32xf32, #tpu.memory_space<vmem>>, vector<1x32xf32>
    %c0_64 = arith.constant 0 : index
    %c0_65 = arith.constant 0 : index
    %115 = vector.load %arg17[%c0_64, %c0_65] : memref<1x32xf32, #tpu.memory_space<vmem>>, vector<1x32xf32>
    %cst_66 = arith.constant dense<0.000000e+00> : vector<8xf32>
    %116 = vector.multi_reduction <add>, %113, %cst_66 [1] : vector<8x32xf32> to vector<8xf32>
    %117 = vector.shape_cast %116 : vector<8xf32> to vector<8x1xf32>
    %cst_67 = arith.constant 3.200000e+01 : f32
    %118 = vector.broadcast %cst_67 : f32 to vector<8x1xf32>
    %119 = arith.divf %117, %118 : vector<8x1xf32>
    %120 = vector.broadcast %119 : vector<8x1xf32> to vector<8x32xf32>
    %121 = arith.subf %113, %120 : vector<8x32xf32>
    %122 = arith.mulf %121, %121 : vector<8x32xf32>
    %cst_68 = arith.constant dense<0.000000e+00> : vector<8xf32>
    %123 = vector.multi_reduction <add>, %122, %cst_68 [1] : vector<8x32xf32> to vector<8xf32>
    %124 = vector.shape_cast %123 : vector<8xf32> to vector<8x1xf32>
    %cst_69 = arith.constant 3.200000e+01 : f32
    %125 = vector.broadcast %cst_69 : f32 to vector<8x1xf32>
    %126 = arith.divf %124, %125 : vector<8x1xf32>
    %cst_70 = arith.constant 9.99999997E-7 : f32
    %127 = vector.broadcast %cst_70 : f32 to vector<8x1xf32>
    %128 = arith.addf %126, %127 : vector<8x1xf32>
    %129 = math.rsqrt %128 : vector<8x1xf32>
    %130 = vector.broadcast %129 : vector<8x1xf32> to vector<8x32xf32>
    %131 = arith.mulf %121, %130 : vector<8x32xf32>
    %132 = vector.broadcast %114 : vector<1x32xf32> to vector<8x32xf32>
    %133 = arith.mulf %131, %132 : vector<8x32xf32>
    %134 = vector.broadcast %115 : vector<1x32xf32> to vector<8x32xf32>
    %135 = arith.addf %133, %134 : vector<8x32xf32>
    %c0_71 = arith.constant 0 : index
    %c0_72 = arith.constant 0 : index
    %c0_73 = arith.constant 0 : index
    %136 = vector.load %arg18[%c0_71, %c0_72, %c0_73] : memref<1x8x32xf32, #tpu.memory_space<vmem>>, vector<1x8x32xf32>
    %137 = vector.shape_cast %136 : vector<1x8x32xf32> to vector<8x32xf32>
    %138 = vector.shape_cast %135 : vector<8x32xf32> to vector<1x8x32xf32>
    tpu.vector_store %arg18[%c0_71, %c0_72, %c0_73], %138 {strides = array<i32>} : memref<1x8x32xf32, #tpu.memory_space<vmem>>, vector<1x8x32xf32>,
    return
  }
  func.func @transform_0(%arg0: i32, %arg1: i32) -> (i32, i32, i32) {
    %c0_i32 = arith.constant 0 : i32
    %c0_i32_0 = arith.constant 0 : i32
    return %arg0, %arg1, %c0_i32 : i32, i32, i32
  }
  func.func @transform_1(%arg0: i32, %arg1: i32) -> (i32, i32, i32) {
    %c0_i32 = arith.constant 0 : i32
    %c0_i32_0 = arith.constant 0 : i32
    %c0_i32_1 = arith.constant 0 : i32
    return %arg0, %c0_i32, %c0_i32_0 : i32, i32, i32
  }
  func.func @transform_2(%arg0: i32, %arg1: i32) -> (i32, i32) {
    %c0_i32 = arith.constant 0 : i32
    %c0_i32_0 = arith.constant 0 : i32
    %c0_i32_1 = arith.constant 0 : i32
    return %c0_i32, %c0_i32_0 : i32, i32
  }
  func.func @transform_3(%arg0: i32, %arg1: i32) -> (i32, i32) {
    %c0_i32 = arith.constant 0 : i32
    %c0_i32_0 = arith.constant 0 : i32
    %c0_i32_1 = arith.constant 0 : i32
    return %c0_i32, %c0_i32_0 : i32, i32
  }
  func.func @transform_4(%arg0: i32, %arg1: i32) -> (i32, i32) {
    %c0_i32 = arith.constant 0 : i32
    %c0_i32_0 = arith.constant 0 : i32
    %c0_i32_1 = arith.constant 0 : i32
    return %c0_i32, %c0_i32_0 : i32, i32
  }
  func.func @transform_5(%arg0: i32, %arg1: i32) -> (i32, i32) {
    %c0_i32 = arith.constant 0 : i32
    %c0_i32_0 = arith.constant 0 : i32
    %c0_i32_1 = arith.constant 0 : i32
    return %c0_i32, %c0_i32_0 : i32, i32
  }
  func.func @transform_6(%arg0: i32, %arg1: i32) -> (i32, i32) {
    %c0_i32 = arith.constant 0 : i32
    %c0_i32_0 = arith.constant 0 : i32
    %c0_i32_1 = arith.constant 0 : i32
    return %c0_i32, %c0_i32_0 : i32, i32
  }
  func.func @transform_7(%arg0: i32, %arg1: i32) -> (i32, i32) {
    %c0_i32 = arith.constant 0 : i32
    %c0_i32_0 = arith.constant 0 : i32
    %c0_i32_1 = arith.constant 0 : i32
    return %c0_i32, %c0_i32_0 : i32, i32
  }
  func.func @transform_8(%arg0: i32, %arg1: i32) -> (i32, i32) {
    %c0_i32 = arith.constant 0 : i32
    %c0_i32_0 = arith.constant 0 : i32
    %c0_i32_1 = arith.constant 0 : i32
    return %c0_i32, %c0_i32_0 : i32, i32
  }
  func.func @transform_9(%arg0: i32, %arg1: i32) -> (i32, i32) {
    %c0_i32 = arith.constant 0 : i32
    %c0_i32_0 = arith.constant 0 : i32
    %c0_i32_1 = arith.constant 0 : i32
    return %c0_i32, %c0_i32_0 : i32, i32
  }
  func.func @transform_10(%arg0: i32, %arg1: i32) -> (i32, i32) {
    %c0_i32 = arith.constant 0 : i32
    %c0_i32_0 = arith.constant 0 : i32
    %c0_i32_1 = arith.constant 0 : i32
    return %c0_i32, %c0_i32_0 : i32, i32
  }
  func.func @transform_11(%arg0: i32, %arg1: i32) -> (i32, i32) {
    %c0_i32 = arith.constant 0 : i32
    %c0_i32_0 = arith.constant 0 : i32
    %c0_i32_1 = arith.constant 0 : i32
    return %c0_i32, %c0_i32_0 : i32, i32
  }
  func.func @transform_12(%arg0: i32, %arg1: i32) -> (i32, i32) {
    %c0_i32 = arith.constant 0 : i32
    %c0_i32_0 = arith.constant 0 : i32
    %c0_i32_1 = arith.constant 0 : i32
    return %c0_i32, %c0_i32_0 : i32, i32
  }
  func.func @transform_13(%arg0: i32, %arg1: i32) -> (i32, i32) {
    %c0_i32 = arith.constant 0 : i32
    %c0_i32_0 = arith.constant 0 : i32
    %c0_i32_1 = arith.constant 0 : i32
    return %c0_i32, %c0_i32_0 : i32, i32
  }
  func.func @transform_14(%arg0: i32, %arg1: i32) -> (i32, i32) {
    %c0_i32 = arith.constant 0 : i32
    %c0_i32_0 = arith.constant 0 : i32
    %c0_i32_1 = arith.constant 0 : i32
    return %c0_i32, %c0_i32_0 : i32, i32
  }
  func.func @transform_15(%arg0: i32, %arg1: i32) -> (i32, i32) {
    %c0_i32 = arith.constant 0 : i32
    %c0_i32_0 = arith.constant 0 : i32
    %c0_i32_1 = arith.constant 0 : i32
    return %c0_i32, %c0_i32_0 : i32, i32
  }
  func.func @transform_16(%arg0: i32, %arg1: i32) -> (i32, i32, i32) {
    %c0_i32 = arith.constant 0 : i32
    %c0_i32_0 = arith.constant 0 : i32
    return %arg0, %arg1, %c0_i32 : i32, i32, i32
  }
}

module attributes {stable_mosaic.version = 11 : i64} {
  func.func @_identical_layer_kernel(%arg0: i32, %arg1: i32, %arg2: memref<1x8x32xf32, #tpu.memory_space<vmem>>, %arg3: memref<1x8x32xf32, #tpu.memory_space<vmem>>, %arg4: memref<32x32xf32, #tpu.memory_space<vmem>>, %arg5: memref<1x32xf32, #tpu.memory_space<vmem>>, %arg6: memref<32x64xf32, #tpu.memory_space<vmem>>, %arg7: memref<1x64xf32, #tpu.memory_space<vmem>>, %arg8: memref<32x32xf32, #tpu.memory_space<vmem>>, %arg9: memref<1x32xf32, #tpu.memory_space<vmem>>, %arg10: memref<1x32xf32, #tpu.memory_space<vmem>>, %arg11: memref<1x32xf32, #tpu.memory_space<vmem>>, %arg12: memref<32x64xf32, #tpu.memory_space<vmem>>, %arg13: memref<1x64xf32, #tpu.memory_space<vmem>>, %arg14: memref<64x32xf32, #tpu.memory_space<vmem>>, %arg15: memref<1x32xf32, #tpu.memory_space<vmem>>, %arg16: memref<1x32xf32, #tpu.memory_space<vmem>>, %arg17: memref<1x32xf32, #tpu.memory_space<vmem>>, %arg18: memref<1x8x32xf32, #tpu.memory_space<vmem>>, %arg19: memref<8x32xf32, #tpu.memory_space<vmem>>, %arg20: memref<8x32xf32, #tpu.memory_space<vmem>>) attributes {dimension_semantics = [#tpu.dimension_semantics<parallel>, #tpu.dimension_semantics<arbitrary>], iteration_bounds = array<i64: 2, 1>, scalar_prefetch = 0 : i64, scratch_operands = 2 : i64, tpu.core_type = #tpu.core_type<tc>, window_params = [{transform_indices = @transform_0, window_bounds = array<i64: 1, 8, 32>}, {transform_indices = @transform_1, window_bounds = array<i64: 1, 8, 32>}, {pipeline_mode = #tpu.pipeline_mode<synchronous>, transform_indices = @transform_2, window_bounds = array<i64: 32, 32>}, {pipeline_mode = #tpu.pipeline_mode<synchronous>, transform_indices = @transform_3, window_bounds = array<i64: 1, 32>}, {pipeline_mode = #tpu.pipeline_mode<synchronous>, transform_indices = @transform_4, window_bounds = array<i64: 32, 64>}, {pipeline_mode = #tpu.pipeline_mode<synchronous>, transform_indices = @transform_5, window_bounds = array<i64: 1, 64>}, {pipeline_mode = #tpu.pipeline_mode<synchronous>, transform_indices = @transform_6, window_bounds = array<i64: 32, 32>}, {pipeline_mode = #tpu.pipeline_mode<synchronous>, transform_indices = @transform_7, window_bounds = array<i64: 1, 32>}, {pipeline_mode = #tpu.pipeline_mode<synchronous>, transform_indices = @transform_8, window_bounds = array<i64: 1, 32>}, {pipeline_mode = #tpu.pipeline_mode<synchronous>, transform_indices = @transform_9, window_bounds = array<i64: 1, 32>}, {pipeline_mode = #tpu.pipeline_mode<synchronous>, transform_indices = @transform_10, window_bounds = array<i64: 32, 64>}, {pipeline_mode = #tpu.pipeline_mode<synchronous>, transform_indices = @transform_11, window_bounds = array<i64: 1, 64>}, {pipeline_mode = #tpu.pipeline_mode<synchronous>, transform_indices = @transform_12, window_bounds = array<i64: 64, 32>}, {pipeline_mode = #tpu.pipeline_mode<synchronous>, transform_indices = @transform_13, window_bounds = array<i64: 1, 32>}, {pipeline_mode = #tpu.pipeline_mode<synchronous>, transform_indices = @transform_14, window_bounds = array<i64: 1, 32>}, {pipeline_mode = #tpu.pipeline_mode<synchronous>, transform_indices = @transform_15, window_bounds = array<i64: 1, 32>}, {transform_indices = @transform_16, window_bounds = array<i64: 1, 8, 32>}]} {
    %c0_i32 = arith.constant 0 : i32
    %0 = arith.cmpi eq, %arg1, %c0_i32 : i32
    %1 = arith.extui %0 : i1 to i32
    %c0_i32_0 = arith.constant 0 : i32
    %2 = arith.cmpi ne, %1, %c0_i32_0 : i32
    scf.if %2 {
      %c0_74 = arith.constant 0 : index
      %c0_75 = arith.constant 0 : index
      %c0_76 = arith.constant 0 : index
      %139 = vector.load %arg3[%c0_74, %c0_75, %c0_76] : memref<1x8x32xf32, #tpu.memory_space<vmem>>, vector<1x8x32xf32>
      %140 = vector.shape_cast %139 : vector<1x8x32xf32> to vector<8x32xf32>
      %c0_77 = arith.constant 0 : index
      %c0_78 = arith.constant 0 : index
      %141 = vector.load %arg6[%c0_77, %c0_78] : memref<32x64xf32, #tpu.memory_space<vmem>>, vector<32x64xf32>
      %cst_79 = arith.constant dense<0.000000e+00> : vector<8x64xf32>
      %142 = tpu.matmul %140, %141, %cst_79 {dimension_numbers = #tpu.dot_dimension_numbers<[1], [0], [0], [1], [0, 0, 1, 1], [], []>} : vector<8x32xf32>, vector<32x64xf32>, vector<8x64xf32> -> vector<8x64xf32>
      %c0_80 = arith.constant 0 : index
      %c0_81 = arith.constant 0 : index
      %143 = vector.load %arg7[%c0_80, %c0_81] : memref<1x64xf32, #tpu.memory_space<vmem>>, vector<1x64xf32>
      %144 = vector.broadcast %143 : vector<1x64xf32> to vector<8x64xf32>
      %145 = arith.addf %142, %144 : vector<8x64xf32>
      %146 = vector.extract_strided_slice %145 {offsets = [0, 0], sizes = [8, 32], strides = [1, 1]} : vector<8x64xf32> to vector<8x32xf32>
      %c0_82 = arith.constant 0 : index
      %c0_83 = arith.constant 0 : index
      %147 = vector.load %arg19[%c0_82, %c0_83] : memref<8x32xf32, #tpu.memory_space<vmem>>, vector<8x32xf32>
      tpu.vector_store %arg19[%c0_82, %c0_83], %146 {strides = array<i32>} : memref<8x32xf32, #tpu.memory_space<vmem>>, vector<8x32xf32>,
      %148 = vector.extract_strided_slice %145 {offsets = [0, 32], sizes = [8, 32], strides = [1, 1]} : vector<8x64xf32> to vector<8x32xf32>
      %c0_84 = arith.constant 0 : index
      %c0_85 = arith.constant 0 : index
      %149 = vector.load %arg20[%c0_84, %c0_85] : memref<8x32xf32, #tpu.memory_space<vmem>>, vector<8x32xf32>
      tpu.vector_store %arg20[%c0_84, %c0_85], %148 {strides = array<i32>} : memref<8x32xf32, #tpu.memory_space<vmem>>, vector<8x32xf32>,
    } else {
    }
    %c0 = arith.constant 0 : index
    %c0_1 = arith.constant 0 : index
    %c0_2 = arith.constant 0 : index
    %3 = vector.load %arg2[%c0, %c0_1, %c0_2] : memref<1x8x32xf32, #tpu.memory_space<vmem>>, vector<1x8x32xf32>
    %4 = vector.shape_cast %3 : vector<1x8x32xf32> to vector<8x32xf32>
    %c0_3 = arith.constant 0 : index
    %c0_4 = arith.constant 0 : index
    %5 = vector.load %arg4[%c0_3, %c0_4] : memref<32x32xf32, #tpu.memory_space<vmem>>, vector<32x32xf32>
    %cst = arith.constant dense<0.000000e+00> : vector<8x32xf32>
    %6 = tpu.matmul %4, %5, %cst {dimension_numbers = #tpu.dot_dimension_numbers<[1], [0], [0], [1], [0, 0, 1, 1], [], []>} : vector<8x32xf32>, vector<32x32xf32>, vector<8x32xf32> -> vector<8x32xf32>
    %c0_5 = arith.constant 0 : index
    %c0_6 = arith.constant 0 : index
    %7 = vector.load %arg5[%c0_5, %c0_6] : memref<1x32xf32, #tpu.memory_space<vmem>>, vector<1x32xf32>
    %8 = vector.broadcast %7 : vector<1x32xf32> to vector<8x32xf32>
    %9 = arith.addf %6, %8 : vector<8x32xf32>
    %cst_7 = arith.constant 0.353553385 : f32
    %10 = vector.broadcast %cst_7 : f32 to vector<8x32xf32>
    %11 = arith.mulf %9, %10 : vector<8x32xf32>
    %12 = vector.extract_strided_slice %11 {offsets = [0, 0], sizes = [8, 8], strides = [1, 1]} : vector<8x32xf32> to vector<8x8xf32>
    %c0_8 = arith.constant 0 : index
    %c0_9 = arith.constant 0 : index
    %13 = vector.load %arg19[%c0_8, %c0_9] : memref<8x32xf32, #tpu.memory_space<vmem>>, vector<8x8xf32>
    %c0_10 = arith.constant 0 : index
    %c0_11 = arith.constant 0 : index
    %14 = vector.load %arg20[%c0_10, %c0_11] : memref<8x32xf32, #tpu.memory_space<vmem>>, vector<8x8xf32>
    %cst_12 = arith.constant dense<0.000000e+00> : vector<8x8xf32>
    %15 = tpu.matmul %12, %13, %cst_12 {dimension_numbers = #tpu.dot_dimension_numbers<[1], [1], [0], [0], [0, 0, 1, 0], [], []>} : vector<8x8xf32>, vector<8x8xf32>, vector<8x8xf32> -> vector<8x8xf32>
    %cst_13 = arith.constant dense<0xFF800000> : vector<8xf32>
    %16 = vector.multi_reduction <maximumf>, %15, %cst_13 [1] : vector<8x8xf32> to vector<8xf32>
    %17 = vector.shape_cast %16 : vector<8xf32> to vector<8x1xf32>
    %18 = vector.broadcast %17 : vector<8x1xf32> to vector<8x8xf32>
    %19 = arith.subf %15, %18 : vector<8x8xf32>
    %20 = math.exp %19 : vector<8x8xf32>
    %cst_14 = arith.constant dense<0.000000e+00> : vector<8xf32>
    %21 = vector.multi_reduction <add>, %20, %cst_14 [1] : vector<8x8xf32> to vector<8xf32>
    %22 = vector.shape_cast %21 : vector<8xf32> to vector<8x1xf32>
    %cst_15 = arith.constant dense<0.000000e+00> : vector<8x8xf32>
    %23 = tpu.matmul %20, %14, %cst_15 {dimension_numbers = #tpu.dot_dimension_numbers<[1], [0], [0], [1], [0, 0, 1, 1], [], []>} : vector<8x8xf32>, vector<8x8xf32>, vector<8x8xf32> -> vector<8x8xf32>
    %24 = tpu.reciprocal %22 {approx = true} : vector<8x1xf32> -> vector<8x1xf32>
    %25 = vector.broadcast %24 : vector<8x1xf32> to vector<8x8xf32>
    %26 = arith.mulf %23, %25 : vector<8x8xf32>
    %27 = vector.extract_strided_slice %11 {offsets = [0, 8], sizes = [8, 8], strides = [1, 1]} : vector<8x32xf32> to vector<8x8xf32>
    %c0_16 = arith.constant 0 : index
    %c8 = arith.constant 8 : index
    %28 = vector.load %arg19[%c0_16, %c8] : memref<8x32xf32, #tpu.memory_space<vmem>>, vector<8x8xf32>
    %c0_17 = arith.constant 0 : index
    %c8_18 = arith.constant 8 : index
    %29 = vector.load %arg20[%c0_17, %c8_18] : memref<8x32xf32, #tpu.memory_space<vmem>>, vector<8x8xf32>
    %cst_19 = arith.constant dense<0.000000e+00> : vector<8x8xf32>
    %30 = tpu.matmul %27, %28, %cst_19 {dimension_numbers = #tpu.dot_dimension_numbers<[1], [1], [0], [0], [0, 0, 1, 0], [], []>} : vector<8x8xf32>, vector<8x8xf32>, vector<8x8xf32> -> vector<8x8xf32>
    %cst_20 = arith.constant dense<0xFF800000> : vector<8xf32>
    %31 = vector.multi_reduction <maximumf>, %30, %cst_20 [1] : vector<8x8xf32> to vector<8xf32>
    %32 = vector.shape_cast %31 : vector<8xf32> to vector<8x1xf32>
    %33 = vector.broadcast %32 : vector<8x1xf32> to vector<8x8xf32>
    %34 = arith.subf %30, %33 : vector<8x8xf32>
    %35 = math.exp %34 : vector<8x8xf32>
    %cst_21 = arith.constant dense<0.000000e+00> : vector<8xf32>
    %36 = vector.multi_reduction <add>, %35, %cst_21 [1] : vector<8x8xf32> to vector<8xf32>
    %37 = vector.shape_cast %36 : vector<8xf32> to vector<8x1xf32>
    %cst_22 = arith.constant dense<0.000000e+00> : vector<8x8xf32>
    %38 = tpu.matmul %35, %29, %cst_22 {dimension_numbers = #tpu.dot_dimension_numbers<[1], [0], [0], [1], [0, 0, 1, 1], [], []>} : vector<8x8xf32>, vector<8x8xf32>, vector<8x8xf32> -> vector<8x8xf32>
    %39 = tpu.reciprocal %37 {approx = true} : vector<8x1xf32> -> vector<8x1xf32>
    %40 = vector.broadcast %39 : vector<8x1xf32> to vector<8x8xf32>
    %41 = arith.mulf %38, %40 : vector<8x8xf32>
    %42 = vector.extract_strided_slice %11 {offsets = [0, 16], sizes = [8, 8], strides = [1, 1]} : vector<8x32xf32> to vector<8x8xf32>
    %c0_23 = arith.constant 0 : index
    %c16 = arith.constant 16 : index
    %43 = vector.load %arg19[%c0_23, %c16] : memref<8x32xf32, #tpu.memory_space<vmem>>, vector<8x8xf32>
    %c0_24 = arith.constant 0 : index
    %c16_25 = arith.constant 16 : index
    %44 = vector.load %arg20[%c0_24, %c16_25] : memref<8x32xf32, #tpu.memory_space<vmem>>, vector<8x8xf32>
    %cst_26 = arith.constant dense<0.000000e+00> : vector<8x8xf32>
    %45 = tpu.matmul %42, %43, %cst_26 {dimension_numbers = #tpu.dot_dimension_numbers<[1], [1], [0], [0], [0, 0, 1, 0], [], []>} : vector<8x8xf32>, vector<8x8xf32>, vector<8x8xf32> -> vector<8x8xf32>
    %cst_27 = arith.constant dense<0xFF800000> : vector<8xf32>
    %46 = vector.multi_reduction <maximumf>, %45, %cst_27 [1] : vector<8x8xf32> to vector<8xf32>
    %47 = vector.shape_cast %46 : vector<8xf32> to vector<8x1xf32>
    %48 = vector.broadcast %47 : vector<8x1xf32> to vector<8x8xf32>
    %49 = arith.subf %45, %48 : vector<8x8xf32>
    %50 = math.exp %49 : vector<8x8xf32>
    %cst_28 = arith.constant dense<0.000000e+00> : vector<8xf32>
    %51 = vector.multi_reduction <add>, %50, %cst_28 [1] : vector<8x8xf32> to vector<8xf32>
    %52 = vector.shape_cast %51 : vector<8xf32> to vector<8x1xf32>
    %cst_29 = arith.constant dense<0.000000e+00> : vector<8x8xf32>
    %53 = tpu.matmul %50, %44, %cst_29 {dimension_numbers = #tpu.dot_dimension_numbers<[1], [0], [0], [1], [0, 0, 1, 1], [], []>} : vector<8x8xf32>, vector<8x8xf32>, vector<8x8xf32> -> vector<8x8xf32>
    %54 = tpu.reciprocal %52 {approx = true} : vector<8x1xf32> -> vector<8x1xf32>
    %55 = vector.broadcast %54 : vector<8x1xf32> to vector<8x8xf32>
    %56 = arith.mulf %53, %55 : vector<8x8xf32>
    %57 = vector.extract_strided_slice %11 {offsets = [0, 24], sizes = [8, 8], strides = [1, 1]} : vector<8x32xf32> to vector<8x8xf32>
    %c0_30 = arith.constant 0 : index
    %c24 = arith.constant 24 : index
    %58 = vector.load %arg19[%c0_30, %c24] : memref<8x32xf32, #tpu.memory_space<vmem>>, vector<8x8xf32>
    %c0_31 = arith.constant 0 : index
    %c24_32 = arith.constant 24 : index
    %59 = vector.load %arg20[%c0_31, %c24_32] : memref<8x32xf32, #tpu.memory_space<vmem>>, vector<8x8xf32>
    %cst_33 = arith.constant dense<0.000000e+00> : vector<8x8xf32>
    %60 = tpu.matmul %57, %58, %cst_33 {dimension_numbers = #tpu.dot_dimension_numbers<[1], [1], [0], [0], [0, 0, 1, 0], [], []>} : vector<8x8xf32>, vector<8x8xf32>, vector<8x8xf32> -> vector<8x8xf32>
    %cst_34 = arith.constant dense<0xFF800000> : vector<8xf32>
    %61 = vector.multi_reduction <maximumf>, %60, %cst_34 [1] : vector<8x8xf32> to vector<8xf32>
    %62 = vector.shape_cast %61 : vector<8xf32> to vector<8x1xf32>
    %63 = vector.broadcast %62 : vector<8x1xf32> to vector<8x8xf32>
    %64 = arith.subf %60, %63 : vector<8x8xf32>
    %65 = math.exp %64 : vector<8x8xf32>
    %cst_35 = arith.constant dense<0.000000e+00> : vector<8xf32>
    %66 = vector.multi_reduction <add>, %65, %cst_35 [1] : vector<8x8xf32> to vector<8xf32>
    %67 = vector.shape_cast %66 : vector<8xf32> to vector<8x1xf32>
    %cst_36 = arith.constant dense<0.000000e+00> : vector<8x8xf32>
    %68 = tpu.matmul %65, %59, %cst_36 {dimension_numbers = #tpu.dot_dimension_numbers<[1], [0], [0], [1], [0, 0, 1, 1], [], []>} : vector<8x8xf32>, vector<8x8xf32>, vector<8x8xf32> -> vector<8x8xf32>
    %69 = tpu.reciprocal %67 {approx = true} : vector<8x1xf32> -> vector<8x1xf32>
    %70 = vector.broadcast %69 : vector<8x1xf32> to vector<8x8xf32>
    %71 = arith.mulf %68, %70 : vector<8x8xf32>
    %72 = tpu.concatenate %26, %41, %56, %71 in 1 : vector<8x8xf32>, vector<8x8xf32>, vector<8x8xf32>, vector<8x8xf32> -> vector<8x32xf32>
    %c0_37 = arith.constant 0 : index
    %c0_38 = arith.constant 0 : index
    %73 = vector.load %arg8[%c0_37, %c0_38] : memref<32x32xf32, #tpu.memory_space<vmem>>, vector<32x32xf32>
    %cst_39 = arith.constant dense<0.000000e+00> : vector<8x32xf32>
    %74 = tpu.matmul %72, %73, %cst_39 {dimension_numbers = #tpu.dot_dimension_numbers<[1], [0], [0], [1], [0, 0, 1, 1], [], []>} : vector<8x32xf32>, vector<32x32xf32>, vector<8x32xf32> -> vector<8x32xf32>
    %c0_40 = arith.constant 0 : index
    %c0_41 = arith.constant 0 : index
    %75 = vector.load %arg9[%c0_40, %c0_41] : memref<1x32xf32, #tpu.memory_space<vmem>>, vector<1x32xf32>
    %76 = vector.broadcast %75 : vector<1x32xf32> to vector<8x32xf32>
    %77 = arith.addf %74, %76 : vector<8x32xf32>
    %78 = arith.addf %4, %77 : vector<8x32xf32>
    %c0_42 = arith.constant 0 : index
    %c0_43 = arith.constant 0 : index
    %79 = vector.load %arg10[%c0_42, %c0_43] : memref<1x32xf32, #tpu.memory_space<vmem>>, vector<1x32xf32>
    %c0_44 = arith.constant 0 : index
    %c0_45 = arith.constant 0 : index
    %80 = vector.load %arg11[%c0_44, %c0_45] : memref<1x32xf32, #tpu.memory_space<vmem>>, vector<1x32xf32>
    %cst_46 = arith.constant dense<0.000000e+00> : vector<8xf32>
    %81 = vector.multi_reduction <add>, %78, %cst_46 [1] : vector<8x32xf32> to vector<8xf32>
    %82 = vector.shape_cast %81 : vector<8xf32> to vector<8x1xf32>
    %cst_47 = arith.constant 3.200000e+01 : f32
    %83 = vector.broadcast %cst_47 : f32 to vector<8x1xf32>
    %84 = arith.divf %82, %83 : vector<8x1xf32>
    %85 = vector.broadcast %84 : vector<8x1xf32> to vector<8x32xf32>
    %86 = arith.subf %78, %85 : vector<8x32xf32>
    %87 = arith.mulf %86, %86 : vector<8x32xf32>
    %cst_48 = arith.constant dense<0.000000e+00> : vector<8xf32>
    %88 = vector.multi_reduction <add>, %87, %cst_48 [1] : vector<8x32xf32> to vector<8xf32>
    %89 = vector.shape_cast %88 : vector<8xf32> to vector<8x1xf32>
    %cst_49 = arith.constant 3.200000e+01 : f32
    %90 = vector.broadcast %cst_49 : f32 to vector<8x1xf32>
    %91 = arith.divf %89, %90 : vector<8x1xf32>
    %cst_50 = arith.constant 9.99999997E-7 : f32
    %92 = vector.broadcast %cst_50 : f32 to vector<8x1xf32>
    %93 = arith.addf %91, %92 : vector<8x1xf32>
    %94 = math.rsqrt %93 : vector<8x1xf32>
    %95 = vector.broadcast %94 : vector<8x1xf32> to vector<8x32xf32>
    %96 = arith.mulf %86, %95 : vector<8x32xf32>
    %97 = vector.broadcast %79 : vector<1x32xf32> to vector<8x32xf32>
    %98 = arith.mulf %96, %97 : vector<8x32xf32>
    %99 = vector.broadcast %80 : vector<1x32xf32> to vector<8x32xf32>
    %100 = arith.addf %98, %99 : vector<8x32xf32>
    %c0_51 = arith.constant 0 : index
    %c0_52 = arith.constant 0 : index
    %101 = vector.load %arg12[%c0_51, %c0_52] : memref<32x64xf32, #tpu.memory_space<vmem>>, vector<32x64xf32>
    %cst_53 = arith.constant dense<0.000000e+00> : vector<8x64xf32>
    %102 = tpu.matmul %100, %101, %cst_53 {dimension_numbers = #tpu.dot_dimension_numbers<[1], [0], [0], [1], [0, 0, 1, 1], [], []>} : vector<8x32xf32>, vector<32x64xf32>, vector<8x64xf32> -> vector<8x64xf32>
    %c0_54 = arith.constant 0 : index
    %c0_55 = arith.constant 0 : index
    %103 = vector.load %arg13[%c0_54, %c0_55] : memref<1x64xf32, #tpu.memory_space<vmem>>, vector<1x64xf32>
    %104 = vector.broadcast %103 : vector<1x64xf32> to vector<8x64xf32>
    %105 = arith.addf %102, %104 : vector<8x64xf32>
    %cst_56 = arith.constant 0.000000e+00 : f32
    %106 = vector.broadcast %cst_56 : f32 to vector<8x64xf32>
    %107 = arith.maximumf %105, %106 : vector<8x64xf32>
    %c0_57 = arith.constant 0 : index
    %c0_58 = arith.constant 0 : index
    %108 = vector.load %arg14[%c0_57, %c0_58] : memref<64x32xf32, #tpu.memory_space<vmem>>, vector<64x32xf32>
    %cst_59 = arith.constant dense<0.000000e+00> : vector<8x32xf32>
    %109 = tpu.matmul %107, %108, %cst_59 {dimension_numbers = #tpu.dot_dimension_numbers<[1], [0], [0], [1], [0, 0, 1, 1], [], []>} : vector<8x64xf32>, vector<64x32xf32>, vector<8x32xf32> -> vector<8x32xf32>
    %c0_60 = arith.constant 0 : index
    %c0_61 = arith.constant 0 : index
    %110 = vector.load %arg15[%c0_60, %c0_61] : memref<1x32xf32, #tpu.memory_space<vmem>>, vector<1x32xf32>
    %111 = vector.broadcast %110 : vector<1x32xf32> to vector<8x32xf32>
    %112 = arith.addf %109, %111 : vector<8x32xf32>
    %113 = arith.addf %112, %100 : vector<8x32xf32>
    %c0_62 = arith.constant 0 : index
    %c0_63 = arith.constant 0 : index
    %114 = vector.load %arg16[%c0_62, %c0_63] : memref<1x32xf32, #tpu.memory_space<vmem>>, vector<1x32xf32>
    %c0_64 = arith.constant 0 : index
    %c0_65 = arith.constant 0 : index
    %115 = vector.load %arg17[%c0_64, %c0_65] : memref<1x32xf32, #tpu.memory_space<vmem>>, vector<1x32xf32>
    %cst_66 = arith.constant dense<0.000000e+00> : vector<8xf32>
    %116 = vector.multi_reduction <add>, %113, %cst_66 [1] : vector<8x32xf32> to vector<8xf32>
    %117 = vector.shape_cast %116 : vector<8xf32> to vector<8x1xf32>
    %cst_67 = arith.constant 3.200000e+01 : f32
    %118 = vector.broadcast %cst_67 : f32 to vector<8x1xf32>
    %119 = arith.divf %117, %118 : vector<8x1xf32>
    %120 = vector.broadcast %119 : vector<8x1xf32> to vector<8x32xf32>
    %121 = arith.subf %113, %120 : vector<8x32xf32>
    %122 = arith.mulf %121, %121 : vector<8x32xf32>
    %cst_68 = arith.constant dense<0.000000e+00> : vector<8xf32>
    %123 = vector.multi_reduction <add>, %122, %cst_68 [1] : vector<8x32xf32> to vector<8xf32>
    %124 = vector.shape_cast %123 : vector<8xf32> to vector<8x1xf32>
    %cst_69 = arith.constant 3.200000e+01 : f32
    %125 = vector.broadcast %cst_69 : f32 to vector<8x1xf32>
    %126 = arith.divf %124, %125 : vector<8x1xf32>
    %cst_70 = arith.constant 9.99999997E-7 : f32
    %127 = vector.broadcast %cst_70 : f32 to vector<8x1xf32>
    %128 = arith.addf %126, %127 : vector<8x1xf32>
    %129 = math.rsqrt %128 : vector<8x1xf32>
    %130 = vector.broadcast %129 : vector<8x1xf32> to vector<8x32xf32>
    %131 = arith.mulf %121, %130 : vector<8x32xf32>
    %132 = vector.broadcast %114 : vector<1x32xf32> to vector<8x32xf32>
    %133 = arith.mulf %131, %132 : vector<8x32xf32>
    %134 = vector.broadcast %115 : vector<1x32xf32> to vector<8x32xf32>
    %135 = arith.addf %133, %134 : vector<8x32xf32>
    %c0_71 = arith.constant 0 : index
    %c0_72 = arith.constant 0 : index
    %c0_73 = arith.constant 0 : index
    %136 = vector.load %arg18[%c0_71, %c0_72, %c0_73] : memref<1x8x32xf32, #tpu.memory_space<vmem>>, vector<1x8x32xf32>
    %137 = vector.shape_cast %136 : vector<1x8x32xf32> to vector<8x32xf32>
    %138 = vector.shape_cast %135 : vector<8x32xf32> to vector<1x8x32xf32>
    tpu.vector_store %arg18[%c0_71, %c0_72, %c0_73], %138 {strides = array<i32>} : memref<1x8x32xf32, #tpu.memory_space<vmem>>, vector<1x8x32xf32>,
    return
  }
  func.func @transform_0(%arg0: i32, %arg1: i32) -> (i32, i32, i32) {
    %c0_i32 = arith.constant 0 : i32
    %c0_i32_0 = arith.constant 0 : i32
    return %arg0, %arg1, %c0_i32 : i32, i32, i32
  }
  func.func @transform_1(%arg0: i32, %arg1: i32) -> (i32, i32, i32) {
    %c0_i32 = arith.constant 0 : i32
    %c0_i32_0 = arith.constant 0 : i32
    %c0_i32_1 = arith.constant 0 : i32
    return %arg0, %c0_i32, %c0_i32_0 : i32, i32, i32
  }
  func.func @transform_2(%arg0: i32, %arg1: i32) -> (i32, i32) {
    %c0_i32 = arith.constant 0 : i32
    %c0_i32_0 = arith.constant 0 : i32
    %c0_i32_1 = arith.constant 0 : i32
    return %c0_i32, %c0_i32_0 : i32, i32
  }
  func.func @transform_3(%arg0: i32, %arg1: i32) -> (i32, i32) {
    %c0_i32 = arith.constant 0 : i32
    %c0_i32_0 = arith.constant 0 : i32
    %c0_i32_1 = arith.constant 0 : i32
    return %c0_i32, %c0_i32_0 : i32, i32
  }
  func.func @transform_4(%arg0: i32, %arg1: i32) -> (i32, i32) {
    %c0_i32 = arith.constant 0 : i32
    %c0_i32_0 = arith.constant 0 : i32
    %c0_i32_1 = arith.constant 0 : i32
    return %c0_i32, %c0_i32_0 : i32, i32
  }
  func.func @transform_5(%arg0: i32, %arg1: i32) -> (i32, i32) {
    %c0_i32 = arith.constant 0 : i32
    %c0_i32_0 = arith.constant 0 : i32
    %c0_i32_1 = arith.constant 0 : i32
    return %c0_i32, %c0_i32_0 : i32, i32
  }
  func.func @transform_6(%arg0: i32, %arg1: i32) -> (i32, i32) {
    %c0_i32 = arith.constant 0 : i32
    %c0_i32_0 = arith.constant 0 : i32
    %c0_i32_1 = arith.constant 0 : i32
    return %c0_i32, %c0_i32_0 : i32, i32
  }
  func.func @transform_7(%arg0: i32, %arg1: i32) -> (i32, i32) {
    %c0_i32 = arith.constant 0 : i32
    %c0_i32_0 = arith.constant 0 : i32
    %c0_i32_1 = arith.constant 0 : i32
    return %c0_i32, %c0_i32_0 : i32, i32
  }
  func.func @transform_8(%arg0: i32, %arg1: i32) -> (i32, i32) {
    %c0_i32 = arith.constant 0 : i32
    %c0_i32_0 = arith.constant 0 : i32
    %c0_i32_1 = arith.constant 0 : i32
    return %c0_i32, %c0_i32_0 : i32, i32
  }
  func.func @transform_9(%arg0: i32, %arg1: i32) -> (i32, i32) {
    %c0_i32 = arith.constant 0 : i32
    %c0_i32_0 = arith.constant 0 : i32
    %c0_i32_1 = arith.constant 0 : i32
    return %c0_i32, %c0_i32_0 : i32, i32
  }
  func.func @transform_10(%arg0: i32, %arg1: i32) -> (i32, i32) {
    %c0_i32 = arith.constant 0 : i32
    %c0_i32_0 = arith.constant 0 : i32
    %c0_i32_1 = arith.constant 0 : i32
    return %c0_i32, %c0_i32_0 : i32, i32
  }
  func.func @transform_11(%arg0: i32, %arg1: i32) -> (i32, i32) {
    %c0_i32 = arith.constant 0 : i32
    %c0_i32_0 = arith.constant 0 : i32
    %c0_i32_1 = arith.constant 0 : i32
    return %c0_i32, %c0_i32_0 : i32, i32
  }
  func.func @transform_12(%arg0: i32, %arg1: i32) -> (i32, i32) {
    %c0_i32 = arith.constant 0 : i32
    %c0_i32_0 = arith.constant 0 : i32
    %c0_i32_1 = arith.constant 0 : i32
    return %c0_i32, %c0_i32_0 : i32, i32
  }
  func.func @transform_13(%arg0: i32, %arg1: i32) -> (i32, i32) {
    %c0_i32 = arith.constant 0 : i32
    %c0_i32_0 = arith.constant 0 : i32
    %c0_i32_1 = arith.constant 0 : i32
    return %c0_i32, %c0_i32_0 : i32, i32
  }
  func.func @transform_14(%arg0: i32, %arg1: i32) -> (i32, i32) {
    %c0_i32 = arith.constant 0 : i32
    %c0_i32_0 = arith.constant 0 : i32
    %c0_i32_1 = arith.constant 0 : i32
    return %c0_i32, %c0_i32_0 : i32, i32
  }
  func.func @transform_15(%arg0: i32, %arg1: i32) -> (i32, i32) {
    %c0_i32 = arith.constant 0 : i32
    %c0_i32_0 = arith.constant 0 : i32
    %c0_i32_1 = arith.constant 0 : i32
    return %c0_i32, %c0_i32_0 : i32, i32
  }
  func.func @transform_16(%arg0: i32, %arg1: i32) -> (i32, i32, i32) {
    %c0_i32 = arith.constant 0 : i32
    %c0_i32_0 = arith.constant 0 : i32
    return %arg0, %arg1, %c0_i32 : i32, i32, i32
  }
}

</mosaic_0001>

<llo_original>
// kernel: tpu_custom_call.1
$region0: #{tpu_custom_call.1}
  #allocation0 [shape = 'u32[]', space=smem, size = 0x4, offset = 0x4, fixed_abs, tag = 'smem constant byte address 0x4 - core index']
  #allocation1 [shape = 'u32[144,128]{1,0:T(1,128)}', space=vmem, size = 0x12000, scoped, tag = 'internal scratch']
  #allocation2 [shape = 'f32[8,32]{1,0:T(8,128)}', space=vmem, size = 0x1000, scoped, tag = 'scratch operand']
  #allocation3 [shape = 'f32[8,32]{1,0:T(8,128)}', space=vmem, size = 0x1000, scoped, tag = 'scratch operand']
  %s0 = inlined_call_operand.hbm [shape: f32[2,8,32], index: 0, kind: input, shape index: {}]
  %s1 = inlined_call_operand.hbm [shape: f32[2,8,32], index: 1, kind: input, shape index: {}]
  %s2 = inlined_call_operand.hbm [shape: f32[32,32], index: 2, kind: input, shape index: {}]
  %s3 = inlined_call_operand.hbm [shape: f32[1,32], index: 3, kind: input, shape index: {}]
  %s4 = inlined_call_operand.hbm [shape: f32[32,64], index: 4, kind: input, shape index: {}]
  %s5 = inlined_call_operand.hbm [shape: f32[1,64], index: 5, kind: input, shape index: {}]
  %s6 = inlined_call_operand.hbm [shape: f32[32,32], index: 6, kind: input, shape index: {}]
  %s7 = inlined_call_operand.hbm [shape: f32[1,32], index: 7, kind: input, shape index: {}]
  %s8 = inlined_call_operand.hbm [shape: f32[1,32], index: 8, kind: input, shape index: {}]
  %s9 = inlined_call_operand.hbm [shape: f32[1,32], index: 9, kind: input, shape index: {}]
  %s10 = inlined_call_operand.hbm [shape: f32[32,64], index: 10, kind: input, shape index: {}]
  %s11 = inlined_call_operand.hbm [shape: f32[1,64], index: 11, kind: input, shape index: {}]
  %s12 = inlined_call_operand.hbm [shape: f32[64,32], index: 12, kind: input, shape index: {}]
  %s13 = inlined_call_operand.hbm [shape: f32[1,32], index: 13, kind: input, shape index: {}]
  %s14 = inlined_call_operand.hbm [shape: f32[1,32], index: 14, kind: input, shape index: {}]
  %s15 = inlined_call_operand.hbm [shape: f32[1,32], index: 15, kind: input, shape index: {}]
  %s16 = inlined_call_operand.hbm [shape: f32[2,8,32], index: 16, kind: output, shape index: {}]
  %s17 = sld [smem:[#allocation0]]
  $region165: #{tpu_custom_call.1} parent=0
    _
  %s19 = ssub.s32 1, %s17
  %s20 = scalar_select 0, %s19, %s17
  $region1: #{tpu_custom_call.1} parent=0
    #allocation4 [shape = 'u8[8192]{0}', space=vmem, size = 0x2000, scoped, tag = 'input window, operand 0']
    #allocation5 [shape = 's32[2]{0}', space=sflag, size = 0x8, scoped, tag = 'scoped memory for tpu_custom_call.1']
    #allocation6 [shape = 's32[2]{0}', space=sflag, size = 0x8, scoped, tag = 'scoped memory for tpu_custom_call.1']
    #allocation7 [shape = 'u8[8192]{0}', space=vmem, size = 0x2000, scoped, tag = 'input window, operand 1']
    #allocation8 [shape = 's32[2]{0}', space=sflag, size = 0x8, scoped, tag = 'scoped memory for tpu_custom_call.1']
    #allocation9 [shape = 'u8[16384]{0}', space=vmem, size = 0x4000, scoped, tag = 'input window, operand 2, single buffered']
    #allocation10 [shape = 'u8[512]{0}', space=vmem, size = 0x400, scoped, tag = 'input window, operand 3, single buffered']
    #allocation11 [shape = 's32[1]{0}', space=sflag, size = 0x4, scoped, tag = 'scoped memory for tpu_custom_call.1']
    #allocation12 [shape = 'u8[16384]{0}', space=vmem, size = 0x4000, scoped, tag = 'input window, operand 4, single buffered']
    #allocation13 [shape = 'u8[512]{0}', space=vmem, size = 0x400, scoped, tag = 'input window, operand 5, single buffered']
    #allocation14 [shape = 's32[1]{0}', space=sflag, size = 0x4, scoped, tag = 'scoped memory for tpu_custom_call.1']
    #allocation15 [shape = 'u8[16384]{0}', space=vmem, size = 0x4000, scoped, tag = 'input window, operand 6, single buffered']
    #allocation16 [shape = 'u8[512]{0}', space=vmem, size = 0x400, scoped, tag = 'input window, operand 7, single buffered']
    #allocation17 [shape = 's32[1]{0}', space=sflag, size = 0x4, scoped, tag = 'scoped memory for tpu_custom_call.1']
    #allocation18 [shape = 'u8[512]{0}', space=vmem, size = 0x400, scoped, tag = 'input window, operand 8, single buffered']
    #allocation19 [shape = 'u8[512]{0}', space=vmem, size = 0x400, scoped, tag = 'input window, operand 9, single buffered']
    #allocation20 [shape = 's32[1]{0}', space=sflag, size = 0x4, scoped, tag = 'scoped memory for tpu_custom_call.1']
    #allocation21 [shape = 'u8[16384]{0}', space=vmem, size = 0x4000, scoped, tag = 'input window, operand 10, single buffered']
    #allocation22 [shape = 'u8[512]{0}', space=vmem, size = 0x400, scoped, tag = 'input window, operand 11, single buffered']
    #allocation23 [shape = 's32[1]{0}', space=sflag, size = 0x4, scoped, tag = 'scoped memory for tpu_custom_call.1']
    #allocation24 [shape = 'u8[32768]{0}', space=vmem, size = 0x8000, scoped, tag = 'input window, operand 12, single buffered']
    #allocation25 [shape = 'u8[512]{0}', space=vmem, size = 0x400, scoped, tag = 'input window, operand 13, single buffered']
    #allocation26 [shape = 's32[1]{0}', space=sflag, size = 0x4, scoped, tag = 'scoped memory for tpu_custom_call.1']
    #allocation27 [shape = 'u8[512]{0}', space=vmem, size = 0x400, scoped, tag = 'input window, operand 14, single buffered']
    #allocation28 [shape = 'u8[512]{0}', space=vmem, size = 0x400, scoped, tag = 'input window, operand 15, single buffered']
    #allocation29 [shape = 's32[1]{0}', space=sflag, size = 0x4, scoped, tag = 'scoped memory for tpu_custom_call.1']
    #allocation30 [shape = 'u8[8192]{0}', space=vmem, size = 0x2000, scoped, tag = 'output window, operand 0']
    %21 = vsyncpa [#allocation5], 0
    %s22 = scalar_lea.sflag [#allocation5], 1
    %23 = vsyncpa %s22, 0
    %24 = vsyncpa [#allocation8], 0
    %s25 = scalar_lea.sflag [#allocation8], 1
    %26 = vsyncpa %s25, 0
    %27 = vsyncpa [#allocation11], 0
    %28 = vsyncpa [#allocation14], 0
    %29 = vsyncpa [#allocation17], 0
    %30 = vsyncpa [#allocation20], 0
    %31 = vsyncpa [#allocation23], 0
    %32 = vsyncpa [#allocation26], 0
    %33 = vsyncpa [#allocation29], 0
    %34 = vsyncpa [#allocation6], 0
    %s35 = scalar_lea.sflag [#allocation6], 1
    %36 = vsyncpa %s35, 0
    loop: start=0, step=1, limit=4
    $region2: #{tpu_custom_call.1} parent=1 // loop_pre_header
      _
    $region3: #{tpu_custom_call.1} parent=1 // loop_header
      %s38 = sphi 0, %s42
      %p39 = scmp.ge.s32.totalorder %s38, 4
      %s45 = sphi 0, %s57
      %s46 = sphi 0, %s53
      %s47 = sphi 0, %s45
      %s48 = sphi 0, %s46
      %s49 = sphi 0, %s47
      %s50 = sphi 0, %s48
      %s62 = sphi 0, %s64
      %s65 = sphi 0, %s62
      %s66 = sphi 0, %s65
      %s82 = sphi 0, %s66
      %s88 = sphi 0, %s90
      %s91 = sphi 0, %s88
      %s92 = sphi 0, %s91
      %s108 = sphi 0, %s92
      %s112 = sphi 0, %s112
      %s114 = sphi 0, %s112
      %s115 = sphi 0, %s114
      %s129 = sphi 0, %s115
      %s133 = sphi 0, %s133
      %s135 = sphi 0, %s133
      %s136 = sphi 0, %s135
      %s150 = sphi 0, %s136
      %s154 = sphi 0, %s154
      %s156 = sphi 0, %s154
      %s157 = sphi 0, %s156
      %s171 = sphi 0, %s157
      %s175 = sphi 0, %s175
      %s177 = sphi 0, %s175
      %s178 = sphi 0, %s177
      %s192 = sphi 0, %s178
      %s196 = sphi 0, %s196
      %s198 = sphi 0, %s196
      %s199 = sphi 0, %s198
      %s213 = sphi 0, %s199
      %s217 = sphi 0, %s217
      %s219 = sphi 0, %s217
      %s220 = sphi 0, %s219
      %s234 = sphi 0, %s220
      %s238 = sphi 0, %s238
      %s240 = sphi 0, %s238
      %s241 = sphi 0, %s240
      %s255 = sphi 0, %s241
      %s259 = sphi 0, %s259
      %s261 = sphi 0, %s259
      %s262 = sphi 0, %s261
      %s276 = sphi 0, %s262
      %s280 = sphi 0, %s280
      %s282 = sphi 0, %s280
      %s283 = sphi 0, %s282
      %s297 = sphi 0, %s283
      %s301 = sphi 0, %s301
      %s303 = sphi 0, %s301
      %s304 = sphi 0, %s303
      %s318 = sphi 0, %s304
      %s322 = sphi 0, %s322
      %s324 = sphi 0, %s322
      %s325 = sphi 0, %s324
      %s339 = sphi 0, %s325
      %s343 = sphi 0, %s343
      %s345 = sphi 0, %s343
      %s346 = sphi 0, %s345
      %s360 = sphi 0, %s346
      %s364 = sphi 0, %s364
      %s366 = sphi 0, %s364
      %s367 = sphi 0, %s366
      %s381 = sphi 0, %s367
      %s385 = sphi 0, %s385
      %s387 = sphi 0, %s385
      %s388 = sphi 0, %s387
      %s402 = sphi 0, %s388
      %s410 = sphi 0, %s412
      %s413 = sphi 0, %s410
      %s414 = sphi 0, %s413
      %s430 = sphi 0, %s414
    $region4: #{tpu_custom_call.1} parent=1 // loop_header_branch
      %41 = sbr.rel (%p39) target = $region8
    $region5: #{tpu_custom_call.1} parent=1 // loop_body
      %s43 = ssub.s32 %s38, 1
      %s44 = ssub.s32 %s38, 2
      %s51 = sadd.s32 1, %s46
      %p52 = scmp.ge.s32.totalorder %s51, 1
      %s53 = scalar_select %p52, 0, %s51
      %s54 = sadd.s32 1, %s45
      %s55 = scalar_select %p52, %s54, %s45
      %p56 = scmp.ge.s32.totalorder %s55, 2
      %s57 = scalar_select %p56, 0, %s55
      %s58 = ssub.s32 %s45, %s57
      %s59 = ssub.s32 %s46, %s53
      %s60 = sor.u32 %s58, %s59
      %p61 = scmp.eq.s32.totalorder %s60, 0
      %s63 = sadd.s32 %s62, 1
      %s64 = scalar_select %p61, %s62, %s63
      %p67 = pneg %p61
      %p68 = scmp.eq.s32.totalorder %s38, 1
      %p69 = por %p67, %p68
      %p70 = scmp.ne.s32.totalorder %s62, %s65
      %p71 = scmp.eq.s32.totalorder %s38, 0
      %p72 = por %p70, %p71
      %p73 = scmp.ne.s32.totalorder %s62, %s65
      %p74 = scmp.eq.s32.totalorder %s43, 1
      %p75 = por %p73, %p74
      %p76 = scmp.ne.s32.totalorder %s65, %s66
      %p77 = scmp.eq.s32.totalorder %s43, 0
      %p78 = por %p76, %p77
      %p79 = scmp.ne.s32.totalorder %s65, %s66
      %p80 = scmp.eq.s32.totalorder %s44, 1
      %p81 = por %p79, %p80
      %p83 = scmp.ne.s32.totalorder %s66, %s82
      %p84 = scmp.eq.s32.totalorder %s44, 0
      %p85 = por %p83, %p84
      %s86 = ssub.s32 %s45, %s57
      %p87 = scmp.eq.s32.totalorder %s86, 0
      %s89 = sadd.s32 %s88, 1
      %s90 = scalar_select %p87, %s88, %s89
      %p93 = pneg %p87
      %p94 = scmp.eq.s32.totalorder %s38, 1
      %p95 = por %p93, %p94
      %p96 = scmp.ne.s32.totalorder %s88, %s91
      %p97 = scmp.eq.s32.totalorder %s38, 0
      %p98 = por %p96, %p97
      %p99 = scmp.ne.s32.totalorder %s88, %s91
      %p100 = scmp.eq.s32.totalorder %s43, 1
      %p101 = por %p99, %p100
      %p102 = scmp.ne.s32.totalorder %s91, %s92
      %p103 = scmp.eq.s32.totalorder %s43, 0
      %p104 = por %p102, %p103
      %p105 = scmp.ne.s32.totalorder %s91, %s92
      %p106 = scmp.eq.s32.totalorder %s44, 1
      %p107 = por %p105, %p106
      %p109 = scmp.ne.s32.totalorder %s92, %s108
      %p110 = scmp.eq.s32.totalorder %s44, 0
      %p111 = por %p109, %p110
      %s113 = sadd.s32 %s112, 1
      %p116 = scmp.eq.s32.totalorder %s38, 1
      %p117 = scmp.ne.s32.totalorder %s112, %s114
      %p118 = scmp.eq.s32.totalorder %s38, 0
      %p119 = por %p117, %p118
      %p120 = scmp.ne.s32.totalorder %s112, %s114
      %p121 = scmp.eq.s32.totalorder %s43, 1
      %p122 = por %p120, %p121
      %p123 = scmp.ne.s32.totalorder %s114, %s115
      %p124 = scmp.eq.s32.totalorder %s43, 0
      %p125 = por %p123, %p124
      %p126 = scmp.ne.s32.totalorder %s114, %s115
      %p127 = scmp.eq.s32.totalorder %s44, 1
      %p128 = por %p126, %p127
      %p130 = scmp.ne.s32.totalorder %s115, %s129
      %p131 = scmp.eq.s32.totalorder %s44, 0
      %p132 = por %p130, %p131
      %s134 = sadd.s32 %s133, 1
      %p137 = scmp.eq.s32.totalorder %s38, 1
      %p138 = scmp.ne.s32.totalorder %s133, %s135
      %p139 = scmp.eq.s32.totalorder %s38, 0
      %p140 = por %p138, %p139
      %p141 = scmp.ne.s32.totalorder %s133, %s135
      %p142 = scmp.eq.s32.totalorder %s43, 1
      %p143 = por %p141, %p142
      %p144 = scmp.ne.s32.totalorder %s135, %s136
      %p145 = scmp.eq.s32.totalorder %s43, 0
      %p146 = por %p144, %p145
      %p147 = scmp.ne.s32.totalorder %s135, %s136
      %p148 = scmp.eq.s32.totalorder %s44, 1
      %p149 = por %p147, %p148
      %p151 = scmp.ne.s32.totalorder %s136, %s150
      %p152 = scmp.eq.s32.totalorder %s44, 0
      %p153 = por %p151, %p152
      %s155 = sadd.s32 %s154, 1
      %p158 = scmp.eq.s32.totalorder %s38, 1
      %p159 = scmp.ne.s32.totalorder %s154, %s156
      %p160 = scmp.eq.s32.totalorder %s38, 0
      %p161 = por %p159, %p160
      %p162 = scmp.ne.s32.totalorder %s154, %s156
      %p163 = scmp.eq.s32.totalorder %s43, 1
      %p164 = por %p162, %p163
      %p165 = scmp.ne.s32.totalorder %s156, %s157
      %p166 = scmp.eq.s32.totalorder %s43, 0
      %p167 = por %p165, %p166
      %p168 = scmp.ne.s32.totalorder %s156, %s157
      %p169 = scmp.eq.s32.totalorder %s44, 1
      %p170 = por %p168, %p169
      %p172 = scmp.ne.s32.totalorder %s157, %s171
      %p173 = scmp.eq.s32.totalorder %s44, 0
      %p174 = por %p172, %p173
      %s176 = sadd.s32 %s175, 1
      %p179 = scmp.eq.s32.totalorder %s38, 1
      %p180 = scmp.ne.s32.totalorder %s175, %s177
      %p181 = scmp.eq.s32.totalorder %s38, 0
      %p182 = por %p180, %p181
      %p183 = scmp.ne.s32.totalorder %s175, %s177
      %p184 = scmp.eq.s32.totalorder %s43, 1
      %p185 = por %p183, %p184
      %p186 = scmp.ne.s32.totalorder %s177, %s178
      %p187 = scmp.eq.s32.totalorder %s43, 0
      %p188 = por %p186, %p187
      %p189 = scmp.ne.s32.totalorder %s177, %s178
      %p190 = scmp.eq.s32.totalorder %s44, 1
      %p191 = por %p189, %p190
      %p193 = scmp.ne.s32.totalorder %s178, %s192
      %p194 = scmp.eq.s32.totalorder %s44, 0
      %p195 = por %p193, %p194
      %s197 = sadd.s32 %s196, 1
      %p200 = scmp.eq.s32.totalorder %s38, 1
      %p201 = scmp.ne.s32.totalorder %s196, %s198
      %p202 = scmp.eq.s32.totalorder %s38, 0
      %p203 = por %p201, %p202
      %p204 = scmp.ne.s32.totalorder %s196, %s198
      %p205 = scmp.eq.s32.totalorder %s43, 1
      %p206 = por %p204, %p205
      %p207 = scmp.ne.s32.totalorder %s198, %s199
      %p208 = scmp.eq.s32.totalorder %s43, 0
      %p209 = por %p207, %p208
      %p210 = scmp.ne.s32.totalorder %s198, %s199
      %p211 = scmp.eq.s32.totalorder %s44, 1
      %p212 = por %p210, %p211
      %p214 = scmp.ne.s32.totalorder %s199, %s213
      %p215 = scmp.eq.s32.totalorder %s44, 0
      %p216 = por %p214, %p215
      %s218 = sadd.s32 %s217, 1
      %p221 = scmp.eq.s32.totalorder %s38, 1
      %p222 = scmp.ne.s32.totalorder %s217, %s219
      %p223 = scmp.eq.s32.totalorder %s38, 0
      %p224 = por %p222, %p223
      %p225 = scmp.ne.s32.totalorder %s217, %s219
      %p226 = scmp.eq.s32.totalorder %s43, 1
      %p227 = por %p225, %p226
      %p228 = scmp.ne.s32.totalorder %s219, %s220
      %p229 = scmp.eq.s32.totalorder %s43, 0
      %p230 = por %p228, %p229
      %p231 = scmp.ne.s32.totalorder %s219, %s220
      %p232 = scmp.eq.s32.totalorder %s44, 1
      %p233 = por %p231, %p232
      %p235 = scmp.ne.s32.totalorder %s220, %s234
      %p236 = scmp.eq.s32.totalorder %s44, 0
      %p237 = por %p235, %p236
      %s239 = sadd.s32 %s238, 1
      %p242 = scmp.eq.s32.totalorder %s38, 1
      %p243 = scmp.ne.s32.totalorder %s238, %s240
      %p244 = scmp.eq.s32.totalorder %s38, 0
      %p245 = por %p243, %p244
      %p246 = scmp.ne.s32.totalorder %s238, %s240
      %p247 = scmp.eq.s32.totalorder %s43, 1
      %p248 = por %p246, %p247
      %p249 = scmp.ne.s32.totalorder %s240, %s241
      %p250 = scmp.eq.s32.totalorder %s43, 0
      %p251 = por %p249, %p250
      %p252 = scmp.ne.s32.totalorder %s240, %s241
      %p253 = scmp.eq.s32.totalorder %s44, 1
      %p254 = por %p252, %p253
      %p256 = scmp.ne.s32.totalorder %s241, %s255
      %p257 = scmp.eq.s32.totalorder %s44, 0
      %p258 = por %p256, %p257
      %s260 = sadd.s32 %s259, 1
      %p263 = scmp.eq.s32.totalorder %s38, 1
      %p264 = scmp.ne.s32.totalorder %s259, %s261
      %p265 = scmp.eq.s32.totalorder %s38, 0
      %p266 = por %p264, %p265
      %p267 = scmp.ne.s32.totalorder %s259, %s261
      %p268 = scmp.eq.s32.totalorder %s43, 1
      %p269 = por %p267, %p268
      %p270 = scmp.ne.s32.totalorder %s261, %s262
      %p271 = scmp.eq.s32.totalorder %s43, 0
      %p272 = por %p270, %p271
      %p273 = scmp.ne.s32.totalorder %s261, %s262
      %p274 = scmp.eq.s32.totalorder %s44, 1
      %p275 = por %p273, %p274
      %p277 = scmp.ne.s32.totalorder %s262, %s276
      %p278 = scmp.eq.s32.totalorder %s44, 0
      %p279 = por %p277, %p278
      %s281 = sadd.s32 %s280, 1
      %p284 = scmp.eq.s32.totalorder %s38, 1
      %p285 = scmp.ne.s32.totalorder %s280, %s282
      %p286 = scmp.eq.s32.totalorder %s38, 0
      %p287 = por %p285, %p286
      %p288 = scmp.ne.s32.totalorder %s280, %s282
      %p289 = scmp.eq.s32.totalorder %s43, 1
      %p290 = por %p288, %p289
      %p291 = scmp.ne.s32.totalorder %s282, %s283
      %p292 = scmp.eq.s32.totalorder %s43, 0
      %p293 = por %p291, %p292
      %p294 = scmp.ne.s32.totalorder %s282, %s283
      %p295 = scmp.eq.s32.totalorder %s44, 1
      %p296 = por %p294, %p295
      %p298 = scmp.ne.s32.totalorder %s283, %s297
      %p299 = scmp.eq.s32.totalorder %s44, 0
      %p300 = por %p298, %p299
      %s302 = sadd.s32 %s301, 1
      %p305 = scmp.eq.s32.totalorder %s38, 1
      %p306 = scmp.ne.s32.totalorder %s301, %s303
      %p307 = scmp.eq.s32.totalorder %s38, 0
      %p308 = por %p306, %p307
      %p309 = scmp.ne.s32.totalorder %s301, %s303
      %p310 = scmp.eq.s32.totalorder %s43, 1
      %p311 = por %p309, %p310
      %p312 = scmp.ne.s32.totalorder %s303, %s304
      %p313 = scmp.eq.s32.totalorder %s43, 0
      %p314 = por %p312, %p313
      %p315 = scmp.ne.s32.totalorder %s303, %s304
      %p316 = scmp.eq.s32.totalorder %s44, 1
      %p317 = por %p315, %p316
      %p319 = scmp.ne.s32.totalorder %s304, %s318
      %p320 = scmp.eq.s32.totalorder %s44, 0
      %p321 = por %p319, %p320
      %s323 = sadd.s32 %s322, 1
      %p326 = scmp.eq.s32.totalorder %s38, 1
      %p327 = scmp.ne.s32.totalorder %s322, %s324
      %p328 = scmp.eq.s32.totalorder %s38, 0
      %p329 = por %p327, %p328
      %p330 = scmp.ne.s32.totalorder %s322, %s324
      %p331 = scmp.eq.s32.totalorder %s43, 1
      %p332 = por %p330, %p331
      %p333 = scmp.ne.s32.totalorder %s324, %s325
      %p334 = scmp.eq.s32.totalorder %s43, 0
      %p335 = por %p333, %p334
      %p336 = scmp.ne.s32.totalorder %s324, %s325
      %p337 = scmp.eq.s32.totalorder %s44, 1
      %p338 = por %p336, %p337
      %p340 = scmp.ne.s32.totalorder %s325, %s339
      %p341 = scmp.eq.s32.totalorder %s44, 0
      %p342 = por %p340, %p341
      %s344 = sadd.s32 %s343, 1
      %p347 = scmp.eq.s32.totalorder %s38, 1
      %p348 = scmp.ne.s32.totalorder %s343, %s345
      %p349 = scmp.eq.s32.totalorder %s38, 0
      %p350 = por %p348, %p349
      %p351 = scmp.ne.s32.totalorder %s343, %s345
      %p352 = scmp.eq.s32.totalorder %s43, 1
      %p353 = por %p351, %p352
      %p354 = scmp.ne.s32.totalorder %s345, %s346
      %p355 = scmp.eq.s32.totalorder %s43, 0
      %p356 = por %p354, %p355
      %p357 = scmp.ne.s32.totalorder %s345, %s346
      %p358 = scmp.eq.s32.totalorder %s44, 1
      %p359 = por %p357, %p358
      %p361 = scmp.ne.s32.totalorder %s346, %s360
      %p362 = scmp.eq.s32.totalorder %s44, 0
      %p363 = por %p361, %p362
      %s365 = sadd.s32 %s364, 1
      %p368 = scmp.eq.s32.totalorder %s38, 1
      %p369 = scmp.ne.s32.totalorder %s364, %s366
      %p370 = scmp.eq.s32.totalorder %s38, 0
      %p371 = por %p369, %p370
      %p372 = scmp.ne.s32.totalorder %s364, %s366
      %p373 = scmp.eq.s32.totalorder %s43, 1
      %p374 = por %p372, %p373
      %p375 = scmp.ne.s32.totalorder %s366, %s367
      %p376 = scmp.eq.s32.totalorder %s43, 0
      %p377 = por %p375, %p376
      %p378 = scmp.ne.s32.totalorder %s366, %s367
      %p379 = scmp.eq.s32.totalorder %s44, 1
      %p380 = por %p378, %p379
      %p382 = scmp.ne.s32.totalorder %s367, %s381
      %p383 = scmp.eq.s32.totalorder %s44, 0
      %p384 = por %p382, %p383
      %s386 = sadd.s32 %s385, 1
      %p389 = scmp.eq.s32.totalorder %s38, 1
      %p390 = scmp.ne.s32.totalorder %s385, %s387
      %p391 = scmp.eq.s32.totalorder %s38, 0
      %p392 = por %p390, %p391
      %p393 = scmp.ne.s32.totalorder %s385, %s387
      %p394 = scmp.eq.s32.totalorder %s43, 1
      %p395 = por %p393, %p394
      %p396 = scmp.ne.s32.totalorder %s387, %s388
      %p397 = scmp.eq.s32.totalorder %s43, 0
      %p398 = por %p396, %p397
      %p399 = scmp.ne.s32.totalorder %s387, %s388
      %p400 = scmp.eq.s32.totalorder %s44, 1
      %p401 = por %p399, %p400
      %p403 = scmp.ne.s32.totalorder %s388, %s402
      %p404 = scmp.eq.s32.totalorder %s44, 0
      %p405 = por %p403, %p404
      %s406 = ssub.s32 %s45, %s57
      %s407 = ssub.s32 %s46, %s53
      %s408 = sor.u32 %s406, %s407
      %p409 = scmp.eq.s32.totalorder %s408, 0
      %s411 = sadd.s32 %s410, 1
      %s412 = scalar_select %p409, %s410, %s411
      %p415 = pneg %p409
      %p416 = scmp.eq.s32.totalorder %s38, 1
      %p417 = por %p415, %p416
      %p418 = scmp.ne.s32.totalorder %s410, %s413
      %p419 = scmp.eq.s32.totalorder %s38, 0
      %p420 = por %p418, %p419
      %p421 = scmp.ne.s32.totalorder %s410, %s413
      %p422 = scmp.eq.s32.totalorder %s43, 1
      %p423 = por %p421, %p422
      %p424 = scmp.ne.s32.totalorder %s413, %s414
      %p425 = scmp.eq.s32.totalorder %s43, 0
      %p426 = por %p424, %p425
      %p427 = scmp.ne.s32.totalorder %s413, %s414
      %p428 = scmp.eq.s32.totalorder %s44, 1
      %p429 = por %p427, %p428
      %p431 = scmp.ne.s32.totalorder %s414, %s430
      %p432 = scmp.eq.s32.totalorder %s44, 0
      %p433 = por %p431, %p432
      %p434 = scmp.le.s32.totalorder 1, %s38
      %p435 = scmp.lt.s32.totalorder %s38, 3
      %p436 = pnand %p434, %p435
      %p437 = pneg %p436
      // Predicated region
      $region9: #{tpu_custom_call.1} parent=5 // pred_check
        _
      $region10: #{tpu_custom_call.1} parent=5 // pred_check_branch
        %439 = sbr.rel (%p436) target = $region12
      $region11: #{tpu_custom_call.1} parent=5 // pred_region
        %s440 = ssub.s32 %s38, 1
        // Predicated region
        $region13: #{tpu_custom_call.1} parent=11 // pred_check
          %p441 = pneg %p125
        $region14: #{tpu_custom_call.1} parent=11 // pred_check_branch
          %443 = sbr.rel (%p441) target = $region16
        $region15: #{tpu_custom_call.1} parent=11 // pred_region
          %s445 = ssub.s32 512, 512
          %446 = vsyncadd [#allocation8], %s445
          %s447 = sshll.u32 [#allocation9], 4
          %s448 = int_to_ptr.vmem [resolvable:$true] %s447
          %453 = dma.hbm_to_vmem [thread:$0]  %s2, 512, %s448, [#allocation8], 128, 128, 8
        $region16: #{tpu_custom_call.1} parent=11 // pred_fallthru
          _
        // Predicated region
        $region17: #{tpu_custom_call.1} parent=11 // pred_check
          %p454 = pneg %p146
        $region18: #{tpu_custom_call.1} parent=11 // pred_check_branch
          %456 = sbr.rel (%p454) target = $region20
        $region19: #{tpu_custom_call.1} parent=11 // pred_region
          %s458 = ssub.s32 16, 16
          %459 = vsyncadd [#allocation11], %s458
          %s461 = sshll.u32 [#allocation10], 4
          %s462 = int_to_ptr.vmem [resolvable:$true] %s461
          %464 = dma.hbm_to_vmem [thread:$0]  %s3, 16, %s462, [#allocation11]
        $region20: #{tpu_custom_call.1} parent=11 // pred_fallthru
          _
        // Predicated region
        $region21: #{tpu_custom_call.1} parent=11 // pred_check
          %p465 = pneg %p167
        $region22: #{tpu_custom_call.1} parent=11 // pred_check_branch
          %467 = sbr.rel (%p465) target = $region24
        $region23: #{tpu_custom_call.1} parent=11 // pred_region
          %s469 = ssub.s32 512, 512
          %470 = vsyncadd [#allocation11], %s469
          %s471 = sshll.u32 [#allocation12], 4
          %s472 = int_to_ptr.vmem [resolvable:$true] %s471
          %477 = dma.hbm_to_vmem [thread:$0]  %s4, 512, %s472, [#allocation11], 128, 128, 8
        $region24: #{tpu_custom_call.1} parent=11 // pred_fallthru
          _
        // Predicated region
        $region25: #{tpu_custom_call.1} parent=11 // pred_check
          %p478 = pneg %p188
        $region26: #{tpu_custom_call.1} parent=11 // pred_check_branch
          %480 = sbr.rel (%p478) target = $region28
        $region27: #{tpu_custom_call.1} parent=11 // pred_region
          %s482 = ssub.s32 16, 16
          %483 = vsyncadd [#allocation14], %s482
          %s485 = sshll.u32 [#allocation13], 4
          %s486 = int_to_ptr.vmem [resolvable:$true] %s485
          %488 = dma.hbm_to_vmem [thread:$0]  %s5, 16, %s486, [#allocation14]
        $region28: #{tpu_custom_call.1} parent=11 // pred_fallthru
          _
        // Predicated region
        $region29: #{tpu_custom_call.1} parent=11 // pred_check
          %p489 = pneg %p209
        $region30: #{tpu_custom_call.1} parent=11 // pred_check_branch
          %491 = sbr.rel (%p489) target = $region32
        $region31: #{tpu_custom_call.1} parent=11 // pred_region
          %s493 = ssub.s32 512, 512
          %494 = vsyncadd [#allocation14], %s493
          %s495 = sshll.u32 [#allocation15], 4
          %s496 = int_to_ptr.vmem [resolvable:$true] %s495
          %501 = dma.hbm_to_vmem [thread:$0]  %s6, 512, %s496, [#allocation14], 128, 128, 8
        $region32: #{tpu_custom_call.1} parent=11 // pred_fallthru
          _
        // Predicated region
        $region33: #{tpu_custom_call.1} parent=11 // pred_check
          %p502 = pneg %p230
        $region34: #{tpu_custom_call.1} parent=11 // pred_check_branch
          %504 = sbr.rel (%p502) target = $region36
        $region35: #{tpu_custom_call.1} parent=11 // pred_region
          %s506 = ssub.s32 16, 16
          %507 = vsyncadd [#allocation17], %s506
          %s509 = sshll.u32 [#allocation16], 4
          %s510 = int_to_ptr.vmem [resolvable:$true] %s509
          %512 = dma.hbm_to_vmem [thread:$0]  %s7, 16, %s510, [#allocation17]
        $region36: #{tpu_custom_call.1} parent=11 // pred_fallthru
          _
        // Predicated region
        $region37: #{tpu_custom_call.1} parent=11 // pred_check
          %p513 = pneg %p251
        $region38: #{tpu_custom_call.1} parent=11 // pred_check_branch
          %515 = sbr.rel (%p513) target = $region40
        $region39: #{tpu_custom_call.1} parent=11 // pred_region
          %s517 = ssub.s32 16, 16
          %518 = vsyncadd [#allocation17], %s517
          %s520 = sshll.u32 [#allocation18], 4
          %s521 = int_to_ptr.vmem [resolvable:$true] %s520
          %523 = dma.hbm_to_vmem [thread:$0]  %s8, 16, %s521, [#allocation17]
        $region40: #{tpu_custom_call.1} parent=11 // pred_fallthru
          _
        // Predicated region
        $region41: #{tpu_custom_call.1} parent=11 // pred_check
          %p524 = pneg %p272
        $region42: #{tpu_custom_call.1} parent=11 // pred_check_branch
          %526 = sbr.rel (%p524) target = $region44
        $region43: #{tpu_custom_call.1} parent=11 // pred_region
          %s528 = ssub.s32 16, 16
          %529 = vsyncadd [#allocation20], %s528
          %s531 = sshll.u32 [#allocation19], 4
          %s532 = int_to_ptr.vmem [resolvable:$true] %s531
          %534 = dma.hbm_to_vmem [thread:$0]  %s9, 16, %s532, [#allocation20]
        $region44: #{tpu_custom_call.1} parent=11 // pred_fallthru
          _
        // Predicated region
        $region45: #{tpu_custom_call.1} parent=11 // pred_check
          %p535 = pneg %p293
        $region46: #{tpu_custom_call.1} parent=11 // pred_check_branch
          %537 = sbr.rel (%p535) target = $region48
        $region47: #{tpu_custom_call.1} parent=11 // pred_region
          %s539 = ssub.s32 512, 512
          %540 = vsyncadd [#allocation20], %s539
          %s541 = sshll.u32 [#allocation21], 4
          %s542 = int_to_ptr.vmem [resolvable:$true] %s541
          %547 = dma.hbm_to_vmem [thread:$0]  %s10, 512, %s542, [#allocation20], 128, 128, 8
        $region48: #{tpu_custom_call.1} parent=11 // pred_fallthru
          _
        // Predicated region
        $region49: #{tpu_custom_call.1} parent=11 // pred_check
          %p548 = pneg %p314
        $region50: #{tpu_custom_call.1} parent=11 // pred_check_branch
          %550 = sbr.rel (%p548) target = $region52
        $region51: #{tpu_custom_call.1} parent=11 // pred_region
          %s552 = ssub.s32 16, 16
          %553 = vsyncadd [#allocation23], %s552
          %s555 = sshll.u32 [#allocation22], 4
          %s556 = int_to_ptr.vmem [resolvable:$true] %s555
          %558 = dma.hbm_to_vmem [thread:$0]  %s11, 16, %s556, [#allocation23]
        $region52: #{tpu_custom_call.1} parent=11 // pred_fallthru
          _
        // Predicated region
        $region53: #{tpu_custom_call.1} parent=11 // pred_check
          %p559 = pneg %p335
        $region54: #{tpu_custom_call.1} parent=11 // pred_check_branch
          %561 = sbr.rel (%p559) target = $region56
        $region55: #{tpu_custom_call.1} parent=11 // pred_region
          %s563 = ssub.s32 1024, 1024
          %564 = vsyncadd [#allocation23], %s563
          %s565 = sshll.u32 [#allocation24], 4
          %s566 = int_to_ptr.vmem [resolvable:$true] %s565
          %571 = dma.hbm_to_vmem [thread:$0]  %s12, 1024, %s566, [#allocation23], 128, 128, 8
        $region56: #{tpu_custom_call.1} parent=11 // pred_fallthru
          _
        // Predicated region
        $region57: #{tpu_custom_call.1} parent=11 // pred_check
          %p572 = pneg %p356
        $region58: #{tpu_custom_call.1} parent=11 // pred_check_branch
          %574 = sbr.rel (%p572) target = $region60
        $region59: #{tpu_custom_call.1} parent=11 // pred_region
          %s576 = ssub.s32 16, 16
          %577 = vsyncadd [#allocation26], %s576
          %s579 = sshll.u32 [#allocation25], 4
          %s580 = int_to_ptr.vmem [resolvable:$true] %s579
          %582 = dma.hbm_to_vmem [thread:$0]  %s13, 16, %s580, [#allocation26]
        $region60: #{tpu_custom_call.1} parent=11 // pred_fallthru
          _
        // Predicated region
        $region61: #{tpu_custom_call.1} parent=11 // pred_check
          %p583 = pneg %p377
        $region62: #{tpu_custom_call.1} parent=11 // pred_check_branch
          %585 = sbr.rel (%p583) target = $region64
        $region63: #{tpu_custom_call.1} parent=11 // pred_region
          %s587 = ssub.s32 16, 16
          %588 = vsyncadd [#allocation26], %s587
          %s590 = sshll.u32 [#allocation27], 4
          %s591 = int_to_ptr.vmem [resolvable:$true] %s590
          %593 = dma.hbm_to_vmem [thread:$0]  %s14, 16, %s591, [#allocation26]
        $region64: #{tpu_custom_call.1} parent=11 // pred_fallthru
          _
        // Predicated region
        $region65: #{tpu_custom_call.1} parent=11 // pred_check
          %p594 = pneg %p398
        $region66: #{tpu_custom_call.1} parent=11 // pred_check_branch
          %596 = sbr.rel (%p594) target = $region68
        $region67: #{tpu_custom_call.1} parent=11 // pred_region
          %s598 = ssub.s32 16, 16
          %599 = vsyncadd [#allocation29], %s598
          %s601 = sshll.u32 [#allocation28], 4
          %s602 = int_to_ptr.vmem [resolvable:$true] %s601
          %604 = dma.hbm_to_vmem [thread:$0]  %s15, 16, %s602, [#allocation29]
        $region68: #{tpu_custom_call.1} parent=11 // pred_fallthru
          _
      $region12: #{tpu_custom_call.1} parent=5 // pred_fallthru
        _
      %p605 = scmp.lt.s32.totalorder %s38, 2
      // Predicated region
      $region69: #{tpu_custom_call.1} parent=5 // pred_check
        %p606 = pneg %p605
      $region70: #{tpu_custom_call.1} parent=5 // pred_check_branch
        %608 = sbr.rel (%p606) target = $region72
      $region71: #{tpu_custom_call.1} parent=5 // pred_region
        // Predicated region
        $region73: #{tpu_custom_call.1} parent=71 // pred_check
          %p609 = pneg %p72
        $region74: #{tpu_custom_call.1} parent=71 // pred_check_branch
          %611 = sbr.rel (%p609) target = $region76
        $region75: #{tpu_custom_call.1} parent=71 // pred_region
          %s612 = sand.u32 %s62, 1
          %s613 = scalar_lea.sflag [#allocation5], %s612
          %s614 = sand.u32 %s62, 1
          %s615 = smul.addr %s614, 8
          %s616 = scalar_lea.vmem [#allocation4], %s615
          %s618 = ssub.s32 128, 128
          %619 = vsyncadd %s613, %s618
          %s620 = sadd.s32 %s46, %s45
          %s621 = smul.addr %s620, 128
          %s622 = scalar_lea.hbm %s0, %s621
          %s624 = sshll.u32 %s616, 4
          %s625 = int_to_ptr.vmem [resolvable:$true] %s624
          %627 = dma.hbm_to_vmem [thread:$0]  %s622, 128, %s625, %s613
        $region76: #{tpu_custom_call.1} parent=71 // pred_fallthru
          _
        // Predicated region
        $region77: #{tpu_custom_call.1} parent=71 // pred_check
          %p628 = pneg %p98
        $region78: #{tpu_custom_call.1} parent=71 // pred_check_branch
          %630 = sbr.rel (%p628) target = $region80
        $region79: #{tpu_custom_call.1} parent=71 // pred_region
          %s631 = sand.u32 %s38, 1
          %s632 = scalar_lea.sflag [#allocation8], %s631
          %s633 = sand.u32 %s88, 1
          %s634 = smul.addr %s633, 8
          %s635 = scalar_lea.vmem [#allocation7], %s634
          %s637 = ssub.s32 128, 128
          %638 = vsyncadd %s632, %s637
          %s639 = smul.addr %s45, 128
          %s640 = scalar_lea.hbm %s1, %s639
          %s642 = sshll.u32 %s635, 4
          %s643 = int_to_ptr.vmem [resolvable:$true] %s642
          %645 = dma.hbm_to_vmem [thread:$0]  %s640, 128, %s643, %s632
        $region80: #{tpu_custom_call.1} parent=71 // pred_fallthru
          _
      $region72: #{tpu_custom_call.1} parent=5 // pred_fallthru
        _
      %p646 = scmp.le.s32.totalorder 1, %s38
      %p647 = scmp.lt.s32.totalorder %s38, 3
      %p648 = pnand %p646, %p647
      %p649 = pneg %p648
      // Predicated region
      $region81: #{tpu_custom_call.1} parent=5 // pred_check
        _
      $region82: #{tpu_custom_call.1} parent=5 // pred_check_branch
        %651 = sbr.rel (%p648) target = $region84
      $region83: #{tpu_custom_call.1} parent=5 // pred_region
        %s652 = ssub.s32 %s38, 1
        %s653 = sand.u32 %s65, 1
        %s654 = scalar_lea.sflag [#allocation5], %s653
        %s655 = sand.u32 %s65, 1
        %s656 = smul.addr %s655, 8
        %s657 = scalar_lea.vmem [#allocation4], %s656
        // Predicated region
        $region85: #{tpu_custom_call.1} parent=83 // pred_check
          %p658 = pneg %p78
        $region86: #{tpu_custom_call.1} parent=83 // pred_check_branch
          %660 = sbr.rel (%p658) target = $region88
        $region87: #{tpu_custom_call.1} parent=83 // pred_region
          %661 = dma.done %s654, 128
        $region88: #{tpu_custom_call.1} parent=83 // pred_fallthru
          _
        %s662 = sand.u32 %s43, 1
        %s663 = scalar_lea.sflag [#allocation8], %s662
        %s664 = sand.u32 %s91, 1
        %s665 = smul.addr %s664, 8
        %s666 = scalar_lea.vmem [#allocation7], %s665
        // Predicated region
        $region89: #{tpu_custom_call.1} parent=83 // pred_check
          %p667 = pneg %p104
        $region90: #{tpu_custom_call.1} parent=83 // pred_check_branch
          %669 = sbr.rel (%p667) target = $region92
        $region91: #{tpu_custom_call.1} parent=83 // pred_region
          %670 = dma.done %s663, 128
        $region92: #{tpu_custom_call.1} parent=83 // pred_fallthru
          _
        // Predicated region
        $region93: #{tpu_custom_call.1} parent=83 // pred_check
          %p671 = pneg %p125
        $region94: #{tpu_custom_call.1} parent=83 // pred_check_branch
          %673 = sbr.rel (%p671) target = $region96
        $region95: #{tpu_custom_call.1} parent=83 // pred_region
          %674 = dma.done [#allocation8], 512
        $region96: #{tpu_custom_call.1} parent=83 // pred_fallthru
          _
        // Predicated region
        $region97: #{tpu_custom_call.1} parent=83 // pred_check
          %p675 = pneg %p146
        $region98: #{tpu_custom_call.1} parent=83 // pred_check_branch
          %677 = sbr.rel (%p675) target = $region100
        $region99: #{tpu_custom_call.1} parent=83 // pred_region
          %678 = dma.done [#allocation11], 16
        $region100: #{tpu_custom_call.1} parent=83 // pred_fallthru
          _
        // Predicated region
        $region101: #{tpu_custom_call.1} parent=83 // pred_check
          %p679 = pneg %p167
        $region102: #{tpu_custom_call.1} parent=83 // pred_check_branch
          %681 = sbr.rel (%p679) target = $region104
        $region103: #{tpu_custom_call.1} parent=83 // pred_region
          %682 = dma.done [#allocation11], 512
        $region104: #{tpu_custom_call.1} parent=83 // pred_fallthru
          _
        // Predicated region
        $region105: #{tpu_custom_call.1} parent=83 // pred_check
          %p683 = pneg %p188
        $region106: #{tpu_custom_call.1} parent=83 // pred_check_branch
          %685 = sbr.rel (%p683) target = $region108
        $region107: #{tpu_custom_call.1} parent=83 // pred_region
          %686 = dma.done [#allocation14], 16
        $region108: #{tpu_custom_call.1} parent=83 // pred_fallthru
          _
        // Predicated region
        $region109: #{tpu_custom_call.1} parent=83 // pred_check
          %p687 = pneg %p209
        $region110: #{tpu_custom_call.1} parent=83 // pred_check_branch
          %689 = sbr.rel (%p687) target = $region112
        $region111: #{tpu_custom_call.1} parent=83 // pred_region
          %690 = dma.done [#allocation14], 512
        $region112: #{tpu_custom_call.1} parent=83 // pred_fallthru
          _
        // Predicated region
        $region113: #{tpu_custom_call.1} parent=83 // pred_check
          %p691 = pneg %p230
        $region114: #{tpu_custom_call.1} parent=83 // pred_check_branch
          %693 = sbr.rel (%p691) target = $region116
        $region115: #{tpu_custom_call.1} parent=83 // pred_region
          %694 = dma.done [#allocation17], 16
        $region116: #{tpu_custom_call.1} parent=83 // pred_fallthru
          _
        // Predicated region
        $region117: #{tpu_custom_call.1} parent=83 // pred_check
          %p695 = pneg %p251
        $region118: #{tpu_custom_call.1} parent=83 // pred_check_branch
          %697 = sbr.rel (%p695) target = $region120
        $region119: #{tpu_custom_call.1} parent=83 // pred_region
          %698 = dma.done [#allocation17], 16
        $region120: #{tpu_custom_call.1} parent=83 // pred_fallthru
          _
        // Predicated region
        $region121: #{tpu_custom_call.1} parent=83 // pred_check
          %p699 = pneg %p272
        $region122: #{tpu_custom_call.1} parent=83 // pred_check_branch
          %701 = sbr.rel (%p699) target = $region124
        $region123: #{tpu_custom_call.1} parent=83 // pred_region
          %702 = dma.done [#allocation20], 16
        $region124: #{tpu_custom_call.1} parent=83 // pred_fallthru
          _
        // Predicated region
        $region125: #{tpu_custom_call.1} parent=83 // pred_check
          %p703 = pneg %p293
        $region126: #{tpu_custom_call.1} parent=83 // pred_check_branch
          %705 = sbr.rel (%p703) target = $region128
        $region127: #{tpu_custom_call.1} parent=83 // pred_region
          %706 = dma.done [#allocation20], 512
        $region128: #{tpu_custom_call.1} parent=83 // pred_fallthru
          _
        // Predicated region
        $region129: #{tpu_custom_call.1} parent=83 // pred_check
          %p707 = pneg %p314
        $region130: #{tpu_custom_call.1} parent=83 // pred_check_branch
          %709 = sbr.rel (%p707) target = $region132
        $region131: #{tpu_custom_call.1} parent=83 // pred_region
          %710 = dma.done [#allocation23], 16
        $region132: #{tpu_custom_call.1} parent=83 // pred_fallthru
          _
        // Predicated region
        $region133: #{tpu_custom_call.1} parent=83 // pred_check
          %p711 = pneg %p335
        $region134: #{tpu_custom_call.1} parent=83 // pred_check_branch
          %713 = sbr.rel (%p711) target = $region136
        $region135: #{tpu_custom_call.1} parent=83 // pred_region
          %714 = dma.done [#allocation23], 1024
        $region136: #{tpu_custom_call.1} parent=83 // pred_fallthru
          _
        // Predicated region
        $region137: #{tpu_custom_call.1} parent=83 // pred_check
          %p715 = pneg %p356
        $region138: #{tpu_custom_call.1} parent=83 // pred_check_branch
          %717 = sbr.rel (%p715) target = $region140
        $region139: #{tpu_custom_call.1} parent=83 // pred_region
          %718 = dma.done [#allocation26], 16
        $region140: #{tpu_custom_call.1} parent=83 // pred_fallthru
          _
        // Predicated region
        $region141: #{tpu_custom_call.1} parent=83 // pred_check
          %p719 = pneg %p377
        $region142: #{tpu_custom_call.1} parent=83 // pred_check_branch
          %721 = sbr.rel (%p719) target = $region144
        $region143: #{tpu_custom_call.1} parent=83 // pred_region
          %722 = dma.done [#allocation26], 16
        $region144: #{tpu_custom_call.1} parent=83 // pred_fallthru
          _
        // Predicated region
        $region145: #{tpu_custom_call.1} parent=83 // pred_check
          %p723 = pneg %p398
        $region146: #{tpu_custom_call.1} parent=83 // pred_check_branch
          %725 = sbr.rel (%p723) target = $region148
        $region147: #{tpu_custom_call.1} parent=83 // pred_region
          %726 = dma.done [#allocation29], 16
        $region148: #{tpu_custom_call.1} parent=83 // pred_fallthru
          _
        %s727 = sand.u32 %s65, 1
        %s728 = scalar_lea.sflag [#allocation5], %s727
        %s729 = sand.u32 %s65, 1
        %s730 = smul.addr %s729, 8
        %s731 = scalar_lea.vmem [#allocation4], %s730
        %p732 = pneg %p78
        %p733 = pneg %p75
        %s734 = sand.u32 %s43, 1
        %s735 = scalar_lea.sflag [#allocation8], %s734
        %s736 = sand.u32 %s91, 1
        %s737 = smul.addr %s736, 8
        %s738 = scalar_lea.vmem [#allocation7], %s737
        %p739 = pneg %p104
        %p740 = pneg %p101
        %p741 = pneg %p125
        %p742 = pneg %p122
        %p743 = pneg %p146
        %p744 = pneg %p143
        %p745 = pneg %p167
        %p746 = pneg %p164
        %p747 = pneg %p188
        %p748 = pneg %p185
        %p749 = pneg %p209
        %p750 = pneg %p206
        %p751 = pneg %p230
        %p752 = pneg %p227
        %p753 = pneg %p251
        %p754 = pneg %p248
        %p755 = pneg %p272
        %p756 = pneg %p269
        %p757 = pneg %p293
        %p758 = pneg %p290
        %p759 = pneg %p314
        %p760 = pneg %p311
        %p761 = pneg %p335
        %p762 = pneg %p332
        %p763 = pneg %p356
        %p764 = pneg %p353
        %p765 = pneg %p377
        %p766 = pneg %p374
        %p767 = pneg %p398
        %p768 = pneg %p395
        %p769 = pneg %p426
        %p770 = pneg %p423
        %s771 = sand.u32 %s413, 1
        %s772 = scalar_lea.sflag [#allocation6], %s771
        %s773 = sand.u32 %s413, 1
        %s774 = smul.addr %s773, 8
        %s775 = scalar_lea.vmem [#allocation30], %s774
        %p776 = scmp.eq.s32.totalorder %s48, 0
        // Predicated region
        $region149: #{tpu_custom_call.1} parent=83 // pred_check
          %p777 = pneg %p776
        $region150: #{tpu_custom_call.1} parent=83 // pred_check_branch
          %779 = sbr.rel (%p777) target = $region152
        $region151: #{tpu_custom_call.1} parent=83 // pred_region
          %v780 = vld [vmem:[%s666] sm:$0xff]
          %v781 = vld [vmem:[#allocation12] sm:$0xff]
          %v782 = vld [vmem:[#allocation12 + $0x8] sm:$0xff]
          %v783 = vld [vmem:[#allocation12 + $0x10] sm:$0xff]
          %v784 = vld [vmem:[#allocation12 + $0x18] sm:$0xff]
          %v785 = vld [vmem:[#allocation13] sm:$0x1]
          %v787 = vlaneseq
          %v788 = vshrl.u32 %v787, 7
          %v789 = vsub.s32 0, %v788
          %v790 = vrot.slane %v785, %v789
          %vm792 = vcmask 261120
          %v794 = vsel %vm792, %v780, 0
          %796 = vmatprep.subr.mxu0 0.0
          %797 = vmatpush1.msra.mxu0 %v781
          %798 = vmatprep.subr.mxu0 0.0
          %799 = vmatpush1.msra.mxu0 %v782
          %800 = vmatprep.subr.mxu0 0.0
          %801 = vmatpush1.msra.mxu0 %v783
          %802 = vmatprep.subr.mxu0 0.0
          %803 = vmatpush1.msra.mxu0 %v784
          %804 = vmatprep.subr.mxu0 0.0
          %805 = vmatpush1.msra.mxu0 0.0
          %806 = vmatprep.subr.mxu0 0.0
          %807 = vmatpush1.msra.mxu0 0.0
          %808 = vmatprep.subr.mxu0 0.0
          %809 = vmatpush1.msra.mxu0 0.0
          %810 = vmatprep.subr.mxu0 0.0
          %811 = vmatpush1.msra.mxu0 0.0
          %812 = vmatprep.subr.mxu0 0.0
          %813 = vmatpush1.msra.mxu0 0.0
          %814 = vmatprep.subr.mxu0 0.0
          %815 = vmatpush1.msra.mxu0 0.0
          %816 = vmatprep.subr.mxu0 0.0
          %817 = vmatpush1.msra.mxu0 0.0
          %818 = vmatprep.subr.mxu0 0.0
          %819 = vmatpush1.msra.mxu0 0.0
          %820 = vmatprep.subr.mxu0 0.0
          %821 = vmatpush1.msra.mxu0 0.0
          %822 = vmatprep.subr.mxu0 0.0
          %823 = vmatpush1.msra.mxu0 0.0
          %824 = vmatprep.subr.mxu0 0.0
          %825 = vmatpush1.msra.mxu0 0.0
          %826 = vmatprep.subr.mxu0 0.0
          %827 = vmatpush1.msra.mxu0 0.0
          %828 = vmatprep.subr.mxu0 0.0
          %829 = vmatpush1.msra.mxu0 0.0
          %830 = vmatprep.subr.mxu0 0.0
          %831 = vmatpush1.msra.mxu0 0.0
          %832 = vmatprep.subr.mxu0 0.0
          %833 = vmatpush1.msra.mxu0 0.0
          %834 = vmatprep.subr.mxu0 0.0
          %835 = vmatpush1.msra.mxu0 0.0
          %836 = vmatprep.subr.mxu0 0.0
          %837 = vmatpush1.msra.mxu0 0.0
          %838 = vmatprep.subr.mxu0 0.0
          %839 = vmatpush1.msra.mxu0 0.0
          %840 = vmatprep.subr.mxu0 0.0
          %841 = vmatpush1.msra.mxu0 0.0
          %842 = vmatprep.subr.mxu0 0.0
          %843 = vmatpush1.msra.mxu0 0.0
          %844 = vmatprep.subr.mxu0 0.0
          %845 = vmatpush1.msra.mxu0 0.0
          %846 = vmatprep.subr.mxu0 0.0
          %847 = vmatpush1.msra.mxu0 0.0
          %848 = vmatprep.subr.mxu0 0.0
          %849 = vmatpush1.msra.mxu0 0.0
          %850 = vmatprep.subr.mxu0 0.0
          %851 = vmatpush1.msra.mxu0 0.0
          %852 = vmatprep.subr.mxu0 0.0
          %853 = vmatpush1.msra.mxu0 0.0
          %854 = vmatprep.subr.mxu0 0.0
          %855 = vmatpush1.msra.mxu0 0.0
          %856 = vmatprep.subr.mxu0 0.0
          %857 = vmatpush1.msra.mxu0 0.0
          %858 = vmatprep.subr.mxu0 0.0
          %859 = vmatpush1.msra.mxu0 0.0
          %860 = vmatprep.mubr.f32.mxu0 0.0
          %861 = vmatmul.mubr.f32.gmra.mrb[0].mxu0 %v794
          %v862 = vpop.f32.mrb[0].mxu0
          %v863 = vadd.f32 %v790, %v862
          %v864 = vpop.f32.mrb[0].mxu0
          %865 = vdwg.mxu0
          %866 = vst.msk [vmem:[#allocation2] sm:$0xff] %vm792, %v863
          %868 = vrot.lane.b32.xlu0 %v863, 96
          %v869 = vpop.permute.xlu0 %868
          %871 = vst.msk [vmem:[#allocation3] sm:$0xff] %vm792, %v869
        $region152: #{tpu_custom_call.1} parent=83 // pred_fallthru
          _
        %v872 = vld [vmem:[%s657] sm:$0xff]
        %v873 = vld [vmem:[#allocation9] sm:$0xff]
        %v874 = vld [vmem:[#allocation9 + $0x8] sm:$0xff]
        %v875 = vld [vmem:[#allocation9 + $0x10] sm:$0xff]
        %v876 = vld [vmem:[#allocation9 + $0x18] sm:$0xff]
        %v877 = vld [vmem:[#allocation10] sm:$0x1]
        %v879 = vlaneseq
        %v880 = vshrl.u32 %v879, 7
        %v881 = vsub.s32 0, %v880
        %v882 = vrot.slane %v877, %v881
        %vm884 = vcmask 261120
        %v886 = vsel %vm884, %v872, 0
        %888 = vmatprep.subr.mxu0 0.0
        %889 = vmatpush1.msra.mxu0 %v873
        %890 = vmatprep.subr.mxu0 0.0
        %891 = vmatpush1.msra.mxu0 %v874
        %892 = vmatprep.subr.mxu0 0.0
        %893 = vmatpush1.msra.mxu0 %v875
        %894 = vmatprep.subr.mxu0 0.0
        %895 = vmatpush1.msra.mxu0 %v876
        %896 = vmatprep.subr.mxu0 0.0
        %897 = vmatpush1.msra.mxu0 0.0
        %898 = vmatprep.subr.mxu0 0.0
        %899 = vmatpush1.msra.mxu0 0.0
        %900 = vmatprep.subr.mxu0 0.0
        %901 = vmatpush1.msra.mxu0 0.0
        %902 = vmatprep.subr.mxu0 0.0
        %903 = vmatpush1.msra.mxu0 0.0
        %904 = vmatprep.subr.mxu0 0.0
        %905 = vmatpush1.msra.mxu0 0.0
        %906 = vmatprep.subr.mxu0 0.0
        %907 = vmatpush1.msra.mxu0 0.0
        %908 = vmatprep.subr.mxu0 0.0
        %909 = vmatpush1.msra.mxu0 0.0
        %910 = vmatprep.subr.mxu0 0.0
        %911 = vmatpush1.msra.mxu0 0.0
        %912 = vmatprep.subr.mxu0 0.0
        %913 = vmatpush1.msra.mxu0 0.0
        %914 = vmatprep.subr.mxu0 0.0
        %915 = vmatpush1.msra.mxu0 0.0
        %916 = vmatprep.subr.mxu0 0.0
        %917 = vmatpush1.msra.mxu0 0.0
        %918 = vmatprep.subr.mxu0 0.0
        %919 = vmatpush1.msra.mxu0 0.0
        %920 = vmatprep.subr.mxu0 0.0
        %921 = vmatpush1.msra.mxu0 0.0
        %922 = vmatprep.subr.mxu0 0.0
        %923 = vmatpush1.msra.mxu0 0.0
        %924 = vmatprep.subr.mxu0 0.0
        %925 = vmatpush1.msra.mxu0 0.0
        %926 = vmatprep.subr.mxu0 0.0
        %927 = vmatpush1.msra.mxu0 0.0
        %928 = vmatprep.subr.mxu0 0.0
        %929 = vmatpush1.msra.mxu0 0.0
        %930 = vmatprep.subr.mxu0 0.0
        %931 = vmatpush1.msra.mxu0 0.0
        %932 = vmatprep.subr.mxu0 0.0
        %933 = vmatpush1.msra.mxu0 0.0
        %934 = vmatprep.subr.mxu0 0.0
        %935 = vmatpush1.msra.mxu0 0.0
        %936 = vmatprep.subr.mxu0 0.0
        %937 = vmatpush1.msra.mxu0 0.0
        %938 = vmatprep.subr.mxu0 0.0
        %939 = vmatpush1.msra.mxu0 0.0
        %940 = vmatprep.subr.mxu0 0.0
        %941 = vmatpush1.msra.mxu0 0.0
        %942 = vmatprep.subr.mxu0 0.0
        %943 = vmatpush1.msra.mxu0 0.0
        %944 = vmatprep.subr.mxu0 0.0
        %945 = vmatpush1.msra.mxu0 0.0
        %946 = vmatprep.subr.mxu0 0.0
        %947 = vmatpush1.msra.mxu0 0.0
        %948 = vmatprep.subr.mxu0 0.0
        %949 = vmatpush1.msra.mxu0 0.0
        %950 = vmatprep.subr.mxu0 0.0
        %951 = vmatpush1.msra.mxu0 0.0
        %952 = vmatprep.mubr.f32.mxu0 0.0
        %953 = vmatmul.mubr.f32.gmra.mrb[0].mxu0 %v886
        %v954 = vpop.f32.mrb[0].mxu0
        %v955 = vadd.f32 %v882, %v954
        %v956 = vpop.f32.mrb[0].mxu0
        %957 = vdwg.mxu0
        %v958 = vmul.f32 %v955, 0.35355338
        %v959 = vld [vmem:[#allocation2] sm:$0xff]
        %v960 = vld [vmem:[#allocation3] sm:$0xff]
        %vm961 = vcmask 64512
        %v963 = vsel %vm961, %v958, 0
        %v966 = vsel %vm961, %v959, 0
        %968 = vmatprep.subr.mxu0 0.0
        %969 = vmatpush1.xpose.msra.mxu0 %v966
        %970 = vmatprep.subr.mxu0 0.0
        %971 = vmatpush1.xpose.msra.mxu0 0.0
        %972 = vmatprep.subr.mxu0 0.0
        %973 = vmatpush1.xpose.msra.mxu0 0.0
        %974 = vmatprep.subr.mxu0 0.0
        %975 = vmatpush1.xpose.msra.mxu0 0.0
        %976 = vmatprep.subr.mxu0 0.0
        %977 = vmatpush1.xpose.msra.mxu0 0.0
        %978 = vmatprep.subr.mxu0 0.0
        %979 = vmatpush1.xpose.msra.mxu0 0.0
        %980 = vmatprep.subr.mxu0 0.0
        %981 = vmatpush1.xpose.msra.mxu0 0.0
        %982 = vmatprep.subr.mxu0 0.0
        %983 = vmatpush1.xpose.msra.mxu0 0.0
        %984 = vmatprep.subr.mxu0 0.0
        %985 = vmatpush1.xpose.msra.mxu0 0.0
        %986 = vmatprep.subr.mxu0 0.0
        %987 = vmatpush1.xpose.msra.mxu0 0.0
        %988 = vmatprep.subr.mxu0 0.0
        %989 = vmatpush1.xpose.msra.mxu0 0.0
        %990 = vmatprep.subr.mxu0 0.0
        %991 = vmatpush1.xpose.msra.mxu0 0.0
        %992 = vmatprep.subr.mxu0 0.0
        %993 = vmatpush1.xpose.msra.mxu0 0.0
        %994 = vmatprep.subr.mxu0 0.0
        %995 = vmatpush1.xpose.msra.mxu0 0.0
        %996 = vmatprep.subr.mxu0 0.0
        %997 = vmatpush1.xpose.msra.mxu0 0.0
        %998 = vmatprep.subr.mxu0 0.0
        %999 = vmatpush1.xpose.msra.mxu0 0.0
        %1000 = vmatprep.subr.mxu0 0.0
        %1001 = vmatpush1.xpose.msra.mxu0 0.0
        %1002 = vmatprep.subr.mxu0 0.0
        %1003 = vmatpush1.xpose.msra.mxu0 0.0
        %1004 = vmatprep.subr.mxu0 0.0
        %1005 = vmatpush1.xpose.msra.mxu0 0.0
        %1006 = vmatprep.subr.mxu0 0.0
        %1007 = vmatpush1.xpose.msra.mxu0 0.0
        %1008 = vmatprep.subr.mxu0 0.0
        %1009 = vmatpush1.xpose.msra.mxu0 0.0
        %1010 = vmatprep.subr.mxu0 0.0
        %1011 = vmatpush1.xpose.msra.mxu0 0.0
        %1012 = vmatprep.subr.mxu0 0.0
        %1013 = vmatpush1.xpose.msra.mxu0 0.0
        %1014 = vmatprep.subr.mxu0 0.0
        %1015 = vmatpush1.xpose.msra.mxu0 0.0
        %1016 = vmatprep.subr.mxu0 0.0
        %1017 = vmatpush1.xpose.msra.mxu0 0.0
        %1018 = vmatprep.subr.mxu0 0.0
        %1019 = vmatpush1.xpose.msra.mxu0 0.0
        %1020 = vmatprep.subr.mxu0 0.0
        %1021 = vmatpush1.xpose.msra.mxu0 0.0
        %1022 = vmatprep.subr.mxu0 0.0
        %1023 = vmatpush1.xpose.msra.mxu0 0.0
        %1024 = vmatprep.subr.mxu0 0.0
        %1025 = vmatpush1.xpose.msra.mxu0 0.0
        %1026 = vmatprep.subr.mxu0 0.0
        %1027 = vmatpush1.xpose.msra.mxu0 0.0
        %1028 = vmatprep.subr.mxu0 0.0
        %1029 = vmatpush1.xpose.msra.mxu0 0.0
        %1030 = vmatprep.subr.mxu0 0.0
        %1031 = vmatpush1.xpose.msra.mxu0 0.0
        %1032 = vmatprep.mubr.f32.mxu0 0.0
        %1033 = vmatmul.mubr.f32.gmra.mrb[0].mxu0 %v963
        %v1034 = vpop.f32.mrb[0].mxu0
        %v1035 = vadd.f32 0.0, %v1034
        %v1036 = vpop.f32.mrb[0].mxu0
        %1037 = vdwg.mxu0
        %v1038 = vsel %vm961, %v1035, -inf
        %1039 = vmax.xlane.f32.xlu0 %v1038
        %v1040 = vpop.xlane.xlu0 %1039
        %v1041 = vsub.f32 %v1035, %v1040
        %v1042 = vmul.f32 %v1041, 1.442695
        %v1043 = vpow.pop %v1042
        %v1044 = vsel %vm961, %v1043, 0.0
        %1045 = vadd.xlane.f32.xlu0 %v1044
        %v1046 = vpop.xlane.xlu0 %1045
        %v1048 = vsel %vm961, %v1043, 0
        %1050 = vmatprep.subr.mxu0 0.0
        %1051 = vmatpush1.msra.mxu0 %v960
        %1052 = vmatprep.subr.mxu0 0.0
        %1053 = vmatpush1.msra.mxu0 0.0
        %1054 = vmatprep.subr.mxu0 0.0
        %1055 = vmatpush1.msra.mxu0 0.0
        %1056 = vmatprep.subr.mxu0 0.0
        %1057 = vmatpush1.msra.mxu0 0.0
        %1058 = vmatprep.subr.mxu0 0.0
        %1059 = vmatpush1.msra.mxu0 0.0
        %1060 = vmatprep.subr.mxu0 0.0
        %1061 = vmatpush1.msra.mxu0 0.0
        %1062 = vmatprep.subr.mxu0 0.0
        %1063 = vmatpush1.msra.mxu0 0.0
        %1064 = vmatprep.subr.mxu0 0.0
        %1065 = vmatpush1.msra.mxu0 0.0
        %1066 = vmatprep.subr.mxu0 0.0
        %1067 = vmatpush1.msra.mxu0 0.0
        %1068 = vmatprep.subr.mxu0 0.0
        %1069 = vmatpush1.msra.mxu0 0.0
        %1070 = vmatprep.subr.mxu0 0.0
        %1071 = vmatpush1.msra.mxu0 0.0
        %1072 = vmatprep.subr.mxu0 0.0
        %1073 = vmatpush1.msra.mxu0 0.0
        %1074 = vmatprep.subr.mxu0 0.0
        %1075 = vmatpush1.msra.mxu0 0.0
        %1076 = vmatprep.subr.mxu0 0.0
        %1077 = vmatpush1.msra.mxu0 0.0
        %1078 = vmatprep.subr.mxu0 0.0
        %1079 = vmatpush1.msra.mxu0 0.0
        %1080 = vmatprep.subr.mxu0 0.0
        %1081 = vmatpush1.msra.mxu0 0.0
        %1082 = vmatprep.subr.mxu0 0.0
        %1083 = vmatpush1.msra.mxu0 0.0
        %1084 = vmatprep.subr.mxu0 0.0
        %1085 = vmatpush1.msra.mxu0 0.0
        %1086 = vmatprep.subr.mxu0 0.0
        %1087 = vmatpush1.msra.mxu0 0.0
        %1088 = vmatprep.subr.mxu0 0.0
        %1089 = vmatpush1.msra.mxu0 0.0
        %1090 = vmatprep.subr.mxu0 0.0
        %1091 = vmatpush1.msra.mxu0 0.0
        %1092 = vmatprep.subr.mxu0 0.0
        %1093 = vmatpush1.msra.mxu0 0.0
        %1094 = vmatprep.subr.mxu0 0.0
        %1095 = vmatpush1.msra.mxu0 0.0
        %1096 = vmatprep.subr.mxu0 0.0
        %1097 = vmatpush1.msra.mxu0 0.0
        %1098 = vmatprep.subr.mxu0 0.0
        %1099 = vmatpush1.msra.mxu0 0.0
        %1100 = vmatprep.subr.mxu0 0.0
        %1101 = vmatpush1.msra.mxu0 0.0
        %1102 = vmatprep.subr.mxu0 0.0
        %1103 = vmatpush1.msra.mxu0 0.0
        %1104 = vmatprep.subr.mxu0 0.0
        %1105 = vmatpush1.msra.mxu0 0.0
        %1106 = vmatprep.subr.mxu0 0.0
        %1107 = vmatpush1.msra.mxu0 0.0
        %1108 = vmatprep.subr.mxu0 0.0
        %1109 = vmatpush1.msra.mxu0 0.0
        %1110 = vmatprep.subr.mxu0 0.0
        %1111 = vmatpush1.msra.mxu0 0.0
        %1112 = vmatprep.subr.mxu0 0.0
        %1113 = vmatpush1.msra.mxu0 0.0
        %1114 = vmatprep.mubr.f32.mxu0 0.0
        %1115 = vmatmul.mubr.f32.gmra.mrb[0].mxu0 %v1048
        %v1116 = vpop.f32.mrb[0].mxu0
        %v1117 = vadd.f32 0.0, %v1116
        %v1118 = vpop.f32.mrb[0].mxu0
        %1119 = vdwg.mxu0
        %v1120 = vrcp.pop %v1046
        %v1121 = vmul.f32 %v1117, %v1120
        %1122 = vrot.lane.b32.xlu0 %v958, 120
        %v1123 = vpop.permute.xlu0 %1122
        %1124 = vrot.lane.b32.xlu0 %v959, 120
        %v1125 = vpop.permute.xlu0 %1124
        %v1126 = vsel %vm961, %v1123, 0
        %v1128 = vsel %vm961, %v1125, 0
        %1130 = vmatprep.subr.mxu0 0.0
        %1131 = vmatpush1.xpose.msra.mxu0 %v1128
        %1132 = vmatprep.subr.mxu0 0.0
        %1133 = vmatpush1.xpose.msra.mxu0 0.0
        %1134 = vmatprep.subr.mxu0 0.0
        %1135 = vmatpush1.xpose.msra.mxu0 0.0
        %1136 = vmatprep.subr.mxu0 0.0
        %1137 = vmatpush1.xpose.msra.mxu0 0.0
        %1138 = vmatprep.subr.mxu0 0.0
        %1139 = vmatpush1.xpose.msra.mxu0 0.0
        %1140 = vmatprep.subr.mxu0 0.0
        %1141 = vmatpush1.xpose.msra.mxu0 0.0
        %1142 = vmatprep.subr.mxu0 0.0
        %1143 = vmatpush1.xpose.msra.mxu0 0.0
        %1144 = vmatprep.subr.mxu0 0.0
        %1145 = vmatpush1.xpose.msra.mxu0 0.0
        %1146 = vmatprep.subr.mxu0 0.0
        %1147 = vmatpush1.xpose.msra.mxu0 0.0
        %1148 = vmatprep.subr.mxu0 0.0
        %1149 = vmatpush1.xpose.msra.mxu0 0.0
        %1150 = vmatprep.subr.mxu0 0.0
        %1151 = vmatpush1.xpose.msra.mxu0 0.0
        %1152 = vmatprep.subr.mxu0 0.0
        %1153 = vmatpush1.xpose.msra.mxu0 0.0
        %1154 = vmatprep.subr.mxu0 0.0
        %1155 = vmatpush1.xpose.msra.mxu0 0.0
        %1156 = vmatprep.subr.mxu0 0.0
        %1157 = vmatpush1.xpose.msra.mxu0 0.0
        %1158 = vmatprep.subr.mxu0 0.0
        %1159 = vmatpush1.xpose.msra.mxu0 0.0
        %1160 = vmatprep.subr.mxu0 0.0
        %1161 = vmatpush1.xpose.msra.mxu0 0.0
        %1162 = vmatprep.subr.mxu0 0.0
        %1163 = vmatpush1.xpose.msra.mxu0 0.0
        %1164 = vmatprep.subr.mxu0 0.0
        %1165 = vmatpush1.xpose.msra.mxu0 0.0
        %1166 = vmatprep.subr.mxu0 0.0
        %1167 = vmatpush1.xpose.msra.mxu0 0.0
        %1168 = vmatprep.subr.mxu0 0.0
        %1169 = vmatpush1.xpose.msra.mxu0 0.0
        %1170 = vmatprep.subr.mxu0 0.0
        %1171 = vmatpush1.xpose.msra.mxu0 0.0
        %1172 = vmatprep.subr.mxu0 0.0
        %1173 = vmatpush1.xpose.msra.mxu0 0.0
        %1174 = vmatprep.subr.mxu0 0.0
        %1175 = vmatpush1.xpose.msra.mxu0 0.0
        %1176 = vmatprep.subr.mxu0 0.0
        %1177 = vmatpush1.xpose.msra.mxu0 0.0
        %1178 = vmatprep.subr.mxu0 0.0
        %1179 = vmatpush1.xpose.msra.mxu0 0.0
        %1180 = vmatprep.subr.mxu0 0.0
        %1181 = vmatpush1.xpose.msra.mxu0 0.0
        %1182 = vmatprep.subr.mxu0 0.0
        %1183 = vmatpush1.xpose.msra.mxu0 0.0
        %1184 = vmatprep.subr.mxu0 0.0
        %1185 = vmatpush1.xpose.msra.mxu0 0.0
        %1186 = vmatprep.subr.mxu0 0.0
        %1187 = vmatpush1.xpose.msra.mxu0 0.0
        %1188 = vmatprep.subr.mxu0 0.0
        %1189 = vmatpush1.xpose.msra.mxu0 0.0
        %1190 = vmatprep.subr.mxu0 0.0
        %1191 = vmatpush1.xpose.msra.mxu0 0.0
        %1192 = vmatprep.subr.mxu0 0.0
        %1193 = vmatpush1.xpose.msra.mxu0 0.0
        %1194 = vmatprep.mubr.f32.mxu0 0.0
        %1195 = vmatmul.mubr.f32.gmra.mrb[0].mxu0 %v1126
        %v1196 = vpop.f32.mrb[0].mxu0
        %v1197 = vadd.f32 0.0, %v1196
        %v1198 = vpop.f32.mrb[0].mxu0
        %1199 = vdwg.mxu0
        %v1200 = vsel %vm961, %v1197, -inf
        %1201 = vmax.xlane.f32.xlu0 %v1200
        %v1202 = vpop.xlane.xlu0 %1201
        %v1203 = vsub.f32 %v1197, %v1202
        %v1204 = vmul.f32 %v1203, 1.442695
        %v1205 = vpow.pop %v1204
        %v1206 = vsel %vm961, %v1205, 0.0
        %1207 = vadd.xlane.f32.xlu0 %v1206
        %v1208 = vpop.xlane.xlu0 %1207
        %1210 = vrot.lane.b32.xlu0 %v960, 120
        %v1211 = vpop.permute.xlu0 %1210
        %v1214 = vsel %vm961, %v1205, 0
        %1216 = vmatprep.subr.mxu0 0.0
        %1217 = vmatpush1.msra.mxu0 %v1211
        %1218 = vmatprep.subr.mxu0 0.0
        %1219 = vmatpush1.msra.mxu0 0.0
        %1220 = vmatprep.subr.mxu0 0.0
        %1221 = vmatpush1.msra.mxu0 0.0
        %1222 = vmatprep.subr.mxu0 0.0
        %1223 = vmatpush1.msra.mxu0 0.0
        %1224 = vmatprep.subr.mxu0 0.0
        %1225 = vmatpush1.msra.mxu0 0.0
        %1226 = vmatprep.subr.mxu0 0.0
        %1227 = vmatpush1.msra.mxu0 0.0
        %1228 = vmatprep.subr.mxu0 0.0
        %1229 = vmatpush1.msra.mxu0 0.0
        %1230 = vmatprep.subr.mxu0 0.0
        %1231 = vmatpush1.msra.mxu0 0.0
        %1232 = vmatprep.subr.mxu0 0.0
        %1233 = vmatpush1.msra.mxu0 0.0
        %1234 = vmatprep.subr.mxu0 0.0
        %1235 = vmatpush1.msra.mxu0 0.0
        %1236 = vmatprep.subr.mxu0 0.0
        %1237 = vmatpush1.msra.mxu0 0.0
        %1238 = vmatprep.subr.mxu0 0.0
        %1239 = vmatpush1.msra.mxu0 0.0
        %1240 = vmatprep.subr.mxu0 0.0
        %1241 = vmatpush1.msra.mxu0 0.0
        %1242 = vmatprep.subr.mxu0 0.0
        %1243 = vmatpush1.msra.mxu0 0.0
        %1244 = vmatprep.subr.mxu0 0.0
        %1245 = vmatpush1.msra.mxu0 0.0
        %1246 = vmatprep.subr.mxu0 0.0
        %1247 = vmatpush1.msra.mxu0 0.0
        %1248 = vmatprep.subr.mxu0 0.0
        %1249 = vmatpush1.msra.mxu0 0.0
        %1250 = vmatprep.subr.mxu0 0.0
        %1251 = vmatpush1.msra.mxu0 0.0
        %1252 = vmatprep.subr.mxu0 0.0
        %1253 = vmatpush1.msra.mxu0 0.0
        %1254 = vmatprep.subr.mxu0 0.0
        %1255 = vmatpush1.msra.mxu0 0.0
        %1256 = vmatprep.subr.mxu0 0.0
        %1257 = vmatpush1.msra.mxu0 0.0
        %1258 = vmatprep.subr.mxu0 0.0
        %1259 = vmatpush1.msra.mxu0 0.0
        %1260 = vmatprep.subr.mxu0 0.0
        %1261 = vmatpush1.msra.mxu0 0.0
        %1262 = vmatprep.subr.mxu0 0.0
        %1263 = vmatpush1.msra.mxu0 0.0
        %1264 = vmatprep.subr.mxu0 0.0
        %1265 = vmatpush1.msra.mxu0 0.0
        %1266 = vmatprep.subr.mxu0 0.0
        %1267 = vmatpush1.msra.mxu0 0.0
        %1268 = vmatprep.subr.mxu0 0.0
        %1269 = vmatpush1.msra.mxu0 0.0
        %1270 = vmatprep.subr.mxu0 0.0
        %1271 = vmatpush1.msra.mxu0 0.0
        %1272 = vmatprep.subr.mxu0 0.0
        %1273 = vmatpush1.msra.mxu0 0.0
        %1274 = vmatprep.subr.mxu0 0.0
        %1275 = vmatpush1.msra.mxu0 0.0
        %1276 = vmatprep.subr.mxu0 0.0
        %1277 = vmatpush1.msra.mxu0 0.0
        %1278 = vmatprep.subr.mxu0 0.0
        %1279 = vmatpush1.msra.mxu0 0.0
        %1280 = vmatprep.mubr.f32.mxu0 0.0
        %1281 = vmatmul.mubr.f32.gmra.mrb[0].mxu0 %v1214
        %v1282 = vpop.f32.mrb[0].mxu0
        %v1283 = vadd.f32 0.0, %v1282
        %v1284 = vpop.f32.mrb[0].mxu0
        %1285 = vdwg.mxu0
        %v1286 = vrcp.pop %v1208
        %v1287 = vmul.f32 %v1283, %v1286
        %1288 = vrot.lane.b32.xlu0 %v958, 112
        %v1289 = vpop.permute.xlu0 %1288
        %1290 = vrot.lane.b32.xlu0 %v959, 112
        %v1291 = vpop.permute.xlu0 %1290
        %v1292 = vsel %vm961, %v1289, 0
        %v1294 = vsel %vm961, %v1291, 0
        %1296 = vmatprep.subr.mxu0 0.0
        %1297 = vmatpush1.xpose.msra.mxu0 %v1294
        %1298 = vmatprep.subr.mxu0 0.0
        %1299 = vmatpush1.xpose.msra.mxu0 0.0
        %1300 = vmatprep.subr.mxu0 0.0
        %1301 = vmatpush1.xpose.msra.mxu0 0.0
        %1302 = vmatprep.subr.mxu0 0.0
        %1303 = vmatpush1.xpose.msra.mxu0 0.0
        %1304 = vmatprep.subr.mxu0 0.0
        %1305 = vmatpush1.xpose.msra.mxu0 0.0
        %1306 = vmatprep.subr.mxu0 0.0
        %1307 = vmatpush1.xpose.msra.mxu0 0.0
        %1308 = vmatprep.subr.mxu0 0.0
        %1309 = vmatpush1.xpose.msra.mxu0 0.0
        %1310 = vmatprep.subr.mxu0 0.0
        %1311 = vmatpush1.xpose.msra.mxu0 0.0
        %1312 = vmatprep.subr.mxu0 0.0
        %1313 = vmatpush1.xpose.msra.mxu0 0.0
        %1314 = vmatprep.subr.mxu0 0.0
        %1315 = vmatpush1.xpose.msra.mxu0 0.0
        %1316 = vmatprep.subr.mxu0 0.0
        %1317 = vmatpush1.xpose.msra.mxu0 0.0
        %1318 = vmatprep.subr.mxu0 0.0
        %1319 = vmatpush1.xpose.msra.mxu0 0.0
        %1320 = vmatprep.subr.mxu0 0.0
        %1321 = vmatpush1.xpose.msra.mxu0 0.0
        %1322 = vmatprep.subr.mxu0 0.0
        %1323 = vmatpush1.xpose.msra.mxu0 0.0
        %1324 = vmatprep.subr.mxu0 0.0
        %1325 = vmatpush1.xpose.msra.mxu0 0.0
        %1326 = vmatprep.subr.mxu0 0.0
        %1327 = vmatpush1.xpose.msra.mxu0 0.0
        %1328 = vmatprep.subr.mxu0 0.0
        %1329 = vmatpush1.xpose.msra.mxu0 0.0
        %1330 = vmatprep.subr.mxu0 0.0
        %1331 = vmatpush1.xpose.msra.mxu0 0.0
        %1332 = vmatprep.subr.mxu0 0.0
        %1333 = vmatpush1.xpose.msra.mxu0 0.0
        %1334 = vmatprep.subr.mxu0 0.0
        %1335 = vmatpush1.xpose.msra.mxu0 0.0
        %1336 = vmatprep.subr.mxu0 0.0
        %1337 = vmatpush1.xpose.msra.mxu0 0.0
        %1338 = vmatprep.subr.mxu0 0.0
        %1339 = vmatpush1.xpose.msra.mxu0 0.0
        %1340 = vmatprep.subr.mxu0 0.0
        %1341 = vmatpush1.xpose.msra.mxu0 0.0
        %1342 = vmatprep.subr.mxu0 0.0
        %1343 = vmatpush1.xpose.msra.mxu0 0.0
        %1344 = vmatprep.subr.mxu0 0.0
        %1345 = vmatpush1.xpose.msra.mxu0 0.0
        %1346 = vmatprep.subr.mxu0 0.0
        %1347 = vmatpush1.xpose.msra.mxu0 0.0
        %1348 = vmatprep.subr.mxu0 0.0
        %1349 = vmatpush1.xpose.msra.mxu0 0.0
        %1350 = vmatprep.subr.mxu0 0.0
        %1351 = vmatpush1.xpose.msra.mxu0 0.0
        %1352 = vmatprep.subr.mxu0 0.0
        %1353 = vmatpush1.xpose.msra.mxu0 0.0
        %1354 = vmatprep.subr.mxu0 0.0
        %1355 = vmatpush1.xpose.msra.mxu0 0.0
        %1356 = vmatprep.subr.mxu0 0.0
        %1357 = vmatpush1.xpose.msra.mxu0 0.0
        %1358 = vmatprep.subr.mxu0 0.0
        %1359 = vmatpush1.xpose.msra.mxu0 0.0
        %1360 = vmatprep.mubr.f32.mxu0 0.0
        %1361 = vmatmul.mubr.f32.gmra.mrb[0].mxu0 %v1292
        %v1362 = vpop.f32.mrb[0].mxu0
        %v1363 = vadd.f32 0.0, %v1362
        %v1364 = vpop.f32.mrb[0].mxu0
        %1365 = vdwg.mxu0
        %v1366 = vsel %vm961, %v1363, -inf
        %1367 = vmax.xlane.f32.xlu0 %v1366
        %v1368 = vpop.xlane.xlu0 %1367
        %v1369 = vsub.f32 %v1363, %v1368
        %v1370 = vmul.f32 %v1369, 1.442695
        %v1371 = vpow.pop %v1370
        %v1372 = vsel %vm961, %v1371, 0.0
        %1373 = vadd.xlane.f32.xlu0 %v1372
        %v1374 = vpop.xlane.xlu0 %1373
        %1375 = vrot.lane.b32.xlu0 %v960, 112
        %v1376 = vpop.permute.xlu0 %1375
        %v1379 = vsel %vm961, %v1371, 0
        %1381 = vmatprep.subr.mxu0 0.0
        %1382 = vmatpush1.msra.mxu0 %v1376
        %1383 = vmatprep.subr.mxu0 0.0
        %1384 = vmatpush1.msra.mxu0 0.0
        %1385 = vmatprep.subr.mxu0 0.0
        %1386 = vmatpush1.msra.mxu0 0.0
        %1387 = vmatprep.subr.mxu0 0.0
        %1388 = vmatpush1.msra.mxu0 0.0
        %1389 = vmatprep.subr.mxu0 0.0
        %1390 = vmatpush1.msra.mxu0 0.0
        %1391 = vmatprep.subr.mxu0 0.0
        %1392 = vmatpush1.msra.mxu0 0.0
        %1393 = vmatprep.subr.mxu0 0.0
        %1394 = vmatpush1.msra.mxu0 0.0
        %1395 = vmatprep.subr.mxu0 0.0
        %1396 = vmatpush1.msra.mxu0 0.0
        %1397 = vmatprep.subr.mxu0 0.0
        %1398 = vmatpush1.msra.mxu0 0.0
        %1399 = vmatprep.subr.mxu0 0.0
        %1400 = vmatpush1.msra.mxu0 0.0
        %1401 = vmatprep.subr.mxu0 0.0
        %1402 = vmatpush1.msra.mxu0 0.0
        %1403 = vmatprep.subr.mxu0 0.0
        %1404 = vmatpush1.msra.mxu0 0.0
        %1405 = vmatprep.subr.mxu0 0.0
        %1406 = vmatpush1.msra.mxu0 0.0
        %1407 = vmatprep.subr.mxu0 0.0
        %1408 = vmatpush1.msra.mxu0 0.0
        %1409 = vmatprep.subr.mxu0 0.0
        %1410 = vmatpush1.msra.mxu0 0.0
        %1411 = vmatprep.subr.mxu0 0.0
        %1412 = vmatpush1.msra.mxu0 0.0
        %1413 = vmatprep.subr.mxu0 0.0
        %1414 = vmatpush1.msra.mxu0 0.0
        %1415 = vmatprep.subr.mxu0 0.0
        %1416 = vmatpush1.msra.mxu0 0.0
        %1417 = vmatprep.subr.mxu0 0.0
        %1418 = vmatpush1.msra.mxu0 0.0
        %1419 = vmatprep.subr.mxu0 0.0
        %1420 = vmatpush1.msra.mxu0 0.0
        %1421 = vmatprep.subr.mxu0 0.0
        %1422 = vmatpush1.msra.mxu0 0.0
        %1423 = vmatprep.subr.mxu0 0.0
        %1424 = vmatpush1.msra.mxu0 0.0
        %1425 = vmatprep.subr.mxu0 0.0
        %1426 = vmatpush1.msra.mxu0 0.0
        %1427 = vmatprep.subr.mxu0 0.0
        %1428 = vmatpush1.msra.mxu0 0.0
        %1429 = vmatprep.subr.mxu0 0.0
        %1430 = vmatpush1.msra.mxu0 0.0
        %1431 = vmatprep.subr.mxu0 0.0
        %1432 = vmatpush1.msra.mxu0 0.0
        %1433 = vmatprep.subr.mxu0 0.0
        %1434 = vmatpush1.msra.mxu0 0.0
        %1435 = vmatprep.subr.mxu0 0.0
        %1436 = vmatpush1.msra.mxu0 0.0
        %1437 = vmatprep.subr.mxu0 0.0
        %1438 = vmatpush1.msra.mxu0 0.0
        %1439 = vmatprep.subr.mxu0 0.0
        %1440 = vmatpush1.msra.mxu0 0.0
        %1441 = vmatprep.subr.mxu0 0.0
        %1442 = vmatpush1.msra.mxu0 0.0
        %1443 = vmatprep.subr.mxu0 0.0
        %1444 = vmatpush1.msra.mxu0 0.0
        %1445 = vmatprep.mubr.f32.mxu0 0.0
        %1446 = vmatmul.mubr.f32.gmra.mrb[0].mxu0 %v1379
        %v1447 = vpop.f32.mrb[0].mxu0
        %v1448 = vadd.f32 0.0, %v1447
        %v1449 = vpop.f32.mrb[0].mxu0
        %1450 = vdwg.mxu0
        %v1451 = vrcp.pop %v1374
        %v1452 = vmul.f32 %v1448, %v1451
        %1453 = vrot.lane.b32.xlu0 %v958, 104
        %v1454 = vpop.permute.xlu0 %1453
        %1455 = vrot.lane.b32.xlu0 %v959, 104
        %v1456 = vpop.permute.xlu0 %1455
        %v1457 = vsel %vm961, %v1454, 0
        %v1459 = vsel %vm961, %v1456, 0
        %1461 = vmatprep.subr.mxu0 0.0
        %1462 = vmatpush1.xpose.msra.mxu0 %v1459
        %1463 = vmatprep.subr.mxu0 0.0
        %1464 = vmatpush1.xpose.msra.mxu0 0.0
        %1465 = vmatprep.subr.mxu0 0.0
        %1466 = vmatpush1.xpose.msra.mxu0 0.0
        %1467 = vmatprep.subr.mxu0 0.0
        %1468 = vmatpush1.xpose.msra.mxu0 0.0
        %1469 = vmatprep.subr.mxu0 0.0
        %1470 = vmatpush1.xpose.msra.mxu0 0.0
        %1471 = vmatprep.subr.mxu0 0.0
        %1472 = vmatpush1.xpose.msra.mxu0 0.0
        %1473 = vmatprep.subr.mxu0 0.0
        %1474 = vmatpush1.xpose.msra.mxu0 0.0
        %1475 = vmatprep.subr.mxu0 0.0
        %1476 = vmatpush1.xpose.msra.mxu0 0.0
        %1477 = vmatprep.subr.mxu0 0.0
        %1478 = vmatpush1.xpose.msra.mxu0 0.0
        %1479 = vmatprep.subr.mxu0 0.0
        %1480 = vmatpush1.xpose.msra.mxu0 0.0
        %1481 = vmatprep.subr.mxu0 0.0
        %1482 = vmatpush1.xpose.msra.mxu0 0.0
        %1483 = vmatprep.subr.mxu0 0.0
        %1484 = vmatpush1.xpose.msra.mxu0 0.0
        %1485 = vmatprep.subr.mxu0 0.0
        %1486 = vmatpush1.xpose.msra.mxu0 0.0
        %1487 = vmatprep.subr.mxu0 0.0
        %1488 = vmatpush1.xpose.msra.mxu0 0.0
        %1489 = vmatprep.subr.mxu0 0.0
        %1490 = vmatpush1.xpose.msra.mxu0 0.0
        %1491 = vmatprep.subr.mxu0 0.0
        %1492 = vmatpush1.xpose.msra.mxu0 0.0
        %1493 = vmatprep.subr.mxu0 0.0
        %1494 = vmatpush1.xpose.msra.mxu0 0.0
        %1495 = vmatprep.subr.mxu0 0.0
        %1496 = vmatpush1.xpose.msra.mxu0 0.0
        %1497 = vmatprep.subr.mxu0 0.0
        %1498 = vmatpush1.xpose.msra.mxu0 0.0
        %1499 = vmatprep.subr.mxu0 0.0
        %1500 = vmatpush1.xpose.msra.mxu0 0.0
        %1501 = vmatprep.subr.mxu0 0.0
        %1502 = vmatpush1.xpose.msra.mxu0 0.0
        %1503 = vmatprep.subr.mxu0 0.0
        %1504 = vmatpush1.xpose.msra.mxu0 0.0
        %1505 = vmatprep.subr.mxu0 0.0
        %1506 = vmatpush1.xpose.msra.mxu0 0.0
        %1507 = vmatprep.subr.mxu0 0.0
        %1508 = vmatpush1.xpose.msra.mxu0 0.0
        %1509 = vmatprep.subr.mxu0 0.0
        %1510 = vmatpush1.xpose.msra.mxu0 0.0
        %1511 = vmatprep.subr.mxu0 0.0
        %1512 = vmatpush1.xpose.msra.mxu0 0.0
        %1513 = vmatprep.subr.mxu0 0.0
        %1514 = vmatpush1.xpose.msra.mxu0 0.0
        %1515 = vmatprep.subr.mxu0 0.0
        %1516 = vmatpush1.xpose.msra.mxu0 0.0
        %1517 = vmatprep.subr.mxu0 0.0
        %1518 = vmatpush1.xpose.msra.mxu0 0.0
        %1519 = vmatprep.subr.mxu0 0.0
        %1520 = vmatpush1.xpose.msra.mxu0 0.0
        %1521 = vmatprep.subr.mxu0 0.0
        %1522 = vmatpush1.xpose.msra.mxu0 0.0
        %1523 = vmatprep.subr.mxu0 0.0
        %1524 = vmatpush1.xpose.msra.mxu0 0.0
        %1525 = vmatprep.mubr.f32.mxu0 0.0
        %1526 = vmatmul.mubr.f32.gmra.mrb[0].mxu0 %v1457
        %v1527 = vpop.f32.mrb[0].mxu0
        %v1528 = vadd.f32 0.0, %v1527
        %v1529 = vpop.f32.mrb[0].mxu0
        %1530 = vdwg.mxu0
        %v1531 = vsel %vm961, %v1528, -inf
        %1532 = vmax.xlane.f32.xlu0 %v1531
        %v1533 = vpop.xlane.xlu0 %1532
        %v1534 = vsub.f32 %v1528, %v1533
        %v1535 = vmul.f32 %v1534, 1.442695
        %v1536 = vpow.pop %v1535
        %v1537 = vsel %vm961, %v1536, 0.0
        %1538 = vadd.xlane.f32.xlu0 %v1537
        %v1539 = vpop.xlane.xlu0 %1538
        %1540 = vrot.lane.b32.xlu0 %v960, 104
        %v1541 = vpop.permute.xlu0 %1540
        %v1544 = vsel %vm961, %v1536, 0
        %1546 = vmatprep.subr.mxu0 0.0
        %1547 = vmatpush1.msra.mxu0 %v1541
        %1548 = vmatprep.subr.mxu0 0.0
        %1549 = vmatpush1.msra.mxu0 0.0
        %1550 = vmatprep.subr.mxu0 0.0
        %1551 = vmatpush1.msra.mxu0 0.0
        %1552 = vmatprep.subr.mxu0 0.0
        %1553 = vmatpush1.msra.mxu0 0.0
        %1554 = vmatprep.subr.mxu0 0.0
        %1555 = vmatpush1.msra.mxu0 0.0
        %1556 = vmatprep.subr.mxu0 0.0
        %1557 = vmatpush1.msra.mxu0 0.0
        %1558 = vmatprep.subr.mxu0 0.0
        %1559 = vmatpush1.msra.mxu0 0.0
        %1560 = vmatprep.subr.mxu0 0.0
        %1561 = vmatpush1.msra.mxu0 0.0
        %1562 = vmatprep.subr.mxu0 0.0
        %1563 = vmatpush1.msra.mxu0 0.0
        %1564 = vmatprep.subr.mxu0 0.0
        %1565 = vmatpush1.msra.mxu0 0.0
        %1566 = vmatprep.subr.mxu0 0.0
        %1567 = vmatpush1.msra.mxu0 0.0
        %1568 = vmatprep.subr.mxu0 0.0
        %1569 = vmatpush1.msra.mxu0 0.0
        %1570 = vmatprep.subr.mxu0 0.0
        %1571 = vmatpush1.msra.mxu0 0.0
        %1572 = vmatprep.subr.mxu0 0.0
        %1573 = vmatpush1.msra.mxu0 0.0
        %1574 = vmatprep.subr.mxu0 0.0
        %1575 = vmatpush1.msra.mxu0 0.0
        %1576 = vmatprep.subr.mxu0 0.0
        %1577 = vmatpush1.msra.mxu0 0.0
        %1578 = vmatprep.subr.mxu0 0.0
        %1579 = vmatpush1.msra.mxu0 0.0
        %1580 = vmatprep.subr.mxu0 0.0
        %1581 = vmatpush1.msra.mxu0 0.0
        %1582 = vmatprep.subr.mxu0 0.0
        %1583 = vmatpush1.msra.mxu0 0.0
        %1584 = vmatprep.subr.mxu0 0.0
        %1585 = vmatpush1.msra.mxu0 0.0
        %1586 = vmatprep.subr.mxu0 0.0
        %1587 = vmatpush1.msra.mxu0 0.0
        %1588 = vmatprep.subr.mxu0 0.0
        %1589 = vmatpush1.msra.mxu0 0.0
        %1590 = vmatprep.subr.mxu0 0.0
        %1591 = vmatpush1.msra.mxu0 0.0
        %1592 = vmatprep.subr.mxu0 0.0
        %1593 = vmatpush1.msra.mxu0 0.0
        %1594 = vmatprep.subr.mxu0 0.0
        %1595 = vmatpush1.msra.mxu0 0.0
        %1596 = vmatprep.subr.mxu0 0.0
        %1597 = vmatpush1.msra.mxu0 0.0
        %1598 = vmatprep.subr.mxu0 0.0
        %1599 = vmatpush1.msra.mxu0 0.0
        %1600 = vmatprep.subr.mxu0 0.0
        %1601 = vmatpush1.msra.mxu0 0.0
        %1602 = vmatprep.subr.mxu0 0.0
        %1603 = vmatpush1.msra.mxu0 0.0
        %1604 = vmatprep.subr.mxu0 0.0
        %1605 = vmatpush1.msra.mxu0 0.0
        %1606 = vmatprep.subr.mxu0 0.0
        %1607 = vmatpush1.msra.mxu0 0.0
        %1608 = vmatprep.subr.mxu0 0.0
        %1609 = vmatpush1.msra.mxu0 0.0
        %1610 = vmatprep.mubr.f32.mxu0 0.0
        %1611 = vmatmul.mubr.f32.gmra.mrb[0].mxu0 %v1544
        %v1612 = vpop.f32.mrb[0].mxu0
        %v1613 = vadd.f32 0.0, %v1612
        %v1614 = vpop.f32.mrb[0].mxu0
        %1615 = vdwg.mxu0
        %v1616 = vrcp.pop %v1539
        %v1617 = vmul.f32 %v1613, %v1616
        %1619 = vrot.lane.b32.xlu0 %v1287, 8
        %v1620 = vpop.permute.xlu0 %1619
        %1623 = vrot.lane.b32.xlu0 %v1452, 16
        %v1624 = vpop.permute.xlu0 %1623
        %1627 = vrot.lane.b32.xlu0 %v1617, 24
        %v1628 = vpop.permute.xlu0 %1627
        %v1630 = vsel %vm961, %v1121, %v1620
        %vm1631 = vcmask 130048
        %v1632 = vsel %vm1631, %v1630, %v1624
        %vm1633 = vcmask 195584
        %v1634 = vsel %vm1633, %v1632, %v1628
        %v1635 = vld [vmem:[#allocation15] sm:$0xff]
        %v1636 = vld [vmem:[#allocation15 + $0x8] sm:$0xff]
        %v1637 = vld [vmem:[#allocation15 + $0x10] sm:$0xff]
        %v1638 = vld [vmem:[#allocation15 + $0x18] sm:$0xff]
        %v1639 = vld [vmem:[#allocation16] sm:$0x1]
        %v1641 = vlaneseq
        %v1642 = vshrl.u32 %v1641, 7
        %v1643 = vsub.s32 0, %v1642
        %v1644 = vrot.slane %v1639, %v1643
        %v1647 = vsel %vm884, %v1634, 0
        %1649 = vmatprep.subr.mxu0 0.0
        %1650 = vmatpush1.msra.mxu0 %v1635
        %1651 = vmatprep.subr.mxu0 0.0
        %1652 = vmatpush1.msra.mxu0 %v1636
        %1653 = vmatprep.subr.mxu0 0.0
        %1654 = vmatpush1.msra.mxu0 %v1637
        %1655 = vmatprep.subr.mxu0 0.0
        %1656 = vmatpush1.msra.mxu0 %v1638
        %1657 = vmatprep.subr.mxu0 0.0
        %1658 = vmatpush1.msra.mxu0 0.0
        %1659 = vmatprep.subr.mxu0 0.0
        %1660 = vmatpush1.msra.mxu0 0.0
        %1661 = vmatprep.subr.mxu0 0.0
        %1662 = vmatpush1.msra.mxu0 0.0
        %1663 = vmatprep.subr.mxu0 0.0
        %1664 = vmatpush1.msra.mxu0 0.0
        %1665 = vmatprep.subr.mxu0 0.0
        %1666 = vmatpush1.msra.mxu0 0.0
        %1667 = vmatprep.subr.mxu0 0.0
        %1668 = vmatpush1.msra.mxu0 0.0
        %1669 = vmatprep.subr.mxu0 0.0
        %1670 = vmatpush1.msra.mxu0 0.0
        %1671 = vmatprep.subr.mxu0 0.0
        %1672 = vmatpush1.msra.mxu0 0.0
        %1673 = vmatprep.subr.mxu0 0.0
        %1674 = vmatpush1.msra.mxu0 0.0
        %1675 = vmatprep.subr.mxu0 0.0
        %1676 = vmatpush1.msra.mxu0 0.0
        %1677 = vmatprep.subr.mxu0 0.0
        %1678 = vmatpush1.msra.mxu0 0.0
        %1679 = vmatprep.subr.mxu0 0.0
        %1680 = vmatpush1.msra.mxu0 0.0
        %1681 = vmatprep.subr.mxu0 0.0
        %1682 = vmatpush1.msra.mxu0 0.0
        %1683 = vmatprep.subr.mxu0 0.0
        %1684 = vmatpush1.msra.mxu0 0.0
        %1685 = vmatprep.subr.mxu0 0.0
        %1686 = vmatpush1.msra.mxu0 0.0
        %1687 = vmatprep.subr.mxu0 0.0
        %1688 = vmatpush1.msra.mxu0 0.0
        %1689 = vmatprep.subr.mxu0 0.0
        %1690 = vmatpush1.msra.mxu0 0.0
        %1691 = vmatprep.subr.mxu0 0.0
        %1692 = vmatpush1.msra.mxu0 0.0
        %1693 = vmatprep.subr.mxu0 0.0
        %1694 = vmatpush1.msra.mxu0 0.0
        %1695 = vmatprep.subr.mxu0 0.0
        %1696 = vmatpush1.msra.mxu0 0.0
        %1697 = vmatprep.subr.mxu0 0.0
        %1698 = vmatpush1.msra.mxu0 0.0
        %1699 = vmatprep.subr.mxu0 0.0
        %1700 = vmatpush1.msra.mxu0 0.0
        %1701 = vmatprep.subr.mxu0 0.0
        %1702 = vmatpush1.msra.mxu0 0.0
        %1703 = vmatprep.subr.mxu0 0.0
        %1704 = vmatpush1.msra.mxu0 0.0
        %1705 = vmatprep.subr.mxu0 0.0
        %1706 = vmatpush1.msra.mxu0 0.0
        %1707 = vmatprep.subr.mxu0 0.0
        %1708 = vmatpush1.msra.mxu0 0.0
        %1709 = vmatprep.subr.mxu0 0.0
        %1710 = vmatpush1.msra.mxu0 0.0
        %1711 = vmatprep.subr.mxu0 0.0
        %1712 = vmatpush1.msra.mxu0 0.0
        %1713 = vmatprep.mubr.f32.mxu0 0.0
        %1714 = vmatmul.mubr.f32.gmra.mrb[0].mxu0 %v1647
        %v1715 = vpop.f32.mrb[0].mxu0
        %v1716 = vadd.f32 %v1644, %v1715
        %v1717 = vpop.f32.mrb[0].mxu0
        %1718 = vdwg.mxu0
        %v1719 = vadd.f32 %v872, %v1716
        %v1720 = vld [vmem:[#allocation18] sm:$0x1]
        %v1721 = vld [vmem:[#allocation19] sm:$0x1]
        %v1722 = vsel %vm884, %v1719, 0.0
        %1723 = vadd.xlane.f32.xlu0 %v1722
        %v1724 = vpop.xlane.xlu0 %1723
        %v1725 = vrcp.pop 32.0
        %v1726 = vmul.f32 %v1724, %v1725
        %v1727 = vsub.f32 %v1719, %v1726
        %v1728 = vmul.f32 %v1727, %v1727
        %v1729 = vsel %vm884, %v1728, 0.0
        %1730 = vadd.xlane.f32.xlu0 %v1729
        %v1731 = vpop.xlane.xlu0 %1730
        %v1732 = vmul.f32 %v1731, %v1725
        %v1733 = vadd.f32 %v1732, 1e-06
        %v1734 = vrsqrt.pop %v1733
        %v1735 = vmul.f32 %v1727, %v1734
        %v1737 = vlaneseq
        %v1738 = vshrl.u32 %v1737, 7
        %v1739 = vsub.s32 0, %v1738
        %v1740 = vrot.slane %v1720, %v1739
        %v1742 = vmul.f32 %v1735, %v1740
        %v1744 = vlaneseq
        %v1745 = vshrl.u32 %v1744, 7
        %v1746 = vsub.s32 0, %v1745
        %v1747 = vrot.slane %v1721, %v1746
        %v1749 = vadd.f32 %v1742, %v1747
        %v1750 = vld [vmem:[#allocation21] sm:$0xff]
        %v1751 = vld [vmem:[#allocation21 + $0x8] sm:$0xff]
        %v1752 = vld [vmem:[#allocation21 + $0x10] sm:$0xff]
        %v1753 = vld [vmem:[#allocation21 + $0x18] sm:$0xff]
        %v1754 = vld [vmem:[#allocation22] sm:$0x1]
        %v1756 = vlaneseq
        %v1757 = vshrl.u32 %v1756, 7
        %v1758 = vsub.s32 0, %v1757
        %v1759 = vrot.slane %v1754, %v1758
        %v1762 = vsel %vm884, %v1749, 0
        %1764 = vmatprep.subr.mxu0 0.0
        %1765 = vmatpush1.msra.mxu0 %v1750
        %1766 = vmatprep.subr.mxu0 0.0
        %1767 = vmatpush1.msra.mxu0 %v1751
        %1768 = vmatprep.subr.mxu0 0.0
        %1769 = vmatpush1.msra.mxu0 %v1752
        %1770 = vmatprep.subr.mxu0 0.0
        %1771 = vmatpush1.msra.mxu0 %v1753
        %1772 = vmatprep.subr.mxu0 0.0
        %1773 = vmatpush1.msra.mxu0 0.0
        %1774 = vmatprep.subr.mxu0 0.0
        %1775 = vmatpush1.msra.mxu0 0.0
        %1776 = vmatprep.subr.mxu0 0.0
        %1777 = vmatpush1.msra.mxu0 0.0
        %1778 = vmatprep.subr.mxu0 0.0
        %1779 = vmatpush1.msra.mxu0 0.0
        %1780 = vmatprep.subr.mxu0 0.0
        %1781 = vmatpush1.msra.mxu0 0.0
        %1782 = vmatprep.subr.mxu0 0.0
        %1783 = vmatpush1.msra.mxu0 0.0
        %1784 = vmatprep.subr.mxu0 0.0
        %1785 = vmatpush1.msra.mxu0 0.0
        %1786 = vmatprep.subr.mxu0 0.0
        %1787 = vmatpush1.msra.mxu0 0.0
        %1788 = vmatprep.subr.mxu0 0.0
        %1789 = vmatpush1.msra.mxu0 0.0
        %1790 = vmatprep.subr.mxu0 0.0
        %1791 = vmatpush1.msra.mxu0 0.0
        %1792 = vmatprep.subr.mxu0 0.0
        %1793 = vmatpush1.msra.mxu0 0.0
        %1794 = vmatprep.subr.mxu0 0.0
        %1795 = vmatpush1.msra.mxu0 0.0
        %1796 = vmatprep.subr.mxu0 0.0
        %1797 = vmatpush1.msra.mxu0 0.0
        %1798 = vmatprep.subr.mxu0 0.0
        %1799 = vmatpush1.msra.mxu0 0.0
        %1800 = vmatprep.subr.mxu0 0.0
        %1801 = vmatpush1.msra.mxu0 0.0
        %1802 = vmatprep.subr.mxu0 0.0
        %1803 = vmatpush1.msra.mxu0 0.0
        %1804 = vmatprep.subr.mxu0 0.0
        %1805 = vmatpush1.msra.mxu0 0.0
        %1806 = vmatprep.subr.mxu0 0.0
        %1807 = vmatpush1.msra.mxu0 0.0
        %1808 = vmatprep.subr.mxu0 0.0
        %1809 = vmatpush1.msra.mxu0 0.0
        %1810 = vmatprep.subr.mxu0 0.0
        %1811 = vmatpush1.msra.mxu0 0.0
        %1812 = vmatprep.subr.mxu0 0.0
        %1813 = vmatpush1.msra.mxu0 0.0
        %1814 = vmatprep.subr.mxu0 0.0
        %1815 = vmatpush1.msra.mxu0 0.0
        %1816 = vmatprep.subr.mxu0 0.0
        %1817 = vmatpush1.msra.mxu0 0.0
        %1818 = vmatprep.subr.mxu0 0.0
        %1819 = vmatpush1.msra.mxu0 0.0
        %1820 = vmatprep.subr.mxu0 0.0
        %1821 = vmatpush1.msra.mxu0 0.0
        %1822 = vmatprep.subr.mxu0 0.0
        %1823 = vmatpush1.msra.mxu0 0.0
        %1824 = vmatprep.subr.mxu0 0.0
        %1825 = vmatpush1.msra.mxu0 0.0
        %1826 = vmatprep.subr.mxu0 0.0
        %1827 = vmatpush1.msra.mxu0 0.0
        %1828 = vmatprep.mubr.f32.mxu0 0.0
        %1829 = vmatmul.mubr.f32.gmra.mrb[0].mxu0 %v1762
        %v1830 = vpop.f32.mrb[0].mxu0
        %v1831 = vadd.f32 %v1759, %v1830
        %v1832 = vpop.f32.mrb[0].mxu0
        %1833 = vdwg.mxu0
        %v1834 = vmax.f32 %v1831, 0.0
        %v1835 = vld [vmem:[#allocation24] sm:$0xff]
        %v1836 = vld [vmem:[#allocation24 + $0x8] sm:$0xff]
        %v1837 = vld [vmem:[#allocation24 + $0x10] sm:$0xff]
        %v1838 = vld [vmem:[#allocation24 + $0x18] sm:$0xff]
        %v1839 = vld [vmem:[#allocation24 + $0x20] sm:$0xff]
        %v1840 = vld [vmem:[#allocation24 + $0x28] sm:$0xff]
        %v1841 = vld [vmem:[#allocation24 + $0x30] sm:$0xff]
        %v1842 = vld [vmem:[#allocation24 + $0x38] sm:$0xff]
        %v1843 = vld [vmem:[#allocation25] sm:$0x1]
        %v1845 = vlaneseq
        %v1846 = vshrl.u32 %v1845, 7
        %v1847 = vsub.s32 0, %v1846
        %v1848 = vrot.slane %v1843, %v1847
        %vm1850 = vcmask 523264
        %v1852 = vsel %vm1850, %v1834, 0
        %1854 = vmatprep.subr.mxu0 0.0
        %1855 = vmatpush1.msra.mxu0 %v1835
        %1856 = vmatprep.subr.mxu0 0.0
        %1857 = vmatpush1.msra.mxu0 %v1836
        %1858 = vmatprep.subr.mxu0 0.0
        %1859 = vmatpush1.msra.mxu0 %v1837
        %1860 = vmatprep.subr.mxu0 0.0
        %1861 = vmatpush1.msra.mxu0 %v1838
        %1862 = vmatprep.subr.mxu0 0.0
        %1863 = vmatpush1.msra.mxu0 %v1839
        %1864 = vmatprep.subr.mxu0 0.0
        %1865 = vmatpush1.msra.mxu0 %v1840
        %1866 = vmatprep.subr.mxu0 0.0
        %1867 = vmatpush1.msra.mxu0 %v1841
        %1868 = vmatprep.subr.mxu0 0.0
        %1869 = vmatpush1.msra.mxu0 %v1842
        %1870 = vmatprep.subr.mxu0 0.0
        %1871 = vmatpush1.msra.mxu0 0.0
        %1872 = vmatprep.subr.mxu0 0.0
        %1873 = vmatpush1.msra.mxu0 0.0
        %1874 = vmatprep.subr.mxu0 0.0
        %1875 = vmatpush1.msra.mxu0 0.0
        %1876 = vmatprep.subr.mxu0 0.0
        %1877 = vmatpush1.msra.mxu0 0.0
        %1878 = vmatprep.subr.mxu0 0.0
        %1879 = vmatpush1.msra.mxu0 0.0
        %1880 = vmatprep.subr.mxu0 0.0
        %1881 = vmatpush1.msra.mxu0 0.0
        %1882 = vmatprep.subr.mxu0 0.0
        %1883 = vmatpush1.msra.mxu0 0.0
        %1884 = vmatprep.subr.mxu0 0.0
        %1885 = vmatpush1.msra.mxu0 0.0
        %1886 = vmatprep.subr.mxu0 0.0
        %1887 = vmatpush1.msra.mxu0 0.0
        %1888 = vmatprep.subr.mxu0 0.0
        %1889 = vmatpush1.msra.mxu0 0.0
        %1890 = vmatprep.subr.mxu0 0.0
        %1891 = vmatpush1.msra.mxu0 0.0
        %1892 = vmatprep.subr.mxu0 0.0
        %1893 = vmatpush1.msra.mxu0 0.0
        %1894 = vmatprep.subr.mxu0 0.0
        %1895 = vmatpush1.msra.mxu0 0.0
        %1896 = vmatprep.subr.mxu0 0.0
        %1897 = vmatpush1.msra.mxu0 0.0
        %1898 = vmatprep.subr.mxu0 0.0
        %1899 = vmatpush1.msra.mxu0 0.0
        %1900 = vmatprep.subr.mxu0 0.0
        %1901 = vmatpush1.msra.mxu0 0.0
        %1902 = vmatprep.subr.mxu0 0.0
        %1903 = vmatpush1.msra.mxu0 0.0
        %1904 = vmatprep.subr.mxu0 0.0
        %1905 = vmatpush1.msra.mxu0 0.0
        %1906 = vmatprep.subr.mxu0 0.0
        %1907 = vmatpush1.msra.mxu0 0.0
        %1908 = vmatprep.subr.mxu0 0.0
        %1909 = vmatpush1.msra.mxu0 0.0
        %1910 = vmatprep.subr.mxu0 0.0
        %1911 = vmatpush1.msra.mxu0 0.0
        %1912 = vmatprep.subr.mxu0 0.0
        %1913 = vmatpush1.msra.mxu0 0.0
        %1914 = vmatprep.subr.mxu0 0.0
        %1915 = vmatpush1.msra.mxu0 0.0
        %1916 = vmatprep.subr.mxu0 0.0
        %1917 = vmatpush1.msra.mxu0 0.0
        %1918 = vmatprep.mubr.f32.mxu0 0.0
        %1919 = vmatmul.mubr.f32.gmra.mrb[0].mxu0 %v1852
        %v1920 = vpop.f32.mrb[0].mxu0
        %v1921 = vadd.f32 %v1848, %v1920
        %v1922 = vpop.f32.mrb[0].mxu0
        %1923 = vdwg.mxu0
        %v1924 = vadd.f32 %v1921, %v1749
        %v1925 = vld [vmem:[#allocation27] sm:$0x1]
        %v1926 = vld [vmem:[#allocation28] sm:$0x1]
        %v1927 = vsel %vm884, %v1924, 0.0
        %1928 = vadd.xlane.f32.xlu0 %v1927
        %v1929 = vpop.xlane.xlu0 %1928
        %v1930 = vmul.f32 %v1929, %v1725
        %v1931 = vsub.f32 %v1924, %v1930
        %v1932 = vmul.f32 %v1931, %v1931
        %v1933 = vsel %vm884, %v1932, 0.0
        %1934 = vadd.xlane.f32.xlu0 %v1933
        %v1935 = vpop.xlane.xlu0 %1934
        %v1936 = vmul.f32 %v1935, %v1725
        %v1937 = vadd.f32 %v1936, 1e-06
        %v1938 = vrsqrt.pop %v1937
        %v1939 = vmul.f32 %v1931, %v1938
        %v1941 = vlaneseq
        %v1942 = vshrl.u32 %v1941, 7
        %v1943 = vsub.s32 0, %v1942
        %v1944 = vrot.slane %v1925, %v1943
        %v1946 = vmul.f32 %v1939, %v1944
        %v1948 = vlaneseq
        %v1949 = vshrl.u32 %v1948, 7
        %v1950 = vsub.s32 0, %v1949
        %v1951 = vrot.slane %v1926, %v1950
        %v1953 = vadd.f32 %v1946, %v1951
        %1954 = vst.msk [vmem:[%s775] sm:$0xff] %vm884, %v1953
        %s1955 = sand.u32 %s413, 1
        %s1956 = scalar_lea.sflag [#allocation6], %s1955
        %s1957 = sand.u32 %s413, 1
        %s1958 = smul.addr %s1957, 8
        %s1959 = scalar_lea.vmem [#allocation30], %s1958
        // Predicated region
        $region153: #{tpu_custom_call.1} parent=83 // pred_check
          %p1960 = pneg %p423
        $region154: #{tpu_custom_call.1} parent=83 // pred_check_branch
          %1962 = sbr.rel (%p1960) target = $region156
        $region155: #{tpu_custom_call.1} parent=83 // pred_region
          %s1964 = ssub.s32 128, 128
          %1965 = vsyncadd %s1956, %s1964
          %s1966 = sadd.s32 %s48, %s47
          %s1967 = smul.addr %s1966, 128
          %s1968 = scalar_lea.hbm %s16, %s1967
          %s1970 = sshll.u32 %s1959, 4
          %s1971 = int_to_ptr.vmem [resolvable:$true] %s1970
          %1973 = dma.vmem_to_hbm [thread:$0]  %s1971, 128, %s1968, %s1956
        $region156: #{tpu_custom_call.1} parent=83 // pred_fallthru
          _
      $region84: #{tpu_custom_call.1} parent=5 // pred_fallthru
        _
      %p1974 = scmp.le.s32.totalorder 2, %s38
      // Predicated region
      $region157: #{tpu_custom_call.1} parent=5 // pred_check
        %p1975 = pneg %p1974
      $region158: #{tpu_custom_call.1} parent=5 // pred_check_branch
        %1977 = sbr.rel (%p1975) target = $region160
      $region159: #{tpu_custom_call.1} parent=5 // pred_region
        %s1978 = ssub.s32 %s38, 2
        // Predicated region
        $region161: #{tpu_custom_call.1} parent=159 // pred_check
          %p1979 = pneg %p429
        $region162: #{tpu_custom_call.1} parent=159 // pred_check_branch
          %1981 = sbr.rel (%p1979) target = $region164
        $region163: #{tpu_custom_call.1} parent=159 // pred_region
          %s1982 = sand.u32 %s414, 1
          %s1983 = scalar_lea.sflag [#allocation6], %s1982
          %s1984 = sand.u32 %s414, 1
          %s1985 = smul.addr %s1984, 8
          %s1986 = scalar_lea.vmem [#allocation30], %s1985
          %1987 = dma.done %s1983, 128
        $region164: #{tpu_custom_call.1} parent=159 // pred_fallthru
          _
      $region160: #{tpu_custom_call.1} parent=5 // pred_fallthru
        _
    $region6: #{tpu_custom_call.1} parent=1 // loop_footer
      %s42 = sadd.s32 1, %s38
    $region7: #{tpu_custom_call.1} parent=1 // loop_footer_branch
      %37 = sbr.rel target = $region3
    $region8: #{tpu_custom_call.1} parent=1 // loop_exit
      _
    %1988 = vsyncpa [#allocation5], 1
    %s1989 = scalar_lea.sflag [#allocation5], 1
    %1990 = vsyncpa %s1989, 1
    %1991 = vsyncpa [#allocation8], 1
    %s1992 = scalar_lea.sflag [#allocation8], 1
    %1993 = vsyncpa %s1992, 1
    %1994 = vsyncpa [#allocation11], 1
    %1995 = vsyncpa [#allocation14], 1
    %1996 = vsyncpa [#allocation17], 1
    %1997 = vsyncpa [#allocation20], 1
    %1998 = vsyncpa [#allocation23], 1
    %1999 = vsyncpa [#allocation26], 1
    %2000 = vsyncpa [#allocation29], 1
    %2001 = vsyncpa [#allocation6], 1
    %s2002 = scalar_lea.sflag [#allocation6], 1
    %2003 = vsyncpa %s2002, 1

// kernel: tpu_custom_call.1
$region0: #{tpu_custom_call.1}
  #allocation0 [shape = 'u32[]', space=smem, size = 0x4, offset = 0x4, fixed_abs, tag = 'smem constant byte address 0x4 - core index']
  #allocation1 [shape = 'u32[144,128]{1,0:T(1,128)}', space=vmem, size = 0x12000, scoped, tag = 'internal scratch']
  #allocation2 [shape = 'f32[8,32]{1,0:T(8,128)}', space=vmem, size = 0x1000, scoped, tag = 'scratch operand']
  #allocation3 [shape = 'f32[8,32]{1,0:T(8,128)}', space=vmem, size = 0x1000, scoped, tag = 'scratch operand']
  %s0 = inlined_call_operand.hbm [shape: f32[2,8,32], index: 0, kind: input, shape index: {}]
  %s1 = inlined_call_operand.hbm [shape: f32[2,8,32], index: 1, kind: input, shape index: {}]
  %s2 = inlined_call_operand.hbm [shape: f32[32,32], index: 2, kind: input, shape index: {}]
  %s3 = inlined_call_operand.hbm [shape: f32[1,32], index: 3, kind: input, shape index: {}]
  %s4 = inlined_call_operand.hbm [shape: f32[32,64], index: 4, kind: input, shape index: {}]
  %s5 = inlined_call_operand.hbm [shape: f32[1,64], index: 5, kind: input, shape index: {}]
  %s6 = inlined_call_operand.hbm [shape: f32[32,32], index: 6, kind: input, shape index: {}]
  %s7 = inlined_call_operand.hbm [shape: f32[1,32], index: 7, kind: input, shape index: {}]
  %s8 = inlined_call_operand.hbm [shape: f32[1,32], index: 8, kind: input, shape index: {}]
  %s9 = inlined_call_operand.hbm [shape: f32[1,32], index: 9, kind: input, shape index: {}]
  %s10 = inlined_call_operand.hbm [shape: f32[32,64], index: 10, kind: input, shape index: {}]
  %s11 = inlined_call_operand.hbm [shape: f32[1,64], index: 11, kind: input, shape index: {}]
  %s12 = inlined_call_operand.hbm [shape: f32[64,32], index: 12, kind: input, shape index: {}]
  %s13 = inlined_call_operand.hbm [shape: f32[1,32], index: 13, kind: input, shape index: {}]
  %s14 = inlined_call_operand.hbm [shape: f32[1,32], index: 14, kind: input, shape index: {}]
  %s15 = inlined_call_operand.hbm [shape: f32[1,32], index: 15, kind: input, shape index: {}]
  %s16 = inlined_call_operand.hbm [shape: f32[2,8,32], index: 16, kind: output, shape index: {}]
  %s17 = sld [smem:[#allocation0]]
  $region165: #{tpu_custom_call.1} parent=0
    _
  %s19 = ssub.s32 1, %s17
  %s20 = scalar_select 0, %s19, %s17
  $region1: #{tpu_custom_call.1} parent=0
    #allocation4 [shape = 'u8[8192]{0}', space=vmem, size = 0x2000, scoped, tag = 'input window, operand 0']
    #allocation5 [shape = 's32[2]{0}', space=sflag, size = 0x8, scoped, tag = 'scoped memory for tpu_custom_call.1']
    #allocation6 [shape = 's32[2]{0}', space=sflag, size = 0x8, scoped, tag = 'scoped memory for tpu_custom_call.1']
    #allocation7 [shape = 'u8[8192]{0}', space=vmem, size = 0x2000, scoped, tag = 'input window, operand 1']
    #allocation8 [shape = 's32[2]{0}', space=sflag, size = 0x8, scoped, tag = 'scoped memory for tpu_custom_call.1']
    #allocation9 [shape = 'u8[16384]{0}', space=vmem, size = 0x4000, scoped, tag = 'input window, operand 2, single buffered']
    #allocation10 [shape = 'u8[512]{0}', space=vmem, size = 0x400, scoped, tag = 'input window, operand 3, single buffered']
    #allocation11 [shape = 's32[1]{0}', space=sflag, size = 0x4, scoped, tag = 'scoped memory for tpu_custom_call.1']
    #allocation12 [shape = 'u8[16384]{0}', space=vmem, size = 0x4000, scoped, tag = 'input window, operand 4, single buffered']
    #allocation13 [shape = 'u8[512]{0}', space=vmem, size = 0x400, scoped, tag = 'input window, operand 5, single buffered']
    #allocation14 [shape = 's32[1]{0}', space=sflag, size = 0x4, scoped, tag = 'scoped memory for tpu_custom_call.1']
    #allocation15 [shape = 'u8[16384]{0}', space=vmem, size = 0x4000, scoped, tag = 'input window, operand 6, single buffered']
    #allocation16 [shape = 'u8[512]{0}', space=vmem, size = 0x400, scoped, tag = 'input window, operand 7, single buffered']
    #allocation17 [shape = 's32[1]{0}', space=sflag, size = 0x4, scoped, tag = 'scoped memory for tpu_custom_call.1']
    #allocation18 [shape = 'u8[512]{0}', space=vmem, size = 0x400, scoped, tag = 'input window, operand 8, single buffered']
    #allocation19 [shape = 'u8[512]{0}', space=vmem, size = 0x400, scoped, tag = 'input window, operand 9, single buffered']
    #allocation20 [shape = 's32[1]{0}', space=sflag, size = 0x4, scoped, tag = 'scoped memory for tpu_custom_call.1']
    #allocation21 [shape = 'u8[16384]{0}', space=vmem, size = 0x4000, scoped, tag = 'input window, operand 10, single buffered']
    #allocation22 [shape = 'u8[512]{0}', space=vmem, size = 0x400, scoped, tag = 'input window, operand 11, single buffered']
    #allocation23 [shape = 's32[1]{0}', space=sflag, size = 0x4, scoped, tag = 'scoped memory for tpu_custom_call.1']
    #allocation24 [shape = 'u8[32768]{0}', space=vmem, size = 0x8000, scoped, tag = 'input window, operand 12, single buffered']
    #allocation25 [shape = 'u8[512]{0}', space=vmem, size = 0x400, scoped, tag = 'input window, operand 13, single buffered']
    #allocation26 [shape = 's32[1]{0}', space=sflag, size = 0x4, scoped, tag = 'scoped memory for tpu_custom_call.1']
    #allocation27 [shape = 'u8[512]{0}', space=vmem, size = 0x400, scoped, tag = 'input window, operand 14, single buffered']
    #allocation28 [shape = 'u8[512]{0}', space=vmem, size = 0x400, scoped, tag = 'input window, operand 15, single buffered']
    #allocation29 [shape = 's32[1]{0}', space=sflag, size = 0x4, scoped, tag = 'scoped memory for tpu_custom_call.1']
    #allocation30 [shape = 'u8[8192]{0}', space=vmem, size = 0x2000, scoped, tag = 'output window, operand 0']
    %21 = vsyncpa [#allocation5], 0
    %s22 = scalar_lea.sflag [#allocation5], 1
    %23 = vsyncpa %s22, 0
    %24 = vsyncpa [#allocation8], 0
    %s25 = scalar_lea.sflag [#allocation8], 1
    %26 = vsyncpa %s25, 0
    %27 = vsyncpa [#allocation11], 0
    %28 = vsyncpa [#allocation14], 0
    %29 = vsyncpa [#allocation17], 0
    %30 = vsyncpa [#allocation20], 0
    %31 = vsyncpa [#allocation23], 0
    %32 = vsyncpa [#allocation26], 0
    %33 = vsyncpa [#allocation29], 0
    %34 = vsyncpa [#allocation6], 0
    %s35 = scalar_lea.sflag [#allocation6], 1
    %36 = vsyncpa %s35, 0
    loop: start=0, step=1, limit=4
    $region2: #{tpu_custom_call.1} parent=1 // loop_pre_header
      _
    $region3: #{tpu_custom_call.1} parent=1 // loop_header
      %s38 = sphi 0, %s42
      %p39 = scmp.ge.s32.totalorder %s38, 4
      %s45 = sphi 0, %s57
      %s46 = sphi 0, %s53
      %s47 = sphi 0, %s45
      %s48 = sphi 0, %s46
      %s49 = sphi 0, %s47
      %s50 = sphi 0, %s48
      %s62 = sphi 0, %s64
      %s65 = sphi 0, %s62
      %s66 = sphi 0, %s65
      %s82 = sphi 0, %s66
      %s88 = sphi 0, %s90
      %s91 = sphi 0, %s88
      %s92 = sphi 0, %s91
      %s108 = sphi 0, %s92
      %s112 = sphi 0, %s112
      %s114 = sphi 0, %s112
      %s115 = sphi 0, %s114
      %s129 = sphi 0, %s115
      %s133 = sphi 0, %s133
      %s135 = sphi 0, %s133
      %s136 = sphi 0, %s135
      %s150 = sphi 0, %s136
      %s154 = sphi 0, %s154
      %s156 = sphi 0, %s154
      %s157 = sphi 0, %s156
      %s171 = sphi 0, %s157
      %s175 = sphi 0, %s175
      %s177 = sphi 0, %s175
      %s178 = sphi 0, %s177
      %s192 = sphi 0, %s178
      %s196 = sphi 0, %s196
      %s198 = sphi 0, %s196
      %s199 = sphi 0, %s198
      %s213 = sphi 0, %s199
      %s217 = sphi 0, %s217
      %s219 = sphi 0, %s217
      %s220 = sphi 0, %s219
      %s234 = sphi 0, %s220
      %s238 = sphi 0, %s238
      %s240 = sphi 0, %s238
      %s241 = sphi 0, %s240
      %s255 = sphi 0, %s241
      %s259 = sphi 0, %s259
      %s261 = sphi 0, %s259
      %s262 = sphi 0, %s261
      %s276 = sphi 0, %s262
      %s280 = sphi 0, %s280
      %s282 = sphi 0, %s280
      %s283 = sphi 0, %s282
      %s297 = sphi 0, %s283
      %s301 = sphi 0, %s301
      %s303 = sphi 0, %s301
      %s304 = sphi 0, %s303
      %s318 = sphi 0, %s304
      %s322 = sphi 0, %s322
      %s324 = sphi 0, %s322
      %s325 = sphi 0, %s324
      %s339 = sphi 0, %s325
      %s343 = sphi 0, %s343
      %s345 = sphi 0, %s343
      %s346 = sphi 0, %s345
      %s360 = sphi 0, %s346
      %s364 = sphi 0, %s364
      %s366 = sphi 0, %s364
      %s367 = sphi 0, %s366
      %s381 = sphi 0, %s367
      %s385 = sphi 0, %s385
      %s387 = sphi 0, %s385
      %s388 = sphi 0, %s387
      %s402 = sphi 0, %s388
      %s410 = sphi 0, %s412
      %s413 = sphi 0, %s410
      %s414 = sphi 0, %s413
      %s430 = sphi 0, %s414
    $region4: #{tpu_custom_call.1} parent=1 // loop_header_branch
      %41 = sbr.rel (%p39) target = $region8
    $region5: #{tpu_custom_call.1} parent=1 // loop_body
      %s43 = ssub.s32 %s38, 1
      %s44 = ssub.s32 %s38, 2
      %s51 = sadd.s32 1, %s46
      %p52 = scmp.ge.s32.totalorder %s51, 1
      %s53 = scalar_select %p52, 0, %s51
      %s54 = sadd.s32 1, %s45
      %s55 = scalar_select %p52, %s54, %s45
      %p56 = scmp.ge.s32.totalorder %s55, 2
      %s57 = scalar_select %p56, 0, %s55
      %s58 = ssub.s32 %s45, %s57
      %s59 = ssub.s32 %s46, %s53
      %s60 = sor.u32 %s58, %s59
      %p61 = scmp.eq.s32.totalorder %s60, 0
      %s63 = sadd.s32 %s62, 1
      %s64 = scalar_select %p61, %s62, %s63
      %p67 = pneg %p61
      %p68 = scmp.eq.s32.totalorder %s38, 1
      %p69 = por %p67, %p68
      %p70 = scmp.ne.s32.totalorder %s62, %s65
      %p71 = scmp.eq.s32.totalorder %s38, 0
      %p72 = por %p70, %p71
      %p73 = scmp.ne.s32.totalorder %s62, %s65
      %p74 = scmp.eq.s32.totalorder %s43, 1
      %p75 = por %p73, %p74
      %p76 = scmp.ne.s32.totalorder %s65, %s66
      %p77 = scmp.eq.s32.totalorder %s43, 0
      %p78 = por %p76, %p77
      %p79 = scmp.ne.s32.totalorder %s65, %s66
      %p80 = scmp.eq.s32.totalorder %s44, 1
      %p81 = por %p79, %p80
      %p83 = scmp.ne.s32.totalorder %s66, %s82
      %p84 = scmp.eq.s32.totalorder %s44, 0
      %p85 = por %p83, %p84
      %s86 = ssub.s32 %s45, %s57
      %p87 = scmp.eq.s32.totalorder %s86, 0
      %s89 = sadd.s32 %s88, 1
      %s90 = scalar_select %p87, %s88, %s89
      %p93 = pneg %p87
      %p94 = scmp.eq.s32.totalorder %s38, 1
      %p95 = por %p93, %p94
      %p96 = scmp.ne.s32.totalorder %s88, %s91
      %p97 = scmp.eq.s32.totalorder %s38, 0
      %p98 = por %p96, %p97
      %p99 = scmp.ne.s32.totalorder %s88, %s91
      %p100 = scmp.eq.s32.totalorder %s43, 1
      %p101 = por %p99, %p100
      %p102 = scmp.ne.s32.totalorder %s91, %s92
      %p103 = scmp.eq.s32.totalorder %s43, 0
      %p104 = por %p102, %p103
      %p105 = scmp.ne.s32.totalorder %s91, %s92
      %p106 = scmp.eq.s32.totalorder %s44, 1
      %p107 = por %p105, %p106
      %p109 = scmp.ne.s32.totalorder %s92, %s108
      %p110 = scmp.eq.s32.totalorder %s44, 0
      %p111 = por %p109, %p110
      %s113 = sadd.s32 %s112, 1
      %p116 = scmp.eq.s32.totalorder %s38, 1
      %p117 = scmp.ne.s32.totalorder %s112, %s114
      %p118 = scmp.eq.s32.totalorder %s38, 0
      %p119 = por %p117, %p118
      %p120 = scmp.ne.s32.totalorder %s112, %s114
      %p121 = scmp.eq.s32.totalorder %s43, 1
      %p122 = por %p120, %p121
      %p123 = scmp.ne.s32.totalorder %s114, %s115
      %p124 = scmp.eq.s32.totalorder %s43, 0
      %p125 = por %p123, %p124
      %p126 = scmp.ne.s32.totalorder %s114, %s115
      %p127 = scmp.eq.s32.totalorder %s44, 1
      %p128 = por %p126, %p127
      %p130 = scmp.ne.s32.totalorder %s115, %s129
      %p131 = scmp.eq.s32.totalorder %s44, 0
      %p132 = por %p130, %p131
      %s134 = sadd.s32 %s133, 1
      %p137 = scmp.eq.s32.totalorder %s38, 1
      %p138 = scmp.ne.s32.totalorder %s133, %s135
      %p139 = scmp.eq.s32.totalorder %s38, 0
      %p140 = por %p138, %p139
      %p141 = scmp.ne.s32.totalorder %s133, %s135
      %p142 = scmp.eq.s32.totalorder %s43, 1
      %p143 = por %p141, %p142
      %p144 = scmp.ne.s32.totalorder %s135, %s136
      %p145 = scmp.eq.s32.totalorder %s43, 0
      %p146 = por %p144, %p145
      %p147 = scmp.ne.s32.totalorder %s135, %s136
      %p148 = scmp.eq.s32.totalorder %s44, 1
      %p149 = por %p147, %p148
      %p151 = scmp.ne.s32.totalorder %s136, %s150
      %p152 = scmp.eq.s32.totalorder %s44, 0
      %p153 = por %p151, %p152
      %s155 = sadd.s32 %s154, 1
      %p158 = scmp.eq.s32.totalorder %s38, 1
      %p159 = scmp.ne.s32.totalorder %s154, %s156
      %p160 = scmp.eq.s32.totalorder %s38, 0
      %p161 = por %p159, %p160
      %p162 = scmp.ne.s32.totalorder %s154, %s156
      %p163 = scmp.eq.s32.totalorder %s43, 1
      %p164 = por %p162, %p163
      %p165 = scmp.ne.s32.totalorder %s156, %s157
      %p166 = scmp.eq.s32.totalorder %s43, 0
      %p167 = por %p165, %p166
      %p168 = scmp.ne.s32.totalorder %s156, %s157
      %p169 = scmp.eq.s32.totalorder %s44, 1
      %p170 = por %p168, %p169
      %p172 = scmp.ne.s32.totalorder %s157, %s171
      %p173 = scmp.eq.s32.totalorder %s44, 0
      %p174 = por %p172, %p173
      %s176 = sadd.s32 %s175, 1
      %p179 = scmp.eq.s32.totalorder %s38, 1
      %p180 = scmp.ne.s32.totalorder %s175, %s177
      %p181 = scmp.eq.s32.totalorder %s38, 0
      %p182 = por %p180, %p181
      %p183 = scmp.ne.s32.totalorder %s175, %s177
      %p184 = scmp.eq.s32.totalorder %s43, 1
      %p185 = por %p183, %p184
      %p186 = scmp.ne.s32.totalorder %s177, %s178
      %p187 = scmp.eq.s32.totalorder %s43, 0
      %p188 = por %p186, %p187
      %p189 = scmp.ne.s32.totalorder %s177, %s178
      %p190 = scmp.eq.s32.totalorder %s44, 1
      %p191 = por %p189, %p190
      %p193 = scmp.ne.s32.totalorder %s178, %s192
      %p194 = scmp.eq.s32.totalorder %s44, 0
      %p195 = por %p193, %p194
      %s197 = sadd.s32 %s196, 1
      %p200 = scmp.eq.s32.totalorder %s38, 1
      %p201 = scmp.ne.s32.totalorder %s196, %s198
      %p202 = scmp.eq.s32.totalorder %s38, 0
      %p203 = por %p201, %p202
      %p204 = scmp.ne.s32.totalorder %s196, %s198
      %p205 = scmp.eq.s32.totalorder %s43, 1
      %p206 = por %p204, %p205
      %p207 = scmp.ne.s32.totalorder %s198, %s199
      %p208 = scmp.eq.s32.totalorder %s43, 0
      %p209 = por %p207, %p208
      %p210 = scmp.ne.s32.totalorder %s198, %s199
      %p211 = scmp.eq.s32.totalorder %s44, 1
      %p212 = por %p210, %p211
      %p214 = scmp.ne.s32.totalorder %s199, %s213
      %p215 = scmp.eq.s32.totalorder %s44, 0
      %p216 = por %p214, %p215
      %s218 = sadd.s32 %s217, 1
      %p221 = scmp.eq.s32.totalorder %s38, 1
      %p222 = scmp.ne.s32.totalorder %s217, %s219
      %p223 = scmp.eq.s32.totalorder %s38, 0
      %p224 = por %p222, %p223
      %p225 = scmp.ne.s32.totalorder %s217, %s219
      %p226 = scmp.eq.s32.totalorder %s43, 1
      %p227 = por %p225, %p226
      %p228 = scmp.ne.s32.totalorder %s219, %s220
      %p229 = scmp.eq.s32.totalorder %s43, 0
      %p230 = por %p228, %p229
      %p231 = scmp.ne.s32.totalorder %s219, %s220
      %p232 = scmp.eq.s32.totalorder %s44, 1
      %p233 = por %p231, %p232
      %p235 = scmp.ne.s32.totalorder %s220, %s234
      %p236 = scmp.eq.s32.totalorder %s44, 0
      %p237 = por %p235, %p236
      %s239 = sadd.s32 %s238, 1
      %p242 = scmp.eq.s32.totalorder %s38, 1
      %p243 = scmp.ne.s32.totalorder %s238, %s240
      %p244 = scmp.eq.s32.totalorder %s38, 0
      %p245 = por %p243, %p244
      %p246 = scmp.ne.s32.totalorder %s238, %s240
      %p247 = scmp.eq.s32.totalorder %s43, 1
      %p248 = por %p246, %p247
      %p249 = scmp.ne.s32.totalorder %s240, %s241
      %p250 = scmp.eq.s32.totalorder %s43, 0
      %p251 = por %p249, %p250
      %p252 = scmp.ne.s32.totalorder %s240, %s241
      %p253 = scmp.eq.s32.totalorder %s44, 1
      %p254 = por %p252, %p253
      %p256 = scmp.ne.s32.totalorder %s241, %s255
      %p257 = scmp.eq.s32.totalorder %s44, 0
      %p258 = por %p256, %p257
      %s260 = sadd.s32 %s259, 1
      %p263 = scmp.eq.s32.totalorder %s38, 1
      %p264 = scmp.ne.s32.totalorder %s259, %s261
      %p265 = scmp.eq.s32.totalorder %s38, 0
      %p266 = por %p264, %p265
      %p267 = scmp.ne.s32.totalorder %s259, %s261
      %p268 = scmp.eq.s32.totalorder %s43, 1
      %p269 = por %p267, %p268
      %p270 = scmp.ne.s32.totalorder %s261, %s262
      %p271 = scmp.eq.s32.totalorder %s43, 0
      %p272 = por %p270, %p271
      %p273 = scmp.ne.s32.totalorder %s261, %s262
      %p274 = scmp.eq.s32.totalorder %s44, 1
      %p275 = por %p273, %p274
      %p277 = scmp.ne.s32.totalorder %s262, %s276
      %p278 = scmp.eq.s32.totalorder %s44, 0
      %p279 = por %p277, %p278
      %s281 = sadd.s32 %s280, 1
      %p284 = scmp.eq.s32.totalorder %s38, 1
      %p285 = scmp.ne.s32.totalorder %s280, %s282
      %p286 = scmp.eq.s32.totalorder %s38, 0
      %p287 = por %p285, %p286
      %p288 = scmp.ne.s32.totalorder %s280, %s282
      %p289 = scmp.eq.s32.totalorder %s43, 1
      %p290 = por %p288, %p289
      %p291 = scmp.ne.s32.totalorder %s282, %s283
      %p292 = scmp.eq.s32.totalorder %s43, 0
      %p293 = por %p291, %p292
      %p294 = scmp.ne.s32.totalorder %s282, %s283
      %p295 = scmp.eq.s32.totalorder %s44, 1
      %p296 = por %p294, %p295
      %p298 = scmp.ne.s32.totalorder %s283, %s297
      %p299 = scmp.eq.s32.totalorder %s44, 0
      %p300 = por %p298, %p299
      %s302 = sadd.s32 %s301, 1
      %p305 = scmp.eq.s32.totalorder %s38, 1
      %p306 = scmp.ne.s32.totalorder %s301, %s303
      %p307 = scmp.eq.s32.totalorder %s38, 0
      %p308 = por %p306, %p307
      %p309 = scmp.ne.s32.totalorder %s301, %s303
      %p310 = scmp.eq.s32.totalorder %s43, 1
      %p311 = por %p309, %p310
      %p312 = scmp.ne.s32.totalorder %s303, %s304
      %p313 = scmp.eq.s32.totalorder %s43, 0
      %p314 = por %p312, %p313
      %p315 = scmp.ne.s32.totalorder %s303, %s304
      %p316 = scmp.eq.s32.totalorder %s44, 1
      %p317 = por %p315, %p316
      %p319 = scmp.ne.s32.totalorder %s304, %s318
      %p320 = scmp.eq.s32.totalorder %s44, 0
      %p321 = por %p319, %p320
      %s323 = sadd.s32 %s322, 1
      %p326 = scmp.eq.s32.totalorder %s38, 1
      %p327 = scmp.ne.s32.totalorder %s322, %s324
      %p328 = scmp.eq.s32.totalorder %s38, 0
      %p329 = por %p327, %p328
      %p330 = scmp.ne.s32.totalorder %s322, %s324
      %p331 = scmp.eq.s32.totalorder %s43, 1
      %p332 = por %p330, %p331
      %p333 = scmp.ne.s32.totalorder %s324, %s325
      %p334 = scmp.eq.s32.totalorder %s43, 0
      %p335 = por %p333, %p334
      %p336 = scmp.ne.s32.totalorder %s324, %s325
      %p337 = scmp.eq.s32.totalorder %s44, 1
      %p338 = por %p336, %p337
      %p340 = scmp.ne.s32.totalorder %s325, %s339
      %p341 = scmp.eq.s32.totalorder %s44, 0
      %p342 = por %p340, %p341
      %s344 = sadd.s32 %s343, 1
      %p347 = scmp.eq.s32.totalorder %s38, 1
      %p348 = scmp.ne.s32.totalorder %s343, %s345
      %p349 = scmp.eq.s32.totalorder %s38, 0
      %p350 = por %p348, %p349
      %p351 = scmp.ne.s32.totalorder %s343, %s345
      %p352 = scmp.eq.s32.totalorder %s43, 1
      %p353 = por %p351, %p352
      %p354 = scmp.ne.s32.totalorder %s345, %s346
      %p355 = scmp.eq.s32.totalorder %s43, 0
      %p356 = por %p354, %p355
      %p357 = scmp.ne.s32.totalorder %s345, %s346
      %p358 = scmp.eq.s32.totalorder %s44, 1
      %p359 = por %p357, %p358
      %p361 = scmp.ne.s32.totalorder %s346, %s360
      %p362 = scmp.eq.s32.totalorder %s44, 0
      %p363 = por %p361, %p362
      %s365 = sadd.s32 %s364, 1
      %p368 = scmp.eq.s32.totalorder %s38, 1
      %p369 = scmp.ne.s32.totalorder %s364, %s366
      %p370 = scmp.eq.s32.totalorder %s38, 0
      %p371 = por %p369, %p370
      %p372 = scmp.ne.s32.totalorder %s364, %s366
      %p373 = scmp.eq.s32.totalorder %s43, 1
      %p374 = por %p372, %p373
      %p375 = scmp.ne.s32.totalorder %s366, %s367
      %p376 = scmp.eq.s32.totalorder %s43, 0
      %p377 = por %p375, %p376
      %p378 = scmp.ne.s32.totalorder %s366, %s367
      %p379 = scmp.eq.s32.totalorder %s44, 1
      %p380 = por %p378, %p379
      %p382 = scmp.ne.s32.totalorder %s367, %s381
      %p383 = scmp.eq.s32.totalorder %s44, 0
      %p384 = por %p382, %p383
      %s386 = sadd.s32 %s385, 1
      %p389 = scmp.eq.s32.totalorder %s38, 1
      %p390 = scmp.ne.s32.totalorder %s385, %s387
      %p391 = scmp.eq.s32.totalorder %s38, 0
      %p392 = por %p390, %p391
      %p393 = scmp.ne.s32.totalorder %s385, %s387
      %p394 = scmp.eq.s32.totalorder %s43, 1
      %p395 = por %p393, %p394
      %p396 = scmp.ne.s32.totalorder %s387, %s388
      %p397 = scmp.eq.s32.totalorder %s43, 0
      %p398 = por %p396, %p397
      %p399 = scmp.ne.s32.totalorder %s387, %s388
      %p400 = scmp.eq.s32.totalorder %s44, 1
      %p401 = por %p399, %p400
      %p403 = scmp.ne.s32.totalorder %s388, %s402
      %p404 = scmp.eq.s32.totalorder %s44, 0
      %p405 = por %p403, %p404
      %s406 = ssub.s32 %s45, %s57
      %s407 = ssub.s32 %s46, %s53
      %s408 = sor.u32 %s406, %s407
      %p409 = scmp.eq.s32.totalorder %s408, 0
      %s411 = sadd.s32 %s410, 1
      %s412 = scalar_select %p409, %s410, %s411
      %p415 = pneg %p409
      %p416 = scmp.eq.s32.totalorder %s38, 1
      %p417 = por %p415, %p416
      %p418 = scmp.ne.s32.totalorder %s410, %s413
      %p419 = scmp.eq.s32.totalorder %s38, 0
      %p420 = por %p418, %p419
      %p421 = scmp.ne.s32.totalorder %s410, %s413
      %p422 = scmp.eq.s32.totalorder %s43, 1
      %p423 = por %p421, %p422
      %p424 = scmp.ne.s32.totalorder %s413, %s414
      %p425 = scmp.eq.s32.totalorder %s43, 0
      %p426 = por %p424, %p425
      %p427 = scmp.ne.s32.totalorder %s413, %s414
      %p428 = scmp.eq.s32.totalorder %s44, 1
      %p429 = por %p427, %p428
      %p431 = scmp.ne.s32.totalorder %s414, %s430
      %p432 = scmp.eq.s32.totalorder %s44, 0
      %p433 = por %p431, %p432
      %p434 = scmp.le.s32.totalorder 1, %s38
      %p435 = scmp.lt.s32.totalorder %s38, 3
      %p436 = pnand %p434, %p435
      %p437 = pneg %p436
      // Predicated region
      $region9: #{tpu_custom_call.1} parent=5 // pred_check
        _
      $region10: #{tpu_custom_call.1} parent=5 // pred_check_branch
        %439 = sbr.rel (%p436) target = $region12
      $region11: #{tpu_custom_call.1} parent=5 // pred_region
        %s440 = ssub.s32 %s38, 1
        // Predicated region
        $region13: #{tpu_custom_call.1} parent=11 // pred_check
          %p441 = pneg %p125
        $region14: #{tpu_custom_call.1} parent=11 // pred_check_branch
          %443 = sbr.rel (%p441) target = $region16
        $region15: #{tpu_custom_call.1} parent=11 // pred_region
          %s445 = ssub.s32 512, 512
          %446 = vsyncadd [#allocation8], %s445
          %s447 = sshll.u32 [#allocation9], 4
          %s448 = int_to_ptr.vmem [resolvable:$true] %s447
          %453 = dma.hbm_to_vmem [thread:$0]  %s2, 512, %s448, [#allocation8], 128, 128, 8
        $region16: #{tpu_custom_call.1} parent=11 // pred_fallthru
          _
        // Predicated region
        $region17: #{tpu_custom_call.1} parent=11 // pred_check
          %p454 = pneg %p146
        $region18: #{tpu_custom_call.1} parent=11 // pred_check_branch
          %456 = sbr.rel (%p454) target = $region20
        $region19: #{tpu_custom_call.1} parent=11 // pred_region
          %s458 = ssub.s32 16, 16
          %459 = vsyncadd [#allocation11], %s458
          %s461 = sshll.u32 [#allocation10], 4
          %s462 = int_to_ptr.vmem [resolvable:$true] %s461
          %464 = dma.hbm_to_vmem [thread:$0]  %s3, 16, %s462, [#allocation11]
        $region20: #{tpu_custom_call.1} parent=11 // pred_fallthru
          _
        // Predicated region
        $region21: #{tpu_custom_call.1} parent=11 // pred_check
          %p465 = pneg %p167
        $region22: #{tpu_custom_call.1} parent=11 // pred_check_branch
          %467 = sbr.rel (%p465) target = $region24
        $region23: #{tpu_custom_call.1} parent=11 // pred_region
          %s469 = ssub.s32 512, 512
          %470 = vsyncadd [#allocation11], %s469
          %s471 = sshll.u32 [#allocation12], 4
          %s472 = int_to_ptr.vmem [resolvable:$true] %s471
          %477 = dma.hbm_to_vmem [thread:$0]  %s4, 512, %s472, [#allocation11], 128, 128, 8
        $region24: #{tpu_custom_call.1} parent=11 // pred_fallthru
          _
        // Predicated region
        $region25: #{tpu_custom_call.1} parent=11 // pred_check
          %p478 = pneg %p188
        $region26: #{tpu_custom_call.1} parent=11 // pred_check_branch
          %480 = sbr.rel (%p478) target = $region28
        $region27: #{tpu_custom_call.1} parent=11 // pred_region
          %s482 = ssub.s32 16, 16
          %483 = vsyncadd [#allocation14], %s482
          %s485 = sshll.u32 [#allocation13], 4
          %s486 = int_to_ptr.vmem [resolvable:$true] %s485
          %488 = dma.hbm_to_vmem [thread:$0]  %s5, 16, %s486, [#allocation14]
        $region28: #{tpu_custom_call.1} parent=11 // pred_fallthru
          _
        // Predicated region
        $region29: #{tpu_custom_call.1} parent=11 // pred_check
          %p489 = pneg %p209
        $region30: #{tpu_custom_call.1} parent=11 // pred_check_branch
          %491 = sbr.rel (%p489) target = $region32
        $region31: #{tpu_custom_call.1} parent=11 // pred_region
          %s493 = ssub.s32 512, 512
          %494 = vsyncadd [#allocation14], %s493
          %s495 = sshll.u32 [#allocation15], 4
          %s496 = int_to_ptr.vmem [resolvable:$true] %s495
          %501 = dma.hbm_to_vmem [thread:$0]  %s6, 512, %s496, [#allocation14], 128, 128, 8
        $region32: #{tpu_custom_call.1} parent=11 // pred_fallthru
          _
        // Predicated region
        $region33: #{tpu_custom_call.1} parent=11 // pred_check
          %p502 = pneg %p230
        $region34: #{tpu_custom_call.1} parent=11 // pred_check_branch
          %504 = sbr.rel (%p502) target = $region36
        $region35: #{tpu_custom_call.1} parent=11 // pred_region
          %s506 = ssub.s32 16, 16
          %507 = vsyncadd [#allocation17], %s506
          %s509 = sshll.u32 [#allocation16], 4
          %s510 = int_to_ptr.vmem [resolvable:$true] %s509
          %512 = dma.hbm_to_vmem [thread:$0]  %s7, 16, %s510, [#allocation17]
        $region36: #{tpu_custom_call.1} parent=11 // pred_fallthru
          _
        // Predicated region
        $region37: #{tpu_custom_call.1} parent=11 // pred_check
          %p513 = pneg %p251
        $region38: #{tpu_custom_call.1} parent=11 // pred_check_branch
          %515 = sbr.rel (%p513) target = $region40
        $region39: #{tpu_custom_call.1} parent=11 // pred_region
          %s517 = ssub.s32 16, 16
          %518 = vsyncadd [#allocation17], %s517
          %s520 = sshll.u32 [#allocation18], 4
          %s521 = int_to_ptr.vmem [resolvable:$true] %s520
          %523 = dma.hbm_to_vmem [thread:$0]  %s8, 16, %s521, [#allocation17]
        $region40: #{tpu_custom_call.1} parent=11 // pred_fallthru
          _
        // Predicated region
        $region41: #{tpu_custom_call.1} parent=11 // pred_check
          %p524 = pneg %p272
        $region42: #{tpu_custom_call.1} parent=11 // pred_check_branch
          %526 = sbr.rel (%p524) target = $region44
        $region43: #{tpu_custom_call.1} parent=11 // pred_region
          %s528 = ssub.s32 16, 16
          %529 = vsyncadd [#allocation20], %s528
          %s531 = sshll.u32 [#allocation19], 4
          %s532 = int_to_ptr.vmem [resolvable:$true] %s531
          %534 = dma.hbm_to_vmem [thread:$0]  %s9, 16, %s532, [#allocation20]
        $region44: #{tpu_custom_call.1} parent=11 // pred_fallthru
          _
        // Predicated region
        $region45: #{tpu_custom_call.1} parent=11 // pred_check
          %p535 = pneg %p293
        $region46: #{tpu_custom_call.1} parent=11 // pred_check_branch
          %537 = sbr.rel (%p535) target = $region48
        $region47: #{tpu_custom_call.1} parent=11 // pred_region
          %s539 = ssub.s32 512, 512
          %540 = vsyncadd [#allocation20], %s539
          %s541 = sshll.u32 [#allocation21], 4
          %s542 = int_to_ptr.vmem [resolvable:$true] %s541
          %547 = dma.hbm_to_vmem [thread:$0]  %s10, 512, %s542, [#allocation20], 128, 128, 8
        $region48: #{tpu_custom_call.1} parent=11 // pred_fallthru
          _
        // Predicated region
        $region49: #{tpu_custom_call.1} parent=11 // pred_check
          %p548 = pneg %p314
        $region50: #{tpu_custom_call.1} parent=11 // pred_check_branch
          %550 = sbr.rel (%p548) target = $region52
        $region51: #{tpu_custom_call.1} parent=11 // pred_region
          %s552 = ssub.s32 16, 16
          %553 = vsyncadd [#allocation23], %s552
          %s555 = sshll.u32 [#allocation22], 4
          %s556 = int_to_ptr.vmem [resolvable:$true] %s555
          %558 = dma.hbm_to_vmem [thread:$0]  %s11, 16, %s556, [#allocation23]
        $region52: #{tpu_custom_call.1} parent=11 // pred_fallthru
          _
        // Predicated region
        $region53: #{tpu_custom_call.1} parent=11 // pred_check
          %p559 = pneg %p335
        $region54: #{tpu_custom_call.1} parent=11 // pred_check_branch
          %561 = sbr.rel (%p559) target = $region56
        $region55: #{tpu_custom_call.1} parent=11 // pred_region
          %s563 = ssub.s32 1024, 1024
          %564 = vsyncadd [#allocation23], %s563
          %s565 = sshll.u32 [#allocation24], 4
          %s566 = int_to_ptr.vmem [resolvable:$true] %s565
          %571 = dma.hbm_to_vmem [thread:$0]  %s12, 1024, %s566, [#allocation23], 128, 128, 8
        $region56: #{tpu_custom_call.1} parent=11 // pred_fallthru
          _
        // Predicated region
        $region57: #{tpu_custom_call.1} parent=11 // pred_check
          %p572 = pneg %p356
        $region58: #{tpu_custom_call.1} parent=11 // pred_check_branch
          %574 = sbr.rel (%p572) target = $region60
        $region59: #{tpu_custom_call.1} parent=11 // pred_region
          %s576 = ssub.s32 16, 16
          %577 = vsyncadd [#allocation26], %s576
          %s579 = sshll.u32 [#allocation25], 4
          %s580 = int_to_ptr.vmem [resolvable:$true] %s579
          %582 = dma.hbm_to_vmem [thread:$0]  %s13, 16, %s580, [#allocation26]
        $region60: #{tpu_custom_call.1} parent=11 // pred_fallthru
          _
        // Predicated region
        $region61: #{tpu_custom_call.1} parent=11 // pred_check
          %p583 = pneg %p377
        $region62: #{tpu_custom_call.1} parent=11 // pred_check_branch
          %585 = sbr.rel (%p583) target = $region64
        $region63: #{tpu_custom_call.1} parent=11 // pred_region
          %s587 = ssub.s32 16, 16
          %588 = vsyncadd [#allocation26], %s587
          %s590 = sshll.u32 [#allocation27], 4
          %s591 = int_to_ptr.vmem [resolvable:$true] %s590
          %593 = dma.hbm_to_vmem [thread:$0]  %s14, 16, %s591, [#allocation26]
        $region64: #{tpu_custom_call.1} parent=11 // pred_fallthru
          _
        // Predicated region
        $region65: #{tpu_custom_call.1} parent=11 // pred_check
          %p594 = pneg %p398
        $region66: #{tpu_custom_call.1} parent=11 // pred_check_branch
          %596 = sbr.rel (%p594) target = $region68
        $region67: #{tpu_custom_call.1} parent=11 // pred_region
          %s598 = ssub.s32 16, 16
          %599 = vsyncadd [#allocation29], %s598
          %s601 = sshll.u32 [#allocation28], 4
          %s602 = int_to_ptr.vmem [resolvable:$true] %s601
          %604 = dma.hbm_to_vmem [thread:$0]  %s15, 16, %s602, [#allocation29]
        $region68: #{tpu_custom_call.1} parent=11 // pred_fallthru
          _
      $region12: #{tpu_custom_call.1} parent=5 // pred_fallthru
        _
      %p605 = scmp.lt.s32.totalorder %s38, 2
      // Predicated region
      $region69: #{tpu_custom_call.1} parent=5 // pred_check
        %p606 = pneg %p605
      $region70: #{tpu_custom_call.1} parent=5 // pred_check_branch
        %608 = sbr.rel (%p606) target = $region72
      $region71: #{tpu_custom_call.1} parent=5 // pred_region
        // Predicated region
        $region73: #{tpu_custom_call.1} parent=71 // pred_check
          %p609 = pneg %p72
        $region74: #{tpu_custom_call.1} parent=71 // pred_check_branch
          %611 = sbr.rel (%p609) target = $region76
        $region75: #{tpu_custom_call.1} parent=71 // pred_region
          %s612 = sand.u32 %s62, 1
          %s613 = scalar_lea.sflag [#allocation5], %s612
          %s614 = sand.u32 %s62, 1
          %s615 = smul.addr %s614, 8
          %s616 = scalar_lea.vmem [#allocation4], %s615
          %s618 = ssub.s32 128, 128
          %619 = vsyncadd %s613, %s618
          %s620 = sadd.s32 %s46, %s45
          %s621 = smul.addr %s620, 128
          %s622 = scalar_lea.hbm %s0, %s621
          %s624 = sshll.u32 %s616, 4
          %s625 = int_to_ptr.vmem [resolvable:$true] %s624
          %627 = dma.hbm_to_vmem [thread:$0]  %s622, 128, %s625, %s613
        $region76: #{tpu_custom_call.1} parent=71 // pred_fallthru
          _
        // Predicated region
        $region77: #{tpu_custom_call.1} parent=71 // pred_check
          %p628 = pneg %p98
        $region78: #{tpu_custom_call.1} parent=71 // pred_check_branch
          %630 = sbr.rel (%p628) target = $region80
        $region79: #{tpu_custom_call.1} parent=71 // pred_region
          %s631 = sand.u32 %s38, 1
          %s632 = scalar_lea.sflag [#allocation8], %s631
          %s633 = sand.u32 %s88, 1
          %s634 = smul.addr %s633, 8
          %s635 = scalar_lea.vmem [#allocation7], %s634
          %s637 = ssub.s32 128, 128
          %638 = vsyncadd %s632, %s637
          %s639 = smul.addr %s45, 128
          %s640 = scalar_lea.hbm %s1, %s639
          %s642 = sshll.u32 %s635, 4
          %s643 = int_to_ptr.vmem [resolvable:$true] %s642
          %645 = dma.hbm_to_vmem [thread:$0]  %s640, 128, %s643, %s632
        $region80: #{tpu_custom_call.1} parent=71 // pred_fallthru
          _
      $region72: #{tpu_custom_call.1} parent=5 // pred_fallthru
        _
      %p646 = scmp.le.s32.totalorder 1, %s38
      %p647 = scmp.lt.s32.totalorder %s38, 3
      %p648 = pnand %p646, %p647
      %p649 = pneg %p648
      // Predicated region
      $region81: #{tpu_custom_call.1} parent=5 // pred_check
        _
      $region82: #{tpu_custom_call.1} parent=5 // pred_check_branch
        %651 = sbr.rel (%p648) target = $region84
      $region83: #{tpu_custom_call.1} parent=5 // pred_region
        %s652 = ssub.s32 %s38, 1
        %s653 = sand.u32 %s65, 1
        %s654 = scalar_lea.sflag [#allocation5], %s653
        %s655 = sand.u32 %s65, 1
        %s656 = smul.addr %s655, 8
        %s657 = scalar_lea.vmem [#allocation4], %s656
        // Predicated region
        $region85: #{tpu_custom_call.1} parent=83 // pred_check
          %p658 = pneg %p78
        $region86: #{tpu_custom_call.1} parent=83 // pred_check_branch
          %660 = sbr.rel (%p658) target = $region88
        $region87: #{tpu_custom_call.1} parent=83 // pred_region
          %661 = dma.done %s654, 128
        $region88: #{tpu_custom_call.1} parent=83 // pred_fallthru
          _
        %s662 = sand.u32 %s43, 1
        %s663 = scalar_lea.sflag [#allocation8], %s662
        %s664 = sand.u32 %s91, 1
        %s665 = smul.addr %s664, 8
        %s666 = scalar_lea.vmem [#allocation7], %s665
        // Predicated region
        $region89: #{tpu_custom_call.1} parent=83 // pred_check
          %p667 = pneg %p104
        $region90: #{tpu_custom_call.1} parent=83 // pred_check_branch
          %669 = sbr.rel (%p667) target = $region92
        $region91: #{tpu_custom_call.1} parent=83 // pred_region
          %670 = dma.done %s663, 128
        $region92: #{tpu_custom_call.1} parent=83 // pred_fallthru
          _
        // Predicated region
        $region93: #{tpu_custom_call.1} parent=83 // pred_check
          %p671 = pneg %p125
        $region94: #{tpu_custom_call.1} parent=83 // pred_check_branch
          %673 = sbr.rel (%p671) target = $region96
        $region95: #{tpu_custom_call.1} parent=83 // pred_region
          %674 = dma.done [#allocation8], 512
        $region96: #{tpu_custom_call.1} parent=83 // pred_fallthru
          _
        // Predicated region
        $region97: #{tpu_custom_call.1} parent=83 // pred_check
          %p675 = pneg %p146
        $region98: #{tpu_custom_call.1} parent=83 // pred_check_branch
          %677 = sbr.rel (%p675) target = $region100
        $region99: #{tpu_custom_call.1} parent=83 // pred_region
          %678 = dma.done [#allocation11], 16
        $region100: #{tpu_custom_call.1} parent=83 // pred_fallthru
          _
        // Predicated region
        $region101: #{tpu_custom_call.1} parent=83 // pred_check
          %p679 = pneg %p167
        $region102: #{tpu_custom_call.1} parent=83 // pred_check_branch
          %681 = sbr.rel (%p679) target = $region104
        $region103: #{tpu_custom_call.1} parent=83 // pred_region
          %682 = dma.done [#allocation11], 512
        $region104: #{tpu_custom_call.1} parent=83 // pred_fallthru
          _
        // Predicated region
        $region105: #{tpu_custom_call.1} parent=83 // pred_check
          %p683 = pneg %p188
        $region106: #{tpu_custom_call.1} parent=83 // pred_check_branch
          %685 = sbr.rel (%p683) target = $region108
        $region107: #{tpu_custom_call.1} parent=83 // pred_region
          %686 = dma.done [#allocation14], 16
        $region108: #{tpu_custom_call.1} parent=83 // pred_fallthru
          _
        // Predicated region
        $region109: #{tpu_custom_call.1} parent=83 // pred_check
          %p687 = pneg %p209
        $region110: #{tpu_custom_call.1} parent=83 // pred_check_branch
          %689 = sbr.rel (%p687) target = $region112
        $region111: #{tpu_custom_call.1} parent=83 // pred_region
          %690 = dma.done [#allocation14], 512
        $region112: #{tpu_custom_call.1} parent=83 // pred_fallthru
          _
        // Predicated region
        $region113: #{tpu_custom_call.1} parent=83 // pred_check
          %p691 = pneg %p230
        $region114: #{tpu_custom_call.1} parent=83 // pred_check_branch
          %693 = sbr.rel (%p691) target = $region116
        $region115: #{tpu_custom_call.1} parent=83 // pred_region
          %694 = dma.done [#allocation17], 16
        $region116: #{tpu_custom_call.1} parent=83 // pred_fallthru
          _
        // Predicated region
        $region117: #{tpu_custom_call.1} parent=83 // pred_check
          %p695 = pneg %p251
        $region118: #{tpu_custom_call.1} parent=83 // pred_check_branch
          %697 = sbr.rel (%p695) target = $region120
        $region119: #{tpu_custom_call.1} parent=83 // pred_region
          %698 = dma.done [#allocation17], 16
        $region120: #{tpu_custom_call.1} parent=83 // pred_fallthru
          _
        // Predicated region
        $region121: #{tpu_custom_call.1} parent=83 // pred_check
          %p699 = pneg %p272
        $region122: #{tpu_custom_call.1} parent=83 // pred_check_branch
          %701 = sbr.rel (%p699) target = $region124
        $region123: #{tpu_custom_call.1} parent=83 // pred_region
          %702 = dma.done [#allocation20], 16
        $region124: #{tpu_custom_call.1} parent=83 // pred_fallthru
          _
        // Predicated region
        $region125: #{tpu_custom_call.1} parent=83 // pred_check
          %p703 = pneg %p293
        $region126: #{tpu_custom_call.1} parent=83 // pred_check_branch
          %705 = sbr.rel (%p703) target = $region128
        $region127: #{tpu_custom_call.1} parent=83 // pred_region
          %706 = dma.done [#allocation20], 512
        $region128: #{tpu_custom_call.1} parent=83 // pred_fallthru
          _
        // Predicated region
        $region129: #{tpu_custom_call.1} parent=83 // pred_check
          %p707 = pneg %p314
        $region130: #{tpu_custom_call.1} parent=83 // pred_check_branch
          %709 = sbr.rel (%p707) target = $region132
        $region131: #{tpu_custom_call.1} parent=83 // pred_region
          %710 = dma.done [#allocation23], 16
        $region132: #{tpu_custom_call.1} parent=83 // pred_fallthru
          _
        // Predicated region
        $region133: #{tpu_custom_call.1} parent=83 // pred_check
          %p711 = pneg %p335
        $region134: #{tpu_custom_call.1} parent=83 // pred_check_branch
          %713 = sbr.rel (%p711) target = $region136
        $region135: #{tpu_custom_call.1} parent=83 // pred_region
          %714 = dma.done [#allocation23], 1024
        $region136: #{tpu_custom_call.1} parent=83 // pred_fallthru
          _
        // Predicated region
        $region137: #{tpu_custom_call.1} parent=83 // pred_check
          %p715 = pneg %p356
        $region138: #{tpu_custom_call.1} parent=83 // pred_check_branch
          %717 = sbr.rel (%p715) target = $region140
        $region139: #{tpu_custom_call.1} parent=83 // pred_region
          %718 = dma.done [#allocation26], 16
        $region140: #{tpu_custom_call.1} parent=83 // pred_fallthru
          _
        // Predicated region
        $region141: #{tpu_custom_call.1} parent=83 // pred_check
          %p719 = pneg %p377
        $region142: #{tpu_custom_call.1} parent=83 // pred_check_branch
          %721 = sbr.rel (%p719) target = $region144
        $region143: #{tpu_custom_call.1} parent=83 // pred_region
          %722 = dma.done [#allocation26], 16
        $region144: #{tpu_custom_call.1} parent=83 // pred_fallthru
          _
        // Predicated region
        $region145: #{tpu_custom_call.1} parent=83 // pred_check
          %p723 = pneg %p398
        $region146: #{tpu_custom_call.1} parent=83 // pred_check_branch
          %725 = sbr.rel (%p723) target = $region148
        $region147: #{tpu_custom_call.1} parent=83 // pred_region
          %726 = dma.done [#allocation29], 16
        $region148: #{tpu_custom_call.1} parent=83 // pred_fallthru
          _
        %s727 = sand.u32 %s65, 1
        %s728 = scalar_lea.sflag [#allocation5], %s727
        %s729 = sand.u32 %s65, 1
        %s730 = smul.addr %s729, 8
        %s731 = scalar_lea.vmem [#allocation4], %s730
        %p732 = pneg %p78
        %p733 = pneg %p75
        %s734 = sand.u32 %s43, 1
        %s735 = scalar_lea.sflag [#allocation8], %s734
        %s736 = sand.u32 %s91, 1
        %s737 = smul.addr %s736, 8
        %s738 = scalar_lea.vmem [#allocation7], %s737
        %p739 = pneg %p104
        %p740 = pneg %p101
        %p741 = pneg %p125
        %p742 = pneg %p122
        %p743 = pneg %p146
        %p744 = pneg %p143
        %p745 = pneg %p167
        %p746 = pneg %p164
        %p747 = pneg %p188
        %p748 = pneg %p185
        %p749 = pneg %p209
        %p750 = pneg %p206
        %p751 = pneg %p230
        %p752 = pneg %p227
        %p753 = pneg %p251
        %p754 = pneg %p248
        %p755 = pneg %p272
        %p756 = pneg %p269
        %p757 = pneg %p293
        %p758 = pneg %p290
        %p759 = pneg %p314
        %p760 = pneg %p311
        %p761 = pneg %p335
        %p762 = pneg %p332
        %p763 = pneg %p356
        %p764 = pneg %p353
        %p765 = pneg %p377
        %p766 = pneg %p374
        %p767 = pneg %p398
        %p768 = pneg %p395
        %p769 = pneg %p426
        %p770 = pneg %p423
        %s771 = sand.u32 %s413, 1
        %s772 = scalar_lea.sflag [#allocation6], %s771
        %s773 = sand.u32 %s413, 1
        %s774 = smul.addr %s773, 8
        %s775 = scalar_lea.vmem [#allocation30], %s774
        %p776 = scmp.eq.s32.totalorder %s48, 0
        // Predicated region
        $region149: #{tpu_custom_call.1} parent=83 // pred_check
          %p777 = pneg %p776
        $region150: #{tpu_custom_call.1} parent=83 // pred_check_branch
          %779 = sbr.rel (%p777) target = $region152
        $region151: #{tpu_custom_call.1} parent=83 // pred_region
          %v780 = vld [vmem:[%s666] sm:$0xff]
          %v781 = vld [vmem:[#allocation12] sm:$0xff]
          %v782 = vld [vmem:[#allocation12 + $0x8] sm:$0xff]
          %v783 = vld [vmem:[#allocation12 + $0x10] sm:$0xff]
          %v784 = vld [vmem:[#allocation12 + $0x18] sm:$0xff]
          %v785 = vld [vmem:[#allocation13] sm:$0x1]
          %v787 = vlaneseq
          %v788 = vshrl.u32 %v787, 7
          %v789 = vsub.s32 0, %v788
          %v790 = vrot.slane %v785, %v789
          %vm792 = vcmask 261120
          %v794 = vsel %vm792, %v780, 0
          %796 = vmatprep.subr.mxu0 0.0
          %797 = vmatpush1.msra.mxu0 %v781
          %798 = vmatprep.subr.mxu0 0.0
          %799 = vmatpush1.msra.mxu0 %v782
          %800 = vmatprep.subr.mxu0 0.0
          %801 = vmatpush1.msra.mxu0 %v783
          %802 = vmatprep.subr.mxu0 0.0
          %803 = vmatpush1.msra.mxu0 %v784
          %804 = vmatprep.subr.mxu0 0.0
          %805 = vmatpush1.msra.mxu0 0.0
          %806 = vmatprep.subr.mxu0 0.0
          %807 = vmatpush1.msra.mxu0 0.0
          %808 = vmatprep.subr.mxu0 0.0
          %809 = vmatpush1.msra.mxu0 0.0
          %810 = vmatprep.subr.mxu0 0.0
          %811 = vmatpush1.msra.mxu0 0.0
          %812 = vmatprep.subr.mxu0 0.0
          %813 = vmatpush1.msra.mxu0 0.0
          %814 = vmatprep.subr.mxu0 0.0
          %815 = vmatpush1.msra.mxu0 0.0
          %816 = vmatprep.subr.mxu0 0.0
          %817 = vmatpush1.msra.mxu0 0.0
          %818 = vmatprep.subr.mxu0 0.0
          %819 = vmatpush1.msra.mxu0 0.0
          %820 = vmatprep.subr.mxu0 0.0
          %821 = vmatpush1.msra.mxu0 0.0
          %822 = vmatprep.subr.mxu0 0.0
          %823 = vmatpush1.msra.mxu0 0.0
          %824 = vmatprep.subr.mxu0 0.0
          %825 = vmatpush1.msra.mxu0 0.0
          %826 = vmatprep.subr.mxu0 0.0
          %827 = vmatpush1.msra.mxu0 0.0
          %828 = vmatprep.subr.mxu0 0.0
          %829 = vmatpush1.msra.mxu0 0.0
          %830 = vmatprep.subr.mxu0 0.0
          %831 = vmatpush1.msra.mxu0 0.0
          %832 = vmatprep.subr.mxu0 0.0
          %833 = vmatpush1.msra.mxu0 0.0
          %834 = vmatprep.subr.mxu0 0.0
          %835 = vmatpush1.msra.mxu0 0.0
          %836 = vmatprep.subr.mxu0 0.0
          %837 = vmatpush1.msra.mxu0 0.0
          %838 = vmatprep.subr.mxu0 0.0
          %839 = vmatpush1.msra.mxu0 0.0
          %840 = vmatprep.subr.mxu0 0.0
          %841 = vmatpush1.msra.mxu0 0.0
          %842 = vmatprep.subr.mxu0 0.0
          %843 = vmatpush1.msra.mxu0 0.0
          %844 = vmatprep.subr.mxu0 0.0
          %845 = vmatpush1.msra.mxu0 0.0
          %846 = vmatprep.subr.mxu0 0.0
          %847 = vmatpush1.msra.mxu0 0.0
          %848 = vmatprep.subr.mxu0 0.0
          %849 = vmatpush1.msra.mxu0 0.0
          %850 = vmatprep.subr.mxu0 0.0
          %851 = vmatpush1.msra.mxu0 0.0
          %852 = vmatprep.subr.mxu0 0.0
          %853 = vmatpush1.msra.mxu0 0.0
          %854 = vmatprep.subr.mxu0 0.0
          %855 = vmatpush1.msra.mxu0 0.0
          %856 = vmatprep.subr.mxu0 0.0
          %857 = vmatpush1.msra.mxu0 0.0
          %858 = vmatprep.subr.mxu0 0.0
          %859 = vmatpush1.msra.mxu0 0.0
          %860 = vmatprep.mubr.f32.mxu0 0.0
          %861 = vmatmul.mubr.f32.gmra.mrb[0].mxu0 %v794
          %v862 = vpop.f32.mrb[0].mxu0
          %v863 = vadd.f32 %v790, %v862
          %v864 = vpop.f32.mrb[0].mxu0
          %865 = vdwg.mxu0
          %866 = vst.msk [vmem:[#allocation2] sm:$0xff] %vm792, %v863
          %868 = vrot.lane.b32.xlu0 %v863, 96
          %v869 = vpop.permute.xlu0 %868
          %871 = vst.msk [vmem:[#allocation3] sm:$0xff] %vm792, %v869
        $region152: #{tpu_custom_call.1} parent=83 // pred_fallthru
          _
        %v872 = vld [vmem:[%s657] sm:$0xff]
        %v873 = vld [vmem:[#allocation9] sm:$0xff]
        %v874 = vld [vmem:[#allocation9 + $0x8] sm:$0xff]
        %v875 = vld [vmem:[#allocation9 + $0x10] sm:$0xff]
        %v876 = vld [vmem:[#allocation9 + $0x18] sm:$0xff]
        %v877 = vld [vmem:[#allocation10] sm:$0x1]
        %v879 = vlaneseq
        %v880 = vshrl.u32 %v879, 7
        %v881 = vsub.s32 0, %v880
        %v882 = vrot.slane %v877, %v881
        %vm884 = vcmask 261120
        %v886 = vsel %vm884, %v872, 0
        %888 = vmatprep.subr.mxu0 0.0
        %889 = vmatpush1.msra.mxu0 %v873
        %890 = vmatprep.subr.mxu0 0.0
        %891 = vmatpush1.msra.mxu0 %v874
        %892 = vmatprep.subr.mxu0 0.0
        %893 = vmatpush1.msra.mxu0 %v875
        %894 = vmatprep.subr.mxu0 0.0
        %895 = vmatpush1.msra.mxu0 %v876
        %896 = vmatprep.subr.mxu0 0.0
        %897 = vmatpush1.msra.mxu0 0.0
        %898 = vmatprep.subr.mxu0 0.0
        %899 = vmatpush1.msra.mxu0 0.0
        %900 = vmatprep.subr.mxu0 0.0
        %901 = vmatpush1.msra.mxu0 0.0
        %902 = vmatprep.subr.mxu0 0.0
        %903 = vmatpush1.msra.mxu0 0.0
        %904 = vmatprep.subr.mxu0 0.0
        %905 = vmatpush1.msra.mxu0 0.0
        %906 = vmatprep.subr.mxu0 0.0
        %907 = vmatpush1.msra.mxu0 0.0
        %908 = vmatprep.subr.mxu0 0.0
        %909 = vmatpush1.msra.mxu0 0.0
        %910 = vmatprep.subr.mxu0 0.0
        %911 = vmatpush1.msra.mxu0 0.0
        %912 = vmatprep.subr.mxu0 0.0
        %913 = vmatpush1.msra.mxu0 0.0
        %914 = vmatprep.subr.mxu0 0.0
        %915 = vmatpush1.msra.mxu0 0.0
        %916 = vmatprep.subr.mxu0 0.0
        %917 = vmatpush1.msra.mxu0 0.0
        %918 = vmatprep.subr.mxu0 0.0
        %919 = vmatpush1.msra.mxu0 0.0
        %920 = vmatprep.subr.mxu0 0.0
        %921 = vmatpush1.msra.mxu0 0.0
        %922 = vmatprep.subr.mxu0 0.0
        %923 = vmatpush1.msra.mxu0 0.0
        %924 = vmatprep.subr.mxu0 0.0
        %925 = vmatpush1.msra.mxu0 0.0
        %926 = vmatprep.subr.mxu0 0.0
        %927 = vmatpush1.msra.mxu0 0.0
        %928 = vmatprep.subr.mxu0 0.0
        %929 = vmatpush1.msra.mxu0 0.0
        %930 = vmatprep.subr.mxu0 0.0
        %931 = vmatpush1.msra.mxu0 0.0
        %932 = vmatprep.subr.mxu0 0.0
        %933 = vmatpush1.msra.mxu0 0.0
        %934 = vmatprep.subr.mxu0 0.0
        %935 = vmatpush1.msra.mxu0 0.0
        %936 = vmatprep.subr.mxu0 0.0
        %937 = vmatpush1.msra.mxu0 0.0
        %938 = vmatprep.subr.mxu0 0.0
        %939 = vmatpush1.msra.mxu0 0.0
        %940 = vmatprep.subr.mxu0 0.0
        %941 = vmatpush1.msra.mxu0 0.0
        %942 = vmatprep.subr.mxu0 0.0
        %943 = vmatpush1.msra.mxu0 0.0
        %944 = vmatprep.subr.mxu0 0.0
        %945 = vmatpush1.msra.mxu0 0.0
        %946 = vmatprep.subr.mxu0 0.0
        %947 = vmatpush1.msra.mxu0 0.0
        %948 = vmatprep.subr.mxu0 0.0
        %949 = vmatpush1.msra.mxu0 0.0
        %950 = vmatprep.subr.mxu0 0.0
        %951 = vmatpush1.msra.mxu0 0.0
        %952 = vmatprep.mubr.f32.mxu0 0.0
        %953 = vmatmul.mubr.f32.gmra.mrb[0].mxu0 %v886
        %v954 = vpop.f32.mrb[0].mxu0
        %v955 = vadd.f32 %v882, %v954
        %v956 = vpop.f32.mrb[0].mxu0
        %957 = vdwg.mxu0
        %v958 = vmul.f32 %v955, 0.35355338
        %v959 = vld [vmem:[#allocation2] sm:$0xff]
        %v960 = vld [vmem:[#allocation3] sm:$0xff]
        %vm961 = vcmask 64512
        %v963 = vsel %vm961, %v958, 0
        %v966 = vsel %vm961, %v959, 0
        %968 = vmatprep.subr.mxu0 0.0
        %969 = vmatpush1.xpose.msra.mxu0 %v966
        %970 = vmatprep.subr.mxu0 0.0
        %971 = vmatpush1.xpose.msra.mxu0 0.0
        %972 = vmatprep.subr.mxu0 0.0
        %973 = vmatpush1.xpose.msra.mxu0 0.0
        %974 = vmatprep.subr.mxu0 0.0
        %975 = vmatpush1.xpose.msra.mxu0 0.0
        %976 = vmatprep.subr.mxu0 0.0
        %977 = vmatpush1.xpose.msra.mxu0 0.0
        %978 = vmatprep.subr.mxu0 0.0
        %979 = vmatpush1.xpose.msra.mxu0 0.0
        %980 = vmatprep.subr.mxu0 0.0
        %981 = vmatpush1.xpose.msra.mxu0 0.0
        %982 = vmatprep.subr.mxu0 0.0
        %983 = vmatpush1.xpose.msra.mxu0 0.0
        %984 = vmatprep.subr.mxu0 0.0
        %985 = vmatpush1.xpose.msra.mxu0 0.0
        %986 = vmatprep.subr.mxu0 0.0
        %987 = vmatpush1.xpose.msra.mxu0 0.0
        %988 = vmatprep.subr.mxu0 0.0
        %989 = vmatpush1.xpose.msra.mxu0 0.0
        %990 = vmatprep.subr.mxu0 0.0
        %991 = vmatpush1.xpose.msra.mxu0 0.0
        %992 = vmatprep.subr.mxu0 0.0
        %993 = vmatpush1.xpose.msra.mxu0 0.0
        %994 = vmatprep.subr.mxu0 0.0
        %995 = vmatpush1.xpose.msra.mxu0 0.0
        %996 = vmatprep.subr.mxu0 0.0
        %997 = vmatpush1.xpose.msra.mxu0 0.0
        %998 = vmatprep.subr.mxu0 0.0
        %999 = vmatpush1.xpose.msra.mxu0 0.0
        %1000 = vmatprep.subr.mxu0 0.0
        %1001 = vmatpush1.xpose.msra.mxu0 0.0
        %1002 = vmatprep.subr.mxu0 0.0
        %1003 = vmatpush1.xpose.msra.mxu0 0.0
        %1004 = vmatprep.subr.mxu0 0.0
        %1005 = vmatpush1.xpose.msra.mxu0 0.0
        %1006 = vmatprep.subr.mxu0 0.0
        %1007 = vmatpush1.xpose.msra.mxu0 0.0
        %1008 = vmatprep.subr.mxu0 0.0
        %1009 = vmatpush1.xpose.msra.mxu0 0.0
        %1010 = vmatprep.subr.mxu0 0.0
        %1011 = vmatpush1.xpose.msra.mxu0 0.0
        %1012 = vmatprep.subr.mxu0 0.0
        %1013 = vmatpush1.xpose.msra.mxu0 0.0
        %1014 = vmatprep.subr.mxu0 0.0
        %1015 = vmatpush1.xpose.msra.mxu0 0.0
        %1016 = vmatprep.subr.mxu0 0.0
        %1017 = vmatpush1.xpose.msra.mxu0 0.0
        %1018 = vmatprep.subr.mxu0 0.0
        %1019 = vmatpush1.xpose.msra.mxu0 0.0
        %1020 = vmatprep.subr.mxu0 0.0
        %1021 = vmatpush1.xpose.msra.mxu0 0.0
        %1022 = vmatprep.subr.mxu0 0.0
        %1023 = vmatpush1.xpose.msra.mxu0 0.0
        %1024 = vmatprep.subr.mxu0 0.0
        %1025 = vmatpush1.xpose.msra.mxu0 0.0
        %1026 = vmatprep.subr.mxu0 0.0
        %1027 = vmatpush1.xpose.msra.mxu0 0.0
        %1028 = vmatprep.subr.mxu0 0.0
        %1029 = vmatpush1.xpose.msra.mxu0 0.0
        %1030 = vmatprep.subr.mxu0 0.0
        %1031 = vmatpush1.xpose.msra.mxu0 0.0
        %1032 = vmatprep.mubr.f32.mxu0 0.0
        %1033 = vmatmul.mubr.f32.gmra.mrb[0].mxu0 %v963
        %v1034 = vpop.f32.mrb[0].mxu0
        %v1035 = vadd.f32 0.0, %v1034
        %v1036 = vpop.f32.mrb[0].mxu0
        %1037 = vdwg.mxu0
        %v1038 = vsel %vm961, %v1035, -inf
        %1039 = vmax.xlane.f32.xlu0 %v1038
        %v1040 = vpop.xlane.xlu0 %1039
        %v1041 = vsub.f32 %v1035, %v1040
        %v1042 = vmul.f32 %v1041, 1.442695
        %v1043 = vpow.pop %v1042
        %v1044 = vsel %vm961, %v1043, 0.0
        %1045 = vadd.xlane.f32.xlu0 %v1044
        %v1046 = vpop.xlane.xlu0 %1045
        %v1048 = vsel %vm961, %v1043, 0
        %1050 = vmatprep.subr.mxu0 0.0
        %1051 = vmatpush1.msra.mxu0 %v960
        %1052 = vmatprep.subr.mxu0 0.0
        %1053 = vmatpush1.msra.mxu0 0.0
        %1054 = vmatprep.subr.mxu0 0.0
        %1055 = vmatpush1.msra.mxu0 0.0
        %1056 = vmatprep.subr.mxu0 0.0
        %1057 = vmatpush1.msra.mxu0 0.0
        %1058 = vmatprep.subr.mxu0 0.0
        %1059 = vmatpush1.msra.mxu0 0.0
        %1060 = vmatprep.subr.mxu0 0.0
        %1061 = vmatpush1.msra.mxu0 0.0
        %1062 = vmatprep.subr.mxu0 0.0
        %1063 = vmatpush1.msra.mxu0 0.0
        %1064 = vmatprep.subr.mxu0 0.0
        %1065 = vmatpush1.msra.mxu0 0.0
        %1066 = vmatprep.subr.mxu0 0.0
        %1067 = vmatpush1.msra.mxu0 0.0
        %1068 = vmatprep.subr.mxu0 0.0
        %1069 = vmatpush1.msra.mxu0 0.0
        %1070 = vmatprep.subr.mxu0 0.0
        %1071 = vmatpush1.msra.mxu0 0.0
        %1072 = vmatprep.subr.mxu0 0.0
        %1073 = vmatpush1.msra.mxu0 0.0
        %1074 = vmatprep.subr.mxu0 0.0
        %1075 = vmatpush1.msra.mxu0 0.0
        %1076 = vmatprep.subr.mxu0 0.0
        %1077 = vmatpush1.msra.mxu0 0.0
        %1078 = vmatprep.subr.mxu0 0.0
        %1079 = vmatpush1.msra.mxu0 0.0
        %1080 = vmatprep.subr.mxu0 0.0
        %1081 = vmatpush1.msra.mxu0 0.0
        %1082 = vmatprep.subr.mxu0 0.0
        %1083 = vmatpush1.msra.mxu0 0.0
        %1084 = vmatprep.subr.mxu0 0.0
        %1085 = vmatpush1.msra.mxu0 0.0
        %1086 = vmatprep.subr.mxu0 0.0
        %1087 = vmatpush1.msra.mxu0 0.0
        %1088 = vmatprep.subr.mxu0 0.0
        %1089 = vmatpush1.msra.mxu0 0.0
        %1090 = vmatprep.subr.mxu0 0.0
        %1091 = vmatpush1.msra.mxu0 0.0
        %1092 = vmatprep.subr.mxu0 0.0
        %1093 = vmatpush1.msra.mxu0 0.0
        %1094 = vmatprep.subr.mxu0 0.0
        %1095 = vmatpush1.msra.mxu0 0.0
        %1096 = vmatprep.subr.mxu0 0.0
        %1097 = vmatpush1.msra.mxu0 0.0
        %1098 = vmatprep.subr.mxu0 0.0
        %1099 = vmatpush1.msra.mxu0 0.0
        %1100 = vmatprep.subr.mxu0 0.0
        %1101 = vmatpush1.msra.mxu0 0.0
        %1102 = vmatprep.subr.mxu0 0.0
        %1103 = vmatpush1.msra.mxu0 0.0
        %1104 = vmatprep.subr.mxu0 0.0
        %1105 = vmatpush1.msra.mxu0 0.0
        %1106 = vmatprep.subr.mxu0 0.0
        %1107 = vmatpush1.msra.mxu0 0.0
        %1108 = vmatprep.subr.mxu0 0.0
        %1109 = vmatpush1.msra.mxu0 0.0
        %1110 = vmatprep.subr.mxu0 0.0
        %1111 = vmatpush1.msra.mxu0 0.0
        %1112 = vmatprep.subr.mxu0 0.0
        %1113 = vmatpush1.msra.mxu0 0.0
        %1114 = vmatprep.mubr.f32.mxu0 0.0
        %1115 = vmatmul.mubr.f32.gmra.mrb[0].mxu0 %v1048
        %v1116 = vpop.f32.mrb[0].mxu0
        %v1117 = vadd.f32 0.0, %v1116
        %v1118 = vpop.f32.mrb[0].mxu0
        %1119 = vdwg.mxu0
        %v1120 = vrcp.pop %v1046
        %v1121 = vmul.f32 %v1117, %v1120
        %1122 = vrot.lane.b32.xlu0 %v958, 120
        %v1123 = vpop.permute.xlu0 %1122
        %1124 = vrot.lane.b32.xlu0 %v959, 120
        %v1125 = vpop.permute.xlu0 %1124
        %v1126 = vsel %vm961, %v1123, 0
        %v1128 = vsel %vm961, %v1125, 0
        %1130 = vmatprep.subr.mxu0 0.0
        %1131 = vmatpush1.xpose.msra.mxu0 %v1128
        %1132 = vmatprep.subr.mxu0 0.0
        %1133 = vmatpush1.xpose.msra.mxu0 0.0
        %1134 = vmatprep.subr.mxu0 0.0
        %1135 = vmatpush1.xpose.msra.mxu0 0.0
        %1136 = vmatprep.subr.mxu0 0.0
        %1137 = vmatpush1.xpose.msra.mxu0 0.0
        %1138 = vmatprep.subr.mxu0 0.0
        %1139 = vmatpush1.xpose.msra.mxu0 0.0
        %1140 = vmatprep.subr.mxu0 0.0
        %1141 = vmatpush1.xpose.msra.mxu0 0.0
        %1142 = vmatprep.subr.mxu0 0.0
        %1143 = vmatpush1.xpose.msra.mxu0 0.0
        %1144 = vmatprep.subr.mxu0 0.0
        %1145 = vmatpush1.xpose.msra.mxu0 0.0
        %1146 = vmatprep.subr.mxu0 0.0
        %1147 = vmatpush1.xpose.msra.mxu0 0.0
        %1148 = vmatprep.subr.mxu0 0.0
        %1149 = vmatpush1.xpose.msra.mxu0 0.0
        %1150 = vmatprep.subr.mxu0 0.0
        %1151 = vmatpush1.xpose.msra.mxu0 0.0
        %1152 = vmatprep.subr.mxu0 0.0
        %1153 = vmatpush1.xpose.msra.mxu0 0.0
        %1154 = vmatprep.subr.mxu0 0.0
        %1155 = vmatpush1.xpose.msra.mxu0 0.0
        %1156 = vmatprep.subr.mxu0 0.0
        %1157 = vmatpush1.xpose.msra.mxu0 0.0
        %1158 = vmatprep.subr.mxu0 0.0
        %1159 = vmatpush1.xpose.msra.mxu0 0.0
        %1160 = vmatprep.subr.mxu0 0.0
        %1161 = vmatpush1.xpose.msra.mxu0 0.0
        %1162 = vmatprep.subr.mxu0 0.0
        %1163 = vmatpush1.xpose.msra.mxu0 0.0
        %1164 = vmatprep.subr.mxu0 0.0
        %1165 = vmatpush1.xpose.msra.mxu0 0.0
        %1166 = vmatprep.subr.mxu0 0.0
        %1167 = vmatpush1.xpose.msra.mxu0 0.0
        %1168 = vmatprep.subr.mxu0 0.0
        %1169 = vmatpush1.xpose.msra.mxu0 0.0
        %1170 = vmatprep.subr.mxu0 0.0
        %1171 = vmatpush1.xpose.msra.mxu0 0.0
        %1172 = vmatprep.subr.mxu0 0.0
        %1173 = vmatpush1.xpose.msra.mxu0 0.0
        %1174 = vmatprep.subr.mxu0 0.0
        %1175 = vmatpush1.xpose.msra.mxu0 0.0
        %1176 = vmatprep.subr.mxu0 0.0
        %1177 = vmatpush1.xpose.msra.mxu0 0.0
        %1178 = vmatprep.subr.mxu0 0.0
        %1179 = vmatpush1.xpose.msra.mxu0 0.0
        %1180 = vmatprep.subr.mxu0 0.0
        %1181 = vmatpush1.xpose.msra.mxu0 0.0
        %1182 = vmatprep.subr.mxu0 0.0
        %1183 = vmatpush1.xpose.msra.mxu0 0.0
        %1184 = vmatprep.subr.mxu0 0.0
        %1185 = vmatpush1.xpose.msra.mxu0 0.0
        %1186 = vmatprep.subr.mxu0 0.0
        %1187 = vmatpush1.xpose.msra.mxu0 0.0
        %1188 = vmatprep.subr.mxu0 0.0
        %1189 = vmatpush1.xpose.msra.mxu0 0.0
        %1190 = vmatprep.subr.mxu0 0.0
        %1191 = vmatpush1.xpose.msra.mxu0 0.0
        %1192 = vmatprep.subr.mxu0 0.0
        %1193 = vmatpush1.xpose.msra.mxu0 0.0
        %1194 = vmatprep.mubr.f32.mxu0 0.0
        %1195 = vmatmul.mubr.f32.gmra.mrb[0].mxu0 %v1126
        %v1196 = vpop.f32.mrb[0].mxu0
        %v1197 = vadd.f32 0.0, %v1196
        %v1198 = vpop.f32.mrb[0].mxu0
        %1199 = vdwg.mxu0
        %v1200 = vsel %vm961, %v1197, -inf
        %1201 = vmax.xlane.f32.xlu0 %v1200
        %v1202 = vpop.xlane.xlu0 %1201
        %v1203 = vsub.f32 %v1197, %v1202
        %v1204 = vmul.f32 %v1203, 1.442695
        %v1205 = vpow.pop %v1204
        %v1206 = vsel %vm961, %v1205, 0.0
        %1207 = vadd.xlane.f32.xlu0 %v1206
        %v1208 = vpop.xlane.xlu0 %1207
        %1210 = vrot.lane.b32.xlu0 %v960, 120
        %v1211 = vpop.permute.xlu0 %1210
        %v1214 = vsel %vm961, %v1205, 0
        %1216 = vmatprep.subr.mxu0 0.0
        %1217 = vmatpush1.msra.mxu0 %v1211
        %1218 = vmatprep.subr.mxu0 0.0
        %1219 = vmatpush1.msra.mxu0 0.0
        %1220 = vmatprep.subr.mxu0 0.0
        %1221 = vmatpush1.msra.mxu0 0.0
        %1222 = vmatprep.subr.mxu0 0.0
        %1223 = vmatpush1.msra.mxu0 0.0
        %1224 = vmatprep.subr.mxu0 0.0
        %1225 = vmatpush1.msra.mxu0 0.0
        %1226 = vmatprep.subr.mxu0 0.0
        %1227 = vmatpush1.msra.mxu0 0.0
        %1228 = vmatprep.subr.mxu0 0.0
        %1229 = vmatpush1.msra.mxu0 0.0
        %1230 = vmatprep.subr.mxu0 0.0
        %1231 = vmatpush1.msra.mxu0 0.0
        %1232 = vmatprep.subr.mxu0 0.0
        %1233 = vmatpush1.msra.mxu0 0.0
        %1234 = vmatprep.subr.mxu0 0.0
        %1235 = vmatpush1.msra.mxu0 0.0
        %1236 = vmatprep.subr.mxu0 0.0
        %1237 = vmatpush1.msra.mxu0 0.0
        %1238 = vmatprep.subr.mxu0 0.0
        %1239 = vmatpush1.msra.mxu0 0.0
        %1240 = vmatprep.subr.mxu0 0.0
        %1241 = vmatpush1.msra.mxu0 0.0
        %1242 = vmatprep.subr.mxu0 0.0
        %1243 = vmatpush1.msra.mxu0 0.0
        %1244 = vmatprep.subr.mxu0 0.0
        %1245 = vmatpush1.msra.mxu0 0.0
        %1246 = vmatprep.subr.mxu0 0.0
        %1247 = vmatpush1.msra.mxu0 0.0
        %1248 = vmatprep.subr.mxu0 0.0
        %1249 = vmatpush1.msra.mxu0 0.0
        %1250 = vmatprep.subr.mxu0 0.0
        %1251 = vmatpush1.msra.mxu0 0.0
        %1252 = vmatprep.subr.mxu0 0.0
        %1253 = vmatpush1.msra.mxu0 0.0
        %1254 = vmatprep.subr.mxu0 0.0
        %1255 = vmatpush1.msra.mxu0 0.0
        %1256 = vmatprep.subr.mxu0 0.0
        %1257 = vmatpush1.msra.mxu0 0.0
        %1258 = vmatprep.subr.mxu0 0.0
        %1259 = vmatpush1.msra.mxu0 0.0
        %1260 = vmatprep.subr.mxu0 0.0
        %1261 = vmatpush1.msra.mxu0 0.0
        %1262 = vmatprep.subr.mxu0 0.0
        %1263 = vmatpush1.msra.mxu0 0.0
        %1264 = vmatprep.subr.mxu0 0.0
        %1265 = vmatpush1.msra.mxu0 0.0
        %1266 = vmatprep.subr.mxu0 0.0
        %1267 = vmatpush1.msra.mxu0 0.0
        %1268 = vmatprep.subr.mxu0 0.0
        %1269 = vmatpush1.msra.mxu0 0.0
        %1270 = vmatprep.subr.mxu0 0.0
        %1271 = vmatpush1.msra.mxu0 0.0
        %1272 = vmatprep.subr.mxu0 0.0
        %1273 = vmatpush1.msra.mxu0 0.0
        %1274 = vmatprep.subr.mxu0 0.0
        %1275 = vmatpush1.msra.mxu0 0.0
        %1276 = vmatprep.subr.mxu0 0.0
        %1277 = vmatpush1.msra.mxu0 0.0
        %1278 = vmatprep.subr.mxu0 0.0
        %1279 = vmatpush1.msra.mxu0 0.0
        %1280 = vmatprep.mubr.f32.mxu0 0.0
        %1281 = vmatmul.mubr.f32.gmra.mrb[0].mxu0 %v1214
        %v1282 = vpop.f32.mrb[0].mxu0
        %v1283 = vadd.f32 0.0, %v1282
        %v1284 = vpop.f32.mrb[0].mxu0
        %1285 = vdwg.mxu0
        %v1286 = vrcp.pop %v1208
        %v1287 = vmul.f32 %v1283, %v1286
        %1288 = vrot.lane.b32.xlu0 %v958, 112
        %v1289 = vpop.permute.xlu0 %1288
        %1290 = vrot.lane.b32.xlu0 %v959, 112
        %v1291 = vpop.permute.xlu0 %1290
        %v1292 = vsel %vm961, %v1289, 0
        %v1294 = vsel %vm961, %v1291, 0
        %1296 = vmatprep.subr.mxu0 0.0
        %1297 = vmatpush1.xpose.msra.mxu0 %v1294
        %1298 = vmatprep.subr.mxu0 0.0
        %1299 = vmatpush1.xpose.msra.mxu0 0.0
        %1300 = vmatprep.subr.mxu0 0.0
        %1301 = vmatpush1.xpose.msra.mxu0 0.0
        %1302 = vmatprep.subr.mxu0 0.0
        %1303 = vmatpush1.xpose.msra.mxu0 0.0
        %1304 = vmatprep.subr.mxu0 0.0
        %1305 = vmatpush1.xpose.msra.mxu0 0.0
        %1306 = vmatprep.subr.mxu0 0.0
        %1307 = vmatpush1.xpose.msra.mxu0 0.0
        %1308 = vmatprep.subr.mxu0 0.0
        %1309 = vmatpush1.xpose.msra.mxu0 0.0
        %1310 = vmatprep.subr.mxu0 0.0
        %1311 = vmatpush1.xpose.msra.mxu0 0.0
        %1312 = vmatprep.subr.mxu0 0.0
        %1313 = vmatpush1.xpose.msra.mxu0 0.0
        %1314 = vmatprep.subr.mxu0 0.0
        %1315 = vmatpush1.xpose.msra.mxu0 0.0
        %1316 = vmatprep.subr.mxu0 0.0
        %1317 = vmatpush1.xpose.msra.mxu0 0.0
        %1318 = vmatprep.subr.mxu0 0.0
        %1319 = vmatpush1.xpose.msra.mxu0 0.0
        %1320 = vmatprep.subr.mxu0 0.0
        %1321 = vmatpush1.xpose.msra.mxu0 0.0
        %1322 = vmatprep.subr.mxu0 0.0
        %1323 = vmatpush1.xpose.msra.mxu0 0.0
        %1324 = vmatprep.subr.mxu0 0.0
        %1325 = vmatpush1.xpose.msra.mxu0 0.0
        %1326 = vmatprep.subr.mxu0 0.0
        %1327 = vmatpush1.xpose.msra.mxu0 0.0
        %1328 = vmatprep.subr.mxu0 0.0
        %1329 = vmatpush1.xpose.msra.mxu0 0.0
        %1330 = vmatprep.subr.mxu0 0.0
        %1331 = vmatpush1.xpose.msra.mxu0 0.0
        %1332 = vmatprep.subr.mxu0 0.0
        %1333 = vmatpush1.xpose.msra.mxu0 0.0
        %1334 = vmatprep.subr.mxu0 0.0
        %1335 = vmatpush1.xpose.msra.mxu0 0.0
        %1336 = vmatprep.subr.mxu0 0.0
        %1337 = vmatpush1.xpose.msra.mxu0 0.0
        %1338 = vmatprep.subr.mxu0 0.0
        %1339 = vmatpush1.xpose.msra.mxu0 0.0
        %1340 = vmatprep.subr.mxu0 0.0
        %1341 = vmatpush1.xpose.msra.mxu0 0.0
        %1342 = vmatprep.subr.mxu0 0.0
        %1343 = vmatpush1.xpose.msra.mxu0 0.0
        %1344 = vmatprep.subr.mxu0 0.0
        %1345 = vmatpush1.xpose.msra.mxu0 0.0
        %1346 = vmatprep.subr.mxu0 0.0
        %1347 = vmatpush1.xpose.msra.mxu0 0.0
        %1348 = vmatprep.subr.mxu0 0.0
        %1349 = vmatpush1.xpose.msra.mxu0 0.0
        %1350 = vmatprep.subr.mxu0 0.0
        %1351 = vmatpush1.xpose.msra.mxu0 0.0
        %1352 = vmatprep.subr.mxu0 0.0
        %1353 = vmatpush1.xpose.msra.mxu0 0.0
        %1354 = vmatprep.subr.mxu0 0.0
        %1355 = vmatpush1.xpose.msra.mxu0 0.0
        %1356 = vmatprep.subr.mxu0 0.0
        %1357 = vmatpush1.xpose.msra.mxu0 0.0
        %1358 = vmatprep.subr.mxu0 0.0
        %1359 = vmatpush1.xpose.msra.mxu0 0.0
        %1360 = vmatprep.mubr.f32.mxu0 0.0
        %1361 = vmatmul.mubr.f32.gmra.mrb[0].mxu0 %v1292
        %v1362 = vpop.f32.mrb[0].mxu0
        %v1363 = vadd.f32 0.0, %v1362
        %v1364 = vpop.f32.mrb[0].mxu0
        %1365 = vdwg.mxu0
        %v1366 = vsel %vm961, %v1363, -inf
        %1367 = vmax.xlane.f32.xlu0 %v1366
        %v1368 = vpop.xlane.xlu0 %1367
        %v1369 = vsub.f32 %v1363, %v1368
        %v1370 = vmul.f32 %v1369, 1.442695
        %v1371 = vpow.pop %v1370
        %v1372 = vsel %vm961, %v1371, 0.0
        %1373 = vadd.xlane.f32.xlu0 %v1372
        %v1374 = vpop.xlane.xlu0 %1373
        %1375 = vrot.lane.b32.xlu0 %v960, 112
        %v1376 = vpop.permute.xlu0 %1375
        %v1379 = vsel %vm961, %v1371, 0
        %1381 = vmatprep.subr.mxu0 0.0
        %1382 = vmatpush1.msra.mxu0 %v1376
        %1383 = vmatprep.subr.mxu0 0.0
        %1384 = vmatpush1.msra.mxu0 0.0
        %1385 = vmatprep.subr.mxu0 0.0
        %1386 = vmatpush1.msra.mxu0 0.0
        %1387 = vmatprep.subr.mxu0 0.0
        %1388 = vmatpush1.msra.mxu0 0.0
        %1389 = vmatprep.subr.mxu0 0.0
        %1390 = vmatpush1.msra.mxu0 0.0
        %1391 = vmatprep.subr.mxu0 0.0
        %1392 = vmatpush1.msra.mxu0 0.0
        %1393 = vmatprep.subr.mxu0 0.0
        %1394 = vmatpush1.msra.mxu0 0.0
        %1395 = vmatprep.subr.mxu0 0.0
        %1396 = vmatpush1.msra.mxu0 0.0
        %1397 = vmatprep.subr.mxu0 0.0
        %1398 = vmatpush1.msra.mxu0 0.0
        %1399 = vmatprep.subr.mxu0 0.0
        %1400 = vmatpush1.msra.mxu0 0.0
        %1401 = vmatprep.subr.mxu0 0.0
        %1402 = vmatpush1.msra.mxu0 0.0
        %1403 = vmatprep.subr.mxu0 0.0
        %1404 = vmatpush1.msra.mxu0 0.0
        %1405 = vmatprep.subr.mxu0 0.0
        %1406 = vmatpush1.msra.mxu0 0.0
        %1407 = vmatprep.subr.mxu0 0.0
        %1408 = vmatpush1.msra.mxu0 0.0
        %1409 = vmatprep.subr.mxu0 0.0
        %1410 = vmatpush1.msra.mxu0 0.0
        %1411 = vmatprep.subr.mxu0 0.0
        %1412 = vmatpush1.msra.mxu0 0.0
        %1413 = vmatprep.subr.mxu0 0.0
        %1414 = vmatpush1.msra.mxu0 0.0
        %1415 = vmatprep.subr.mxu0 0.0
        %1416 = vmatpush1.msra.mxu0 0.0
        %1417 = vmatprep.subr.mxu0 0.0
        %1418 = vmatpush1.msra.mxu0 0.0
        %1419 = vmatprep.subr.mxu0 0.0
        %1420 = vmatpush1.msra.mxu0 0.0
        %1421 = vmatprep.subr.mxu0 0.0
        %1422 = vmatpush1.msra.mxu0 0.0
        %1423 = vmatprep.subr.mxu0 0.0
        %1424 = vmatpush1.msra.mxu0 0.0
        %1425 = vmatprep.subr.mxu0 0.0
        %1426 = vmatpush1.msra.mxu0 0.0
        %1427 = vmatprep.subr.mxu0 0.0
        %1428 = vmatpush1.msra.mxu0 0.0
        %1429 = vmatprep.subr.mxu0 0.0
        %1430 = vmatpush1.msra.mxu0 0.0
        %1431 = vmatprep.subr.mxu0 0.0
        %1432 = vmatpush1.msra.mxu0 0.0
        %1433 = vmatprep.subr.mxu0 0.0
        %1434 = vmatpush1.msra.mxu0 0.0
        %1435 = vmatprep.subr.mxu0 0.0
        %1436 = vmatpush1.msra.mxu0 0.0
        %1437 = vmatprep.subr.mxu0 0.0
        %1438 = vmatpush1.msra.mxu0 0.0
        %1439 = vmatprep.subr.mxu0 0.0
        %1440 = vmatpush1.msra.mxu0 0.0
        %1441 = vmatprep.subr.mxu0 0.0
        %1442 = vmatpush1.msra.mxu0 0.0
        %1443 = vmatprep.subr.mxu0 0.0
        %1444 = vmatpush1.msra.mxu0 0.0
        %1445 = vmatprep.mubr.f32.mxu0 0.0
        %1446 = vmatmul.mubr.f32.gmra.mrb[0].mxu0 %v1379
        %v1447 = vpop.f32.mrb[0].mxu0
        %v1448 = vadd.f32 0.0, %v1447
        %v1449 = vpop.f32.mrb[0].mxu0
        %1450 = vdwg.mxu0
        %v1451 = vrcp.pop %v1374
        %v1452 = vmul.f32 %v1448, %v1451
        %1453 = vrot.lane.b32.xlu0 %v958, 104
        %v1454 = vpop.permute.xlu0 %1453
        %1455 = vrot.lane.b32.xlu0 %v959, 104
        %v1456 = vpop.permute.xlu0 %1455
        %v1457 = vsel %vm961, %v1454, 0
        %v1459 = vsel %vm961, %v1456, 0
        %1461 = vmatprep.subr.mxu0 0.0
        %1462 = vmatpush1.xpose.msra.mxu0 %v1459
        %1463 = vmatprep.subr.mxu0 0.0
        %1464 = vmatpush1.xpose.msra.mxu0 0.0
        %1465 = vmatprep.subr.mxu0 0.0
        %1466 = vmatpush1.xpose.msra.mxu0 0.0
        %1467 = vmatprep.subr.mxu0 0.0
        %1468 = vmatpush1.xpose.msra.mxu0 0.0
        %1469 = vmatprep.subr.mxu0 0.0
        %1470 = vmatpush1.xpose.msra.mxu0 0.0
        %1471 = vmatprep.subr.mxu0 0.0
        %1472 = vmatpush1.xpose.msra.mxu0 0.0
        %1473 = vmatprep.subr.mxu0 0.0
        %1474 = vmatpush1.xpose.msra.mxu0 0.0
        %1475 = vmatprep.subr.mxu0 0.0
        %1476 = vmatpush1.xpose.msra.mxu0 0.0
        %1477 = vmatprep.subr.mxu0 0.0
        %1478 = vmatpush1.xpose.msra.mxu0 0.0
        %1479 = vmatprep.subr.mxu0 0.0
        %1480 = vmatpush1.xpose.msra.mxu0 0.0
        %1481 = vmatprep.subr.mxu0 0.0
        %1482 = vmatpush1.xpose.msra.mxu0 0.0
        %1483 = vmatprep.subr.mxu0 0.0
        %1484 = vmatpush1.xpose.msra.mxu0 0.0
        %1485 = vmatprep.subr.mxu0 0.0
        %1486 = vmatpush1.xpose.msra.mxu0 0.0
        %1487 = vmatprep.subr.mxu0 0.0
        %1488 = vmatpush1.xpose.msra.mxu0 0.0
        %1489 = vmatprep.subr.mxu0 0.0
        %1490 = vmatpush1.xpose.msra.mxu0 0.0
        %1491 = vmatprep.subr.mxu0 0.0
        %1492 = vmatpush1.xpose.msra.mxu0 0.0
        %1493 = vmatprep.subr.mxu0 0.0
        %1494 = vmatpush1.xpose.msra.mxu0 0.0
        %1495 = vmatprep.subr.mxu0 0.0
        %1496 = vmatpush1.xpose.msra.mxu0 0.0
        %1497 = vmatprep.subr.mxu0 0.0
        %1498 = vmatpush1.xpose.msra.mxu0 0.0
        %1499 = vmatprep.subr.mxu0 0.0
        %1500 = vmatpush1.xpose.msra.mxu0 0.0
        %1501 = vmatprep.subr.mxu0 0.0
        %1502 = vmatpush1.xpose.msra.mxu0 0.0
        %1503 = vmatprep.subr.mxu0 0.0
        %1504 = vmatpush1.xpose.msra.mxu0 0.0
        %1505 = vmatprep.subr.mxu0 0.0
        %1506 = vmatpush1.xpose.msra.mxu0 0.0
        %1507 = vmatprep.subr.mxu0 0.0
        %1508 = vmatpush1.xpose.msra.mxu0 0.0
        %1509 = vmatprep.subr.mxu0 0.0
        %1510 = vmatpush1.xpose.msra.mxu0 0.0
        %1511 = vmatprep.subr.mxu0 0.0
        %1512 = vmatpush1.xpose.msra.mxu0 0.0
        %1513 = vmatprep.subr.mxu0 0.0
        %1514 = vmatpush1.xpose.msra.mxu0 0.0
        %1515 = vmatprep.subr.mxu0 0.0
        %1516 = vmatpush1.xpose.msra.mxu0 0.0
        %1517 = vmatprep.subr.mxu0 0.0
        %1518 = vmatpush1.xpose.msra.mxu0 0.0
        %1519 = vmatprep.subr.mxu0 0.0
        %1520 = vmatpush1.xpose.msra.mxu0 0.0
        %1521 = vmatprep.subr.mxu0 0.0
        %1522 = vmatpush1.xpose.msra.mxu0 0.0
        %1523 = vmatprep.subr.mxu0 0.0
        %1524 = vmatpush1.xpose.msra.mxu0 0.0
        %1525 = vmatprep.mubr.f32.mxu0 0.0
        %1526 = vmatmul.mubr.f32.gmra.mrb[0].mxu0 %v1457
        %v1527 = vpop.f32.mrb[0].mxu0
        %v1528 = vadd.f32 0.0, %v1527
        %v1529 = vpop.f32.mrb[0].mxu0
        %1530 = vdwg.mxu0
        %v1531 = vsel %vm961, %v1528, -inf
        %1532 = vmax.xlane.f32.xlu0 %v1531
        %v1533 = vpop.xlane.xlu0 %1532
        %v1534 = vsub.f32 %v1528, %v1533
        %v1535 = vmul.f32 %v1534, 1.442695
        %v1536 = vpow.pop %v1535
        %v1537 = vsel %vm961, %v1536, 0.0
        %1538 = vadd.xlane.f32.xlu0 %v1537
        %v1539 = vpop.xlane.xlu0 %1538
        %1540 = vrot.lane.b32.xlu0 %v960, 104
        %v1541 = vpop.permute.xlu0 %1540
        %v1544 = vsel %vm961, %v1536, 0
        %1546 = vmatprep.subr.mxu0 0.0
        %1547 = vmatpush1.msra.mxu0 %v1541
        %1548 = vmatprep.subr.mxu0 0.0
        %1549 = vmatpush1.msra.mxu0 0.0
        %1550 = vmatprep.subr.mxu0 0.0
        %1551 = vmatpush1.msra.mxu0 0.0
        %1552 = vmatprep.subr.mxu0 0.0
        %1553 = vmatpush1.msra.mxu0 0.0
        %1554 = vmatprep.subr.mxu0 0.0
        %1555 = vmatpush1.msra.mxu0 0.0
        %1556 = vmatprep.subr.mxu0 0.0
        %1557 = vmatpush1.msra.mxu0 0.0
        %1558 = vmatprep.subr.mxu0 0.0
        %1559 = vmatpush1.msra.mxu0 0.0
        %1560 = vmatprep.subr.mxu0 0.0
        %1561 = vmatpush1.msra.mxu0 0.0
        %1562 = vmatprep.subr.mxu0 0.0
        %1563 = vmatpush1.msra.mxu0 0.0
        %1564 = vmatprep.subr.mxu0 0.0
        %1565 = vmatpush1.msra.mxu0 0.0
        %1566 = vmatprep.subr.mxu0 0.0
        %1567 = vmatpush1.msra.mxu0 0.0
        %1568 = vmatprep.subr.mxu0 0.0
        %1569 = vmatpush1.msra.mxu0 0.0
        %1570 = vmatprep.subr.mxu0 0.0
        %1571 = vmatpush1.msra.mxu0 0.0
        %1572 = vmatprep.subr.mxu0 0.0
        %1573 = vmatpush1.msra.mxu0 0.0
        %1574 = vmatprep.subr.mxu0 0.0
        %1575 = vmatpush1.msra.mxu0 0.0
        %1576 = vmatprep.subr.mxu0 0.0
        %1577 = vmatpush1.msra.mxu0 0.0
        %1578 = vmatprep.subr.mxu0 0.0
        %1579 = vmatpush1.msra.mxu0 0.0
        %1580 = vmatprep.subr.mxu0 0.0
        %1581 = vmatpush1.msra.mxu0 0.0
        %1582 = vmatprep.subr.mxu0 0.0
        %1583 = vmatpush1.msra.mxu0 0.0
        %1584 = vmatprep.subr.mxu0 0.0
        %1585 = vmatpush1.msra.mxu0 0.0
        %1586 = vmatprep.subr.mxu0 0.0
        %1587 = vmatpush1.msra.mxu0 0.0
        %1588 = vmatprep.subr.mxu0 0.0
        %1589 = vmatpush1.msra.mxu0 0.0
        %1590 = vmatprep.subr.mxu0 0.0
        %1591 = vmatpush1.msra.mxu0 0.0
        %1592 = vmatprep.subr.mxu0 0.0
        %1593 = vmatpush1.msra.mxu0 0.0
        %1594 = vmatprep.subr.mxu0 0.0
        %1595 = vmatpush1.msra.mxu0 0.0
        %1596 = vmatprep.subr.mxu0 0.0
        %1597 = vmatpush1.msra.mxu0 0.0
        %1598 = vmatprep.subr.mxu0 0.0
        %1599 = vmatpush1.msra.mxu0 0.0
        %1600 = vmatprep.subr.mxu0 0.0
        %1601 = vmatpush1.msra.mxu0 0.0
        %1602 = vmatprep.subr.mxu0 0.0
        %1603 = vmatpush1.msra.mxu0 0.0
        %1604 = vmatprep.subr.mxu0 0.0
        %1605 = vmatpush1.msra.mxu0 0.0
        %1606 = vmatprep.subr.mxu0 0.0
        %1607 = vmatpush1.msra.mxu0 0.0
        %1608 = vmatprep.subr.mxu0 0.0
        %1609 = vmatpush1.msra.mxu0 0.0
        %1610 = vmatprep.mubr.f32.mxu0 0.0
        %1611 = vmatmul.mubr.f32.gmra.mrb[0].mxu0 %v1544
        %v1612 = vpop.f32.mrb[0].mxu0
        %v1613 = vadd.f32 0.0, %v1612
        %v1614 = vpop.f32.mrb[0].mxu0
        %1615 = vdwg.mxu0
        %v1616 = vrcp.pop %v1539
        %v1617 = vmul.f32 %v1613, %v1616
        %1619 = vrot.lane.b32.xlu0 %v1287, 8
        %v1620 = vpop.permute.xlu0 %1619
        %1623 = vrot.lane.b32.xlu0 %v1452, 16
        %v1624 = vpop.permute.xlu0 %1623
        %1627 = vrot.lane.b32.xlu0 %v1617, 24
        %v1628 = vpop.permute.xlu0 %1627
        %v1630 = vsel %vm961, %v1121, %v1620
        %vm1631 = vcmask 130048
        %v1632 = vsel %vm1631, %v1630, %v1624
        %vm1633 = vcmask 195584
        %v1634 = vsel %vm1633, %v1632, %v1628
        %v1635 = vld [vmem:[#allocation15] sm:$0xff]
        %v1636 = vld [vmem:[#allocation15 + $0x8] sm:$0xff]
        %v1637 = vld [vmem:[#allocation15 + $0x10] sm:$0xff]
        %v1638 = vld [vmem:[#allocation15 + $0x18] sm:$0xff]
        %v1639 = vld [vmem:[#allocation16] sm:$0x1]
        %v1641 = vlaneseq
        %v1642 = vshrl.u32 %v1641, 7
        %v1643 = vsub.s32 0, %v1642
        %v1644 = vrot.slane %v1639, %v1643
        %v1647 = vsel %vm884, %v1634, 0
        %1649 = vmatprep.subr.mxu0 0.0
        %1650 = vmatpush1.msra.mxu0 %v1635
        %1651 = vmatprep.subr.mxu0 0.0
        %1652 = vmatpush1.msra.mxu0 %v1636
        %1653 = vmatprep.subr.mxu0 0.0
        %1654 = vmatpush1.msra.mxu0 %v1637
        %1655 = vmatprep.subr.mxu0 0.0
        %1656 = vmatpush1.msra.mxu0 %v1638
        %1657 = vmatprep.subr.mxu0 0.0
        %1658 = vmatpush1.msra.mxu0 0.0
        %1659 = vmatprep.subr.mxu0 0.0
        %1660 = vmatpush1.msra.mxu0 0.0
        %1661 = vmatprep.subr.mxu0 0.0
        %1662 = vmatpush1.msra.mxu0 0.0
        %1663 = vmatprep.subr.mxu0 0.0
        %1664 = vmatpush1.msra.mxu0 0.0
        %1665 = vmatprep.subr.mxu0 0.0
        %1666 = vmatpush1.msra.mxu0 0.0
        %1667 = vmatprep.subr.mxu0 0.0
        %1668 = vmatpush1.msra.mxu0 0.0
        %1669 = vmatprep.subr.mxu0 0.0
        %1670 = vmatpush1.msra.mxu0 0.0
        %1671 = vmatprep.subr.mxu0 0.0
        %1672 = vmatpush1.msra.mxu0 0.0
        %1673 = vmatprep.subr.mxu0 0.0
        %1674 = vmatpush1.msra.mxu0 0.0
        %1675 = vmatprep.subr.mxu0 0.0
        %1676 = vmatpush1.msra.mxu0 0.0
        %1677 = vmatprep.subr.mxu0 0.0
        %1678 = vmatpush1.msra.mxu0 0.0
        %1679 = vmatprep.subr.mxu0 0.0
        %1680 = vmatpush1.msra.mxu0 0.0
        %1681 = vmatprep.subr.mxu0 0.0
        %1682 = vmatpush1.msra.mxu0 0.0
        %1683 = vmatprep.subr.mxu0 0.0
        %1684 = vmatpush1.msra.mxu0 0.0
        %1685 = vmatprep.subr.mxu0 0.0
        %1686 = vmatpush1.msra.mxu0 0.0
        %1687 = vmatprep.subr.mxu0 0.0
        %1688 = vmatpush1.msra.mxu0 0.0
        %1689 = vmatprep.subr.mxu0 0.0
        %1690 = vmatpush1.msra.mxu0 0.0
        %1691 = vmatprep.subr.mxu0 0.0
        %1692 = vmatpush1.msra.mxu0 0.0
        %1693 = vmatprep.subr.mxu0 0.0
        %1694 = vmatpush1.msra.mxu0 0.0
        %1695 = vmatprep.subr.mxu0 0.0
        %1696 = vmatpush1.msra.mxu0 0.0
        %1697 = vmatprep.subr.mxu0 0.0
        %1698 = vmatpush1.msra.mxu0 0.0
        %1699 = vmatprep.subr.mxu0 0.0
        %1700 = vmatpush1.msra.mxu0 0.0
        %1701 = vmatprep.subr.mxu0 0.0
        %1702 = vmatpush1.msra.mxu0 0.0
        %1703 = vmatprep.subr.mxu0 0.0
        %1704 = vmatpush1.msra.mxu0 0.0
        %1705 = vmatprep.subr.mxu0 0.0
        %1706 = vmatpush1.msra.mxu0 0.0
        %1707 = vmatprep.subr.mxu0 0.0
        %1708 = vmatpush1.msra.mxu0 0.0
        %1709 = vmatprep.subr.mxu0 0.0
        %1710 = vmatpush1.msra.mxu0 0.0
        %1711 = vmatprep.subr.mxu0 0.0
        %1712 = vmatpush1.msra.mxu0 0.0
        %1713 = vmatprep.mubr.f32.mxu0 0.0
        %1714 = vmatmul.mubr.f32.gmra.mrb[0].mxu0 %v1647
        %v1715 = vpop.f32.mrb[0].mxu0
        %v1716 = vadd.f32 %v1644, %v1715
        %v1717 = vpop.f32.mrb[0].mxu0
        %1718 = vdwg.mxu0
        %v1719 = vadd.f32 %v872, %v1716
        %v1720 = vld [vmem:[#allocation18] sm:$0x1]
        %v1721 = vld [vmem:[#allocation19] sm:$0x1]
        %v1722 = vsel %vm884, %v1719, 0.0
        %1723 = vadd.xlane.f32.xlu0 %v1722
        %v1724 = vpop.xlane.xlu0 %1723
        %v1725 = vrcp.pop 32.0
        %v1726 = vmul.f32 %v1724, %v1725
        %v1727 = vsub.f32 %v1719, %v1726
        %v1728 = vmul.f32 %v1727, %v1727
        %v1729 = vsel %vm884, %v1728, 0.0
        %1730 = vadd.xlane.f32.xlu0 %v1729
        %v1731 = vpop.xlane.xlu0 %1730
        %v1732 = vmul.f32 %v1731, %v1725
        %v1733 = vadd.f32 %v1732, 1e-06
        %v1734 = vrsqrt.pop %v1733
        %v1735 = vmul.f32 %v1727, %v1734
        %v1737 = vlaneseq
        %v1738 = vshrl.u32 %v1737, 7
        %v1739 = vsub.s32 0, %v1738
        %v1740 = vrot.slane %v1720, %v1739
        %v1742 = vmul.f32 %v1735, %v1740
        %v1744 = vlaneseq
        %v1745 = vshrl.u32 %v1744, 7
        %v1746 = vsub.s32 0, %v1745
        %v1747 = vrot.slane %v1721, %v1746
        %v1749 = vadd.f32 %v1742, %v1747
        %v1750 = vld [vmem:[#allocation21] sm:$0xff]
        %v1751 = vld [vmem:[#allocation21 + $0x8] sm:$0xff]
        %v1752 = vld [vmem:[#allocation21 + $0x10] sm:$0xff]
        %v1753 = vld [vmem:[#allocation21 + $0x18] sm:$0xff]
        %v1754 = vld [vmem:[#allocation22] sm:$0x1]
        %v1756 = vlaneseq
        %v1757 = vshrl.u32 %v1756, 7
        %v1758 = vsub.s32 0, %v1757
        %v1759 = vrot.slane %v1754, %v1758
        %v1762 = vsel %vm884, %v1749, 0
        %1764 = vmatprep.subr.mxu0 0.0
        %1765 = vmatpush1.msra.mxu0 %v1750
        %1766 = vmatprep.subr.mxu0 0.0
        %1767 = vmatpush1.msra.mxu0 %v1751
        %1768 = vmatprep.subr.mxu0 0.0
        %1769 = vmatpush1.msra.mxu0 %v1752
        %1770 = vmatprep.subr.mxu0 0.0
        %1771 = vmatpush1.msra.mxu0 %v1753
        %1772 = vmatprep.subr.mxu0 0.0
        %1773 = vmatpush1.msra.mxu0 0.0
        %1774 = vmatprep.subr.mxu0 0.0
        %1775 = vmatpush1.msra.mxu0 0.0
        %1776 = vmatprep.subr.mxu0 0.0
        %1777 = vmatpush1.msra.mxu0 0.0
        %1778 = vmatprep.subr.mxu0 0.0
        %1779 = vmatpush1.msra.mxu0 0.0
        %1780 = vmatprep.subr.mxu0 0.0
        %1781 = vmatpush1.msra.mxu0 0.0
        %1782 = vmatprep.subr.mxu0 0.0
        %1783 = vmatpush1.msra.mxu0 0.0
        %1784 = vmatprep.subr.mxu0 0.0
        %1785 = vmatpush1.msra.mxu0 0.0
        %1786 = vmatprep.subr.mxu0 0.0
        %1787 = vmatpush1.msra.mxu0 0.0
        %1788 = vmatprep.subr.mxu0 0.0
        %1789 = vmatpush1.msra.mxu0 0.0
        %1790 = vmatprep.subr.mxu0 0.0
        %1791 = vmatpush1.msra.mxu0 0.0
        %1792 = vmatprep.subr.mxu0 0.0
        %1793 = vmatpush1.msra.mxu0 0.0
        %1794 = vmatprep.subr.mxu0 0.0
        %1795 = vmatpush1.msra.mxu0 0.0
        %1796 = vmatprep.subr.mxu0 0.0
        %1797 = vmatpush1.msra.mxu0 0.0
        %1798 = vmatprep.subr.mxu0 0.0
        %1799 = vmatpush1.msra.mxu0 0.0
        %1800 = vmatprep.subr.mxu0 0.0
        %1801 = vmatpush1.msra.mxu0 0.0
        %1802 = vmatprep.subr.mxu0 0.0
        %1803 = vmatpush1.msra.mxu0 0.0
        %1804 = vmatprep.subr.mxu0 0.0
        %1805 = vmatpush1.msra.mxu0 0.0
        %1806 = vmatprep.subr.mxu0 0.0
        %1807 = vmatpush1.msra.mxu0 0.0
        %1808 = vmatprep.subr.mxu0 0.0
        %1809 = vmatpush1.msra.mxu0 0.0
        %1810 = vmatprep.subr.mxu0 0.0
        %1811 = vmatpush1.msra.mxu0 0.0
        %1812 = vmatprep.subr.mxu0 0.0
        %1813 = vmatpush1.msra.mxu0 0.0
        %1814 = vmatprep.subr.mxu0 0.0
        %1815 = vmatpush1.msra.mxu0 0.0
        %1816 = vmatprep.subr.mxu0 0.0
        %1817 = vmatpush1.msra.mxu0 0.0
        %1818 = vmatprep.subr.mxu0 0.0
        %1819 = vmatpush1.msra.mxu0 0.0
        %1820 = vmatprep.subr.mxu0 0.0
        %1821 = vmatpush1.msra.mxu0 0.0
        %1822 = vmatprep.subr.mxu0 0.0
        %1823 = vmatpush1.msra.mxu0 0.0
        %1824 = vmatprep.subr.mxu0 0.0
        %1825 = vmatpush1.msra.mxu0 0.0
        %1826 = vmatprep.subr.mxu0 0.0
        %1827 = vmatpush1.msra.mxu0 0.0
        %1828 = vmatprep.mubr.f32.mxu0 0.0
        %1829 = vmatmul.mubr.f32.gmra.mrb[0].mxu0 %v1762
        %v1830 = vpop.f32.mrb[0].mxu0
        %v1831 = vadd.f32 %v1759, %v1830
        %v1832 = vpop.f32.mrb[0].mxu0
        %1833 = vdwg.mxu0
        %v1834 = vmax.f32 %v1831, 0.0
        %v1835 = vld [vmem:[#allocation24] sm:$0xff]
        %v1836 = vld [vmem:[#allocation24 + $0x8] sm:$0xff]
        %v1837 = vld [vmem:[#allocation24 + $0x10] sm:$0xff]
        %v1838 = vld [vmem:[#allocation24 + $0x18] sm:$0xff]
        %v1839 = vld [vmem:[#allocation24 + $0x20] sm:$0xff]
        %v1840 = vld [vmem:[#allocation24 + $0x28] sm:$0xff]
        %v1841 = vld [vmem:[#allocation24 + $0x30] sm:$0xff]
        %v1842 = vld [vmem:[#allocation24 + $0x38] sm:$0xff]
        %v1843 = vld [vmem:[#allocation25] sm:$0x1]
        %v1845 = vlaneseq
        %v1846 = vshrl.u32 %v1845, 7
        %v1847 = vsub.s32 0, %v1846
        %v1848 = vrot.slane %v1843, %v1847
        %vm1850 = vcmask 523264
        %v1852 = vsel %vm1850, %v1834, 0
        %1854 = vmatprep.subr.mxu0 0.0
        %1855 = vmatpush1.msra.mxu0 %v1835
        %1856 = vmatprep.subr.mxu0 0.0
        %1857 = vmatpush1.msra.mxu0 %v1836
        %1858 = vmatprep.subr.mxu0 0.0
        %1859 = vmatpush1.msra.mxu0 %v1837
        %1860 = vmatprep.subr.mxu0 0.0
        %1861 = vmatpush1.msra.mxu0 %v1838
        %1862 = vmatprep.subr.mxu0 0.0
        %1863 = vmatpush1.msra.mxu0 %v1839
        %1864 = vmatprep.subr.mxu0 0.0
        %1865 = vmatpush1.msra.mxu0 %v1840
        %1866 = vmatprep.subr.mxu0 0.0
        %1867 = vmatpush1.msra.mxu0 %v1841
        %1868 = vmatprep.subr.mxu0 0.0
        %1869 = vmatpush1.msra.mxu0 %v1842
        %1870 = vmatprep.subr.mxu0 0.0
        %1871 = vmatpush1.msra.mxu0 0.0
        %1872 = vmatprep.subr.mxu0 0.0
        %1873 = vmatpush1.msra.mxu0 0.0
        %1874 = vmatprep.subr.mxu0 0.0
        %1875 = vmatpush1.msra.mxu0 0.0
        %1876 = vmatprep.subr.mxu0 0.0
        %1877 = vmatpush1.msra.mxu0 0.0
        %1878 = vmatprep.subr.mxu0 0.0
        %1879 = vmatpush1.msra.mxu0 0.0
        %1880 = vmatprep.subr.mxu0 0.0
        %1881 = vmatpush1.msra.mxu0 0.0
        %1882 = vmatprep.subr.mxu0 0.0
        %1883 = vmatpush1.msra.mxu0 0.0
        %1884 = vmatprep.subr.mxu0 0.0
        %1885 = vmatpush1.msra.mxu0 0.0
        %1886 = vmatprep.subr.mxu0 0.0
        %1887 = vmatpush1.msra.mxu0 0.0
        %1888 = vmatprep.subr.mxu0 0.0
        %1889 = vmatpush1.msra.mxu0 0.0
        %1890 = vmatprep.subr.mxu0 0.0
        %1891 = vmatpush1.msra.mxu0 0.0
        %1892 = vmatprep.subr.mxu0 0.0
        %1893 = vmatpush1.msra.mxu0 0.0
        %1894 = vmatprep.subr.mxu0 0.0
        %1895 = vmatpush1.msra.mxu0 0.0
        %1896 = vmatprep.subr.mxu0 0.0
        %1897 = vmatpush1.msra.mxu0 0.0
        %1898 = vmatprep.subr.mxu0 0.0
        %1899 = vmatpush1.msra.mxu0 0.0
        %1900 = vmatprep.subr.mxu0 0.0
        %1901 = vmatpush1.msra.mxu0 0.0
        %1902 = vmatprep.subr.mxu0 0.0
        %1903 = vmatpush1.msra.mxu0 0.0
        %1904 = vmatprep.subr.mxu0 0.0
        %1905 = vmatpush1.msra.mxu0 0.0
        %1906 = vmatprep.subr.mxu0 0.0
        %1907 = vmatpush1.msra.mxu0 0.0
        %1908 = vmatprep.subr.mxu0 0.0
        %1909 = vmatpush1.msra.mxu0 0.0
        %1910 = vmatprep.subr.mxu0 0.0
        %1911 = vmatpush1.msra.mxu0 0.0
        %1912 = vmatprep.subr.mxu0 0.0
        %1913 = vmatpush1.msra.mxu0 0.0
        %1914 = vmatprep.subr.mxu0 0.0
        %1915 = vmatpush1.msra.mxu0 0.0
        %1916 = vmatprep.subr.mxu0 0.0
        %1917 = vmatpush1.msra.mxu0 0.0
        %1918 = vmatprep.mubr.f32.mxu0 0.0
        %1919 = vmatmul.mubr.f32.gmra.mrb[0].mxu0 %v1852
        %v1920 = vpop.f32.mrb[0].mxu0
        %v1921 = vadd.f32 %v1848, %v1920
        %v1922 = vpop.f32.mrb[0].mxu0
        %1923 = vdwg.mxu0
        %v1924 = vadd.f32 %v1921, %v1749
        %v1925 = vld [vmem:[#allocation27] sm:$0x1]
        %v1926 = vld [vmem:[#allocation28] sm:$0x1]
        %v1927 = vsel %vm884, %v1924, 0.0
        %1928 = vadd.xlane.f32.xlu0 %v1927
        %v1929 = vpop.xlane.xlu0 %1928
        %v1930 = vmul.f32 %v1929, %v1725
        %v1931 = vsub.f32 %v1924, %v1930
        %v1932 = vmul.f32 %v1931, %v1931
        %v1933 = vsel %vm884, %v1932, 0.0
        %1934 = vadd.xlane.f32.xlu0 %v1933
        %v1935 = vpop.xlane.xlu0 %1934
        %v1936 = vmul.f32 %v1935, %v1725
        %v1937 = vadd.f32 %v1936, 1e-06
        %v1938 = vrsqrt.pop %v1937
        %v1939 = vmul.f32 %v1931, %v1938
        %v1941 = vlaneseq
        %v1942 = vshrl.u32 %v1941, 7
        %v1943 = vsub.s32 0, %v1942
        %v1944 = vrot.slane %v1925, %v1943
        %v1946 = vmul.f32 %v1939, %v1944
        %v1948 = vlaneseq
        %v1949 = vshrl.u32 %v1948, 7
        %v1950 = vsub.s32 0, %v1949
        %v1951 = vrot.slane %v1926, %v1950
        %v1953 = vadd.f32 %v1946, %v1951
        %1954 = vst.msk [vmem:[%s775] sm:$0xff] %vm884, %v1953
        %s1955 = sand.u32 %s413, 1
        %s1956 = scalar_lea.sflag [#allocation6], %s1955
        %s1957 = sand.u32 %s413, 1
        %s1958 = smul.addr %s1957, 8
        %s1959 = scalar_lea.vmem [#allocation30], %s1958
        // Predicated region
        $region153: #{tpu_custom_call.1} parent=83 // pred_check
          %p1960 = pneg %p423
        $region154: #{tpu_custom_call.1} parent=83 // pred_check_branch
          %1962 = sbr.rel (%p1960) target = $region156
        $region155: #{tpu_custom_call.1} parent=83 // pred_region
          %s1964 = ssub.s32 128, 128
          %1965 = vsyncadd %s1956, %s1964
          %s1966 = sadd.s32 %s48, %s47
          %s1967 = smul.addr %s1966, 128
          %s1968 = scalar_lea.hbm %s16, %s1967
          %s1970 = sshll.u32 %s1959, 4
          %s1971 = int_to_ptr.vmem [resolvable:$true] %s1970
          %1973 = dma.vmem_to_hbm [thread:$0]  %s1971, 128, %s1968, %s1956
        $region156: #{tpu_custom_call.1} parent=83 // pred_fallthru
          _
      $region84: #{tpu_custom_call.1} parent=5 // pred_fallthru
        _
      %p1974 = scmp.le.s32.totalorder 2, %s38
      // Predicated region
      $region157: #{tpu_custom_call.1} parent=5 // pred_check
        %p1975 = pneg %p1974
      $region158: #{tpu_custom_call.1} parent=5 // pred_check_branch
        %1977 = sbr.rel (%p1975) target = $region160
      $region159: #{tpu_custom_call.1} parent=5 // pred_region
        %s1978 = ssub.s32 %s38, 2
        // Predicated region
        $region161: #{tpu_custom_call.1} parent=159 // pred_check
          %p1979 = pneg %p429
        $region162: #{tpu_custom_call.1} parent=159 // pred_check_branch
          %1981 = sbr.rel (%p1979) target = $region164
        $region163: #{tpu_custom_call.1} parent=159 // pred_region
          %s1982 = sand.u32 %s414, 1
          %s1983 = scalar_lea.sflag [#allocation6], %s1982
          %s1984 = sand.u32 %s414, 1
          %s1985 = smul.addr %s1984, 8
          %s1986 = scalar_lea.vmem [#allocation30], %s1985
          %1987 = dma.done %s1983, 128
        $region164: #{tpu_custom_call.1} parent=159 // pred_fallthru
          _
      $region160: #{tpu_custom_call.1} parent=5 // pred_fallthru
        _
    $region6: #{tpu_custom_call.1} parent=1 // loop_footer
      %s42 = sadd.s32 1, %s38
    $region7: #{tpu_custom_call.1} parent=1 // loop_footer_branch
      %37 = sbr.rel target = $region3
    $region8: #{tpu_custom_call.1} parent=1 // loop_exit
      _
    %1988 = vsyncpa [#allocation5], 1
    %s1989 = scalar_lea.sflag [#allocation5], 1
    %1990 = vsyncpa %s1989, 1
    %1991 = vsyncpa [#allocation8], 1
    %s1992 = scalar_lea.sflag [#allocation8], 1
    %1993 = vsyncpa %s1992, 1
    %1994 = vsyncpa [#allocation11], 1
    %1995 = vsyncpa [#allocation14], 1
    %1996 = vsyncpa [#allocation17], 1
    %1997 = vsyncpa [#allocation20], 1
    %1998 = vsyncpa [#allocation23], 1
    %1999 = vsyncpa [#allocation26], 1
    %2000 = vsyncpa [#allocation29], 1
    %2001 = vsyncpa [#allocation6], 1
    %s2002 = scalar_lea.sflag [#allocation6], 1
    %2003 = vsyncpa %s2002, 1

</llo_original>
